<compile_context>
chip_gen: v5e
topology: v5e:2x2
jax: 0.10.0
libtpu: 0.0.40
codegen_flags: <defaults>
</compile_context>

<pallas_src>
import math

import jax
import jax.numpy as jnp
from jax import lax
from jax.experimental import pallas as pl
from jax.experimental.pallas import tpu as pltpu

IN_DIM = 1
HIDDEN = 6
SEQ = 120 // HIDDEN          # dense1 in_features = 120 = SEQ * HIDDEN  ->  SEQ = 20
N_CLASSES = 1
BN_EPS = 1e-5

G4 = 4 * HIDDEN              # 24 gate lanes
LANES = 128

# ---- packed parameter slab layout (rows of a (N_ROWS, 128) f32 array) ----------
# block 0 (rows 0..7): row vectors
ROW_WIH0 = 0                 # W_ih0.T            (1, 4H)   g-cols pre-scaled x2
ROW_B0 = 1                   # b_ih0 + b_hh0      (1, 4H)   g-cols pre-scaled x2
ROW_B1 = 2                   # b_ih1 + b_hh1      (1, 4H)   g-cols pre-scaled x2
ROW_BD = 3                   # dense1 bias        (1, H)
ROW_GAMMA = 4                # BN gamma           (1, H)
ROW_BETA = 5                 # BN beta            (1, H)
ROW_BC = 6                   # classifier bias    (1, 1)
ROW_WC = 7                   # classifier weight  (1, H)
# 8-row-aligned matrices
ROW_WHH0 = 8                 # W_hh0.T            (H, 4H)   g-cols pre-scaled x2
ROW_WIH1 = 16                # W_ih1.T            (H, 4H)   g-cols pre-scaled x2
ROW_WHH1 = 24                # W_hh1.T            (H, 4H)   g-cols pre-scaled x2
ROW_WD = 32                  # dense1: 20 blocks of 8 rows; block t rows [0:H] = wd[t]
N_ROWS = ROW_WD + 8 * SEQ    # 192 rows -> 96 KiB slab


def _rnn_kernel(x_ref, slab_ref, out_ref, xw0_ref):
    """Whole forward pass in one kernel invocation (everything fits in VMEM).

    x_ref    : (T, B, 1)     time-major input
    slab_ref : (192, 128)    packed parameters (layout above)
    out_ref  : (B, n_classes)
    xw0_ref  : (T, B, 4H)    VMEM scratch for the hoisted layer-0 input projection
    """
    T = x_ref.shape[0]
    B = x_ref.shape[1]
    H = HIDDEN
    G = G4

    # Static slices out of the packed slab (one-time, off the recurrent chain).
    wih0 = slab_ref[ROW_WIH0:ROW_WIH0 + 1, :G]          # (1, 4H)
    b0 = slab_ref[ROW_B0:ROW_B0 + 1, :G]                # (1, 4H)
    b1 = slab_ref[ROW_B1:ROW_B1 + 1, :G]                # (1, 4H)
    whh0 = slab_ref[ROW_WHH0:ROW_WHH0 + H, :G]          # (H, 4H)
    wih1 = slab_ref[ROW_WIH1:ROW_WIH1 + H, :G]          # (H, 4H)
    whh1 = slab_ref[ROW_WHH1:ROW_WHH1 + H, :G]          # (H, 4H)

    # Hoisted layer-0 input projection (+ combined bias) for all timesteps at once,
    # staged in VMEM so the 20-deep unroll does not keep 20 live vregs of it.
    # (T, B, 1) * (1, 4H) + (1, 4H) -> (T, B, 4H). No recurrent dependency.
    xw0_ref[...] = x_ref[...] * wih0 + b0

    def lstm_act(gates, c):
        # g-gate pre-activations arrive pre-scaled by 2 (done in the wrapper), so a
        # single full-vreg sigmoid covers all four gates:
        #   tanh(x) == 2*sigmoid(2x) - 1  (exact).  PyTorch gate order i, f, g, o.
        s = jax.nn.sigmoid(gates)
        i = s[:, 0 * H:1 * H]
        f = s[:, 1 * H:2 * H]
        g = 2.0 * s[:, 2 * H:3 * H] - 1.0
        o = s[:, 3 * H:4 * H]
        c_new = f * c + i * g
        h_new = o * jnp.tanh(c_new)
        return h_new, c_new

    z = jnp.zeros((B, H), jnp.float32)
    h0, c0, h1, c1, acc = z, z, z, z, z

    # Fully unrolled recurrence (T = 20 is static); static indices everywhere.
    for t in range(T):
        # Layer-1 recurrent term + bias: depends only on h1(t-1), so it overlaps
        # with layer-0's step-t work (off the h0(t) -> g1(t) critical chain).
        rec1 = jnp.dot(h1, whh1, preferred_element_type=jnp.float32) + b1
        # Layer 0: hoisted input projection + recurrent matmul.
        g0 = xw0_ref[t] + jnp.dot(h0, whh0, preferred_element_type=jnp.float32)
        h0, c0 = lstm_act(g0, c0)
        # Layer 1: input matmul on the fresh h0 plus the precomputed recurrent term.
        g1 = jnp.dot(h0, wih1, preferred_element_type=jnp.float32) + rec1
        h1, c1 = lstm_act(g1, c1)
        # Fused dense1 partial: flatten(out)[:, t*H:(t+1)*H] @ W_d1.T[t*H:(t+1)*H, :].
        # Off the recurrent critical path; MXU slot is otherwise idle.
        wd_t = slab_ref[ROW_WD + 8 * t:ROW_WD + 8 * t + H, :H]   # (H, H), static
        acc = acc + jnp.dot(h1, wd_t, preferred_element_type=jnp.float32)

    bd = slab_ref[ROW_BD:ROW_BD + 1, :H]
    gamma = slab_ref[ROW_GAMMA:ROW_GAMMA + 1, :H]
    beta = slab_ref[ROW_BETA:ROW_BETA + 1, :H]
    wc = slab_ref[ROW_WC:ROW_WC + 1, :H]                 # (1, H)
    bc = slab_ref[ROW_BC:ROW_BC + 1, :N_CLASSES]         # (1, 1)

    d = acc + bd                                         # dense1 output, (B, H)
    # BatchNorm1d: fresh module in train mode -> batch statistics, biased variance.
    mean = jnp.mean(d, axis=0, keepdims=True)
    var = jnp.mean((d - mean) ** 2, axis=0, keepdims=True)
    d = (d - mean) * lax.rsqrt(var + BN_EPS) * gamma + beta
    d = jnp.maximum(d, 0.0)                              # ReLU
    # classifier (n_classes = 1): row-vector dot via multiply + lane reduce.
    out_ref[...] = jnp.sum(d * wc, axis=1, keepdims=True) + bc


def _g_scale(w):
    """Scale the g-gate columns (2H:3H of the last, 4H-sized axis) by 2."""
    scale = jnp.ones((G4,), jnp.float32).at[2 * HIDDEN:3 * HIDDEN].set(2.0)
    return w * scale


def _pack_params(p):
    """Pack all parameters into one (N_ROWS, 128) f32 slab (single DMA)."""
    slab = jnp.zeros((N_ROWS, LANES), jnp.float32)
    slab = slab.at[ROW_WIH0, :G4].set(_g_scale(p['w_ih0'].T.reshape(G4)))
    slab = slab.at[ROW_B0, :G4].set(_g_scale(p['b_ih0'] + p['b_hh0']))
    slab = slab.at[ROW_B1, :G4].set(_g_scale(p['b_ih1'] + p['b_hh1']))
    slab = slab.at[ROW_BD, :HIDDEN].set(p['b_d1'])
    slab = slab.at[ROW_GAMMA, :HIDDEN].set(p['bn_gamma'])
    slab = slab.at[ROW_BETA, :HIDDEN].set(p['bn_beta'])
    slab = slab.at[ROW_BC, :N_CLASSES].set(p['b_cls'])
    slab = slab.at[ROW_WC, :HIDDEN].set(p['w_cls'].reshape(HIDDEN))
    slab = slab.at[ROW_WHH0:ROW_WHH0 + HIDDEN, :G4].set(_g_scale(p['w_hh0'].T))
    slab = slab.at[ROW_WIH1:ROW_WIH1 + HIDDEN, :G4].set(_g_scale(p['w_ih1'].T))
    slab = slab.at[ROW_WHH1:ROW_WHH1 + HIDDEN, :G4].set(_g_scale(p['w_hh1'].T))
    # dense1: wd[t] = W_d1.T[t*H:(t+1)*H, :], padded to an 8-row / 128-lane block.
    wd = p['w_d1'].T.reshape(SEQ, HIDDEN, HIDDEN)
    wd_pad = jnp.zeros((SEQ, 8, LANES), jnp.float32).at[:, :HIDDEN, :HIDDEN].set(wd)
    slab = slab.at[ROW_WD:ROW_WD + 8 * SEQ, :].set(wd_pad.reshape(SEQ * 8, LANES))
    return slab


def init_params(key):
    """Deterministic init matching the PyTorch module's parameter shapes."""
    k = 1.0 / math.sqrt(HIDDEN)
    keys = jax.random.split(key, 12)

    def u(kk, shape, bound):
        return jax.random.uniform(kk, shape, jnp.float32, -bound, bound)

    p = {
        'w_ih0': u(keys[0], (4 * HIDDEN, IN_DIM), k),
        'w_hh0': u(keys[1], (4 * HIDDEN, HIDDEN), k),
        'b_ih0': u(keys[2], (4 * HIDDEN,), k),
        'b_hh0': u(keys[3], (4 * HIDDEN,), k),
        'w_ih1': u(keys[4], (4 * HIDDEN, HIDDEN), k),
        'w_hh1': u(keys[5], (4 * HIDDEN, HIDDEN), k),
        'b_ih1': u(keys[6], (4 * HIDDEN,), k),
        'b_hh1': u(keys[7], (4 * HIDDEN,), k),
        'w_d1': u(keys[8], (HIDDEN, 120), 1.0 / math.sqrt(120)),
        'b_d1': u(keys[9], (HIDDEN,), 1.0 / math.sqrt(120)),
        'bn_gamma': jnp.ones((HIDDEN,), jnp.float32),
        'bn_beta': jnp.zeros((HIDDEN,), jnp.float32),
        'w_cls': u(keys[10], (N_CLASSES, HIDDEN), k),
        'b_cls': u(keys[11], (N_CLASSES,), k),
    }
    return p


def rnn_forward(x, p):
    """x: (T, B, 1) time-major input (the PyTorch module's input, pre-transpose)."""
    T, B, _ = x.shape
    assert T == SEQ, f"seq_len must be {SEQ} (dense1 expects 120 = seq*hidden)"
    slab = _pack_params(p)
    # Single call, no grid: total VMEM ~120 KiB.  For large B, add a grid over B
    # with dimension_semantics=("parallel",) so v7x's second TensorCore is used.
    return pl.pallas_call(
        _rnn_kernel,
        out_shape=jax.ShapeDtypeStruct((B, N_CLASSES), jnp.float32),
        in_specs=[pl.BlockSpec(memory_space=pltpu.MemorySpace.VMEM),
                  pl.BlockSpec(memory_space=pltpu.MemorySpace.VMEM)],
        out_specs=pl.BlockSpec(memory_space=pltpu.MemorySpace.VMEM),
        scratch_shapes=[pltpu.VMEM((SEQ, B, 4 * HIDDEN), jnp.float32)],
    )(x.astype(jnp.float32), slab)


def rnn_reference(x, p):
    """Pure-JAX reference for correctness checking (uses the unscaled parameters)."""
    T, B, _ = x.shape

    def cell(x_t, h, c, w_ih, w_hh, b_ih, b_hh):
        gates = x_t @ w_ih.T + b_ih + h @ w_hh.T + b_hh
        i, f, g, o = jnp.split(gates, 4, axis=-1)
        c = jax.nn.sigmoid(f) * c + jax.nn.sigmoid(i) * jnp.tanh(g)
        h = jax.nn.sigmoid(o) * jnp.tanh(c)
        return h, c

    h0 = c0 = h1 = c1 = jnp.zeros((B, HIDDEN), jnp.float32)
    outs = []
    for t in range(T):
        h0, c0 = cell(x[t], h0, c0, p['w_ih0'], p['w_hh0'], p['b_ih0'], p['b_hh0'])
        h1, c1 = cell(h0, h1, c1, p['w_ih1'], p['w_hh1'], p['b_ih1'], p['b_hh1'])
        outs.append(h1)
    out = jnp.stack(outs, axis=1)                 # (B, T, H) batch-first LSTM output
    flat = out.reshape(B, T * HIDDEN)             # (B, 120)
    d = flat @ p['w_d1'].T + p['b_d1']
    mean = jnp.mean(d, axis=0, keepdims=True)
    var = jnp.mean((d - mean) ** 2, axis=0, keepdims=True)
    d = (d - mean) / jnp.sqrt(var + BN_EPS) * p['bn_gamma'] + p['bn_beta']
    d = jnp.maximum(d, 0.0)
    return d @ p['w_cls'].T + p['b_cls']


if __name__ == "__main__":
    key = jax.random.PRNGKey(0)
    k_param, k_x = jax.random.split(key)

    B = 8
    params = init_params(k_param)
    x = jax.random.normal(k_x, (SEQ, B, IN_DIM), jnp.float32)   # (20, 8, 1)

    out = rnn_forward(x, params)
    out = jax.block_until_ready(out)

    ref = rnn_reference(x, params)
    assert out.shape == (B, N_CLASSES)
    assert jnp.allclose(out, ref, atol=1e-4, rtol=1e-4), (out, ref)

    print("KERNEL_OK")
</pallas_src>

<mosaic_0001>
module attributes {stable_mosaic.version = 11 : i64} {
  func.func @_rnn_kernel(%arg0: memref<20x8x1xf32, #tpu.memory_space<vmem>>, %arg1: memref<192x128xf32, #tpu.memory_space<vmem>>, %arg2: memref<8x1xf32, #tpu.memory_space<vmem>>, %arg3: memref<20x8x24xf32, #tpu.memory_space<vmem>>) attributes {dimension_semantics = [], scalar_prefetch = 0 : i64, scratch_operands = 1 : i64, tpu.core_type = #tpu.core_type<tc>} {
    %c0 = arith.constant 0 : index
    %c0_0 = arith.constant 0 : index
    %0 = vector.load %arg1[%c0, %c0_0] : memref<192x128xf32, #tpu.memory_space<vmem>>, vector<1x24xf32>
    %c1 = arith.constant 1 : index
    %c0_1 = arith.constant 0 : index
    %1 = vector.load %arg1[%c1, %c0_1] : memref<192x128xf32, #tpu.memory_space<vmem>>, vector<1x24xf32>
    %c2 = arith.constant 2 : index
    %c0_2 = arith.constant 0 : index
    %2 = vector.load %arg1[%c2, %c0_2] : memref<192x128xf32, #tpu.memory_space<vmem>>, vector<1x24xf32>
    %c8 = arith.constant 8 : index
    %c0_3 = arith.constant 0 : index
    %3 = vector.load %arg1[%c8, %c0_3] : memref<192x128xf32, #tpu.memory_space<vmem>>, vector<6x24xf32>
    %c16 = arith.constant 16 : index
    %c0_4 = arith.constant 0 : index
    %4 = vector.load %arg1[%c16, %c0_4] : memref<192x128xf32, #tpu.memory_space<vmem>>, vector<6x24xf32>
    %c24 = arith.constant 24 : index
    %c0_5 = arith.constant 0 : index
    %5 = vector.load %arg1[%c24, %c0_5] : memref<192x128xf32, #tpu.memory_space<vmem>>, vector<6x24xf32>
    %c0_6 = arith.constant 0 : index
    %c0_7 = arith.constant 0 : index
    %c0_8 = arith.constant 0 : index
    %6 = vector.load %arg0[%c0_6, %c0_7, %c0_8] : memref<20x8x1xf32, #tpu.memory_space<vmem>>, vector<20x8x1xf32>
    %7 = vector.shape_cast %0 : vector<1x24xf32> to vector<1x1x24xf32>
    %8 = vector.broadcast %6 : vector<20x8x1xf32> to vector<20x8x24xf32>
    %9 = vector.broadcast %7 : vector<1x1x24xf32> to vector<20x8x24xf32>
    %10 = arith.mulf %8, %9 : vector<20x8x24xf32>
    %11 = vector.shape_cast %1 : vector<1x24xf32> to vector<1x1x24xf32>
    %12 = vector.broadcast %11 : vector<1x1x24xf32> to vector<20x8x24xf32>
    %13 = arith.addf %10, %12 : vector<20x8x24xf32>
    %c0_9 = arith.constant 0 : index
    %c0_10 = arith.constant 0 : index
    %c0_11 = arith.constant 0 : index
    %14 = vector.load %arg3[%c0_9, %c0_10, %c0_11] : memref<20x8x24xf32, #tpu.memory_space<vmem>>, vector<20x8x24xf32>
    tpu.vector_store %arg3[%c0_9, %c0_10, %c0_11], %13 {strides = array<i32>} : memref<20x8x24xf32, #tpu.memory_space<vmem>>, vector<20x8x24xf32>,
    %cst = arith.constant 0.000000e+00 : f32
    %15 = vector.broadcast %cst : f32 to vector<8x6xf32>
    %cst_12 = arith.constant dense<0.000000e+00> : vector<8x24xf32>
    %16 = tpu.matmul %15, %5, %cst_12 {dimension_numbers = #tpu.dot_dimension_numbers<[1], [0], [0], [1], [0, 0, 1, 1], [], []>} : vector<8x6xf32>, vector<6x24xf32>, vector<8x24xf32> -> vector<8x24xf32>
    %17 = vector.broadcast %2 : vector<1x24xf32> to vector<8x24xf32>
    %18 = arith.addf %16, %17 : vector<8x24xf32>
    %c0_13 = arith.constant 0 : index
    %c0_14 = arith.constant 0 : index
    %c0_15 = arith.constant 0 : index
    %19 = vector.load %arg3[%c0_13, %c0_14, %c0_15] : memref<20x8x24xf32, #tpu.memory_space<vmem>>, vector<1x8x24xf32>
    %20 = vector.shape_cast %19 : vector<1x8x24xf32> to vector<8x24xf32>
    %cst_16 = arith.constant dense<0.000000e+00> : vector<8x24xf32>
    %21 = tpu.matmul %15, %3, %cst_16 {dimension_numbers = #tpu.dot_dimension_numbers<[1], [0], [0], [1], [0, 0, 1, 1], [], []>} : vector<8x6xf32>, vector<6x24xf32>, vector<8x24xf32> -> vector<8x24xf32>
    %22 = arith.addf %20, %21 : vector<8x24xf32>
    %23 = arith.negf %22 : vector<8x24xf32>
    %24 = math.exp %23 : vector<8x24xf32>
    %cst_17 = arith.constant 1.000000e+00 : f32
    %25 = vector.broadcast %cst_17 : f32 to vector<8x24xf32>
    %26 = arith.addf %25, %24 : vector<8x24xf32>
    %27 = arith.divf %25, %26 : vector<8x24xf32>
    %28 = vector.extract_strided_slice %27 {offsets = [0, 0], sizes = [8, 6], strides = [1, 1]} : vector<8x24xf32> to vector<8x6xf32>
    %29 = vector.extract_strided_slice %27 {offsets = [0, 6], sizes = [8, 6], strides = [1, 1]} : vector<8x24xf32> to vector<8x6xf32>
    %30 = vector.extract_strided_slice %27 {offsets = [0, 12], sizes = [8, 6], strides = [1, 1]} : vector<8x24xf32> to vector<8x6xf32>
    %cst_18 = arith.constant 2.000000e+00 : f32
    %31 = vector.broadcast %cst_18 : f32 to vector<8x6xf32>
    %32 = arith.mulf %31, %30 : vector<8x6xf32>
    %cst_19 = arith.constant 1.000000e+00 : f32
    %33 = vector.broadcast %cst_19 : f32 to vector<8x6xf32>
    %34 = arith.subf %32, %33 : vector<8x6xf32>
    %35 = vector.extract_strided_slice %27 {offsets = [0, 18], sizes = [8, 6], strides = [1, 1]} : vector<8x24xf32> to vector<8x6xf32>
    %36 = arith.mulf %29, %15 : vector<8x6xf32>
    %37 = arith.mulf %28, %34 : vector<8x6xf32>
    %38 = arith.addf %36, %37 : vector<8x6xf32>
    %39 = math.tanh %38 : vector<8x6xf32>
    %40 = arith.mulf %35, %39 : vector<8x6xf32>
    %cst_20 = arith.constant dense<0.000000e+00> : vector<8x24xf32>
    %41 = tpu.matmul %40, %4, %cst_20 {dimension_numbers = #tpu.dot_dimension_numbers<[1], [0], [0], [1], [0, 0, 1, 1], [], []>} : vector<8x6xf32>, vector<6x24xf32>, vector<8x24xf32> -> vector<8x24xf32>
    %42 = arith.addf %41, %18 : vector<8x24xf32>
    %43 = arith.negf %42 : vector<8x24xf32>
    %44 = math.exp %43 : vector<8x24xf32>
    %cst_21 = arith.constant 1.000000e+00 : f32
    %45 = vector.broadcast %cst_21 : f32 to vector<8x24xf32>
    %46 = arith.addf %45, %44 : vector<8x24xf32>
    %47 = arith.divf %45, %46 : vector<8x24xf32>
    %48 = vector.extract_strided_slice %47 {offsets = [0, 0], sizes = [8, 6], strides = [1, 1]} : vector<8x24xf32> to vector<8x6xf32>
    %49 = vector.extract_strided_slice %47 {offsets = [0, 6], sizes = [8, 6], strides = [1, 1]} : vector<8x24xf32> to vector<8x6xf32>
    %50 = vector.extract_strided_slice %47 {offsets = [0, 12], sizes = [8, 6], strides = [1, 1]} : vector<8x24xf32> to vector<8x6xf32>
    %cst_22 = arith.constant 2.000000e+00 : f32
    %51 = vector.broadcast %cst_22 : f32 to vector<8x6xf32>
    %52 = arith.mulf %51, %50 : vector<8x6xf32>
    %cst_23 = arith.constant 1.000000e+00 : f32
    %53 = vector.broadcast %cst_23 : f32 to vector<8x6xf32>
    %54 = arith.subf %52, %53 : vector<8x6xf32>
    %55 = vector.extract_strided_slice %47 {offsets = [0, 18], sizes = [8, 6], strides = [1, 1]} : vector<8x24xf32> to vector<8x6xf32>
    %56 = arith.mulf %49, %15 : vector<8x6xf32>
    %57 = arith.mulf %48, %54 : vector<8x6xf32>
    %58 = arith.addf %56, %57 : vector<8x6xf32>
    %59 = math.tanh %58 : vector<8x6xf32>
    %60 = arith.mulf %55, %59 : vector<8x6xf32>
    %c32 = arith.constant 32 : index
    %c0_24 = arith.constant 0 : index
    %61 = vector.load %arg1[%c32, %c0_24] : memref<192x128xf32, #tpu.memory_space<vmem>>, vector<6x6xf32>
    %cst_25 = arith.constant dense<0.000000e+00> : vector<8x6xf32>
    %62 = tpu.matmul %60, %61, %cst_25 {dimension_numbers = #tpu.dot_dimension_numbers<[1], [0], [0], [1], [0, 0, 1, 1], [], []>} : vector<8x6xf32>, vector<6x6xf32>, vector<8x6xf32> -> vector<8x6xf32>
    %63 = arith.addf %15, %62 : vector<8x6xf32>
    %cst_26 = arith.constant dense<0.000000e+00> : vector<8x24xf32>
    %64 = tpu.matmul %60, %5, %cst_26 {dimension_numbers = #tpu.dot_dimension_numbers<[1], [0], [0], [1], [0, 0, 1, 1], [], []>} : vector<8x6xf32>, vector<6x24xf32>, vector<8x24xf32> -> vector<8x24xf32>
    %65 = vector.broadcast %2 : vector<1x24xf32> to vector<8x24xf32>
    %66 = arith.addf %64, %65 : vector<8x24xf32>
    %c1_27 = arith.constant 1 : index
    %c0_28 = arith.constant 0 : index
    %c0_29 = arith.constant 0 : index
    %67 = vector.load %arg3[%c1_27, %c0_28, %c0_29] : memref<20x8x24xf32, #tpu.memory_space<vmem>>, vector<1x8x24xf32>
    %68 = vector.shape_cast %67 : vector<1x8x24xf32> to vector<8x24xf32>
    %cst_30 = arith.constant dense<0.000000e+00> : vector<8x24xf32>
    %69 = tpu.matmul %40, %3, %cst_30 {dimension_numbers = #tpu.dot_dimension_numbers<[1], [0], [0], [1], [0, 0, 1, 1], [], []>} : vector<8x6xf32>, vector<6x24xf32>, vector<8x24xf32> -> vector<8x24xf32>
    %70 = arith.addf %68, %69 : vector<8x24xf32>
    %71 = arith.negf %70 : vector<8x24xf32>
    %72 = math.exp %71 : vector<8x24xf32>
    %cst_31 = arith.constant 1.000000e+00 : f32
    %73 = vector.broadcast %cst_31 : f32 to vector<8x24xf32>
    %74 = arith.addf %73, %72 : vector<8x24xf32>
    %75 = arith.divf %73, %74 : vector<8x24xf32>
    %76 = vector.extract_strided_slice %75 {offsets = [0, 0], sizes = [8, 6], strides = [1, 1]} : vector<8x24xf32> to vector<8x6xf32>
    %77 = vector.extract_strided_slice %75 {offsets = [0, 6], sizes = [8, 6], strides = [1, 1]} : vector<8x24xf32> to vector<8x6xf32>
    %78 = vector.extract_strided_slice %75 {offsets = [0, 12], sizes = [8, 6], strides = [1, 1]} : vector<8x24xf32> to vector<8x6xf32>
    %cst_32 = arith.constant 2.000000e+00 : f32
    %79 = vector.broadcast %cst_32 : f32 to vector<8x6xf32>
    %80 = arith.mulf %79, %78 : vector<8x6xf32>
    %cst_33 = arith.constant 1.000000e+00 : f32
    %81 = vector.broadcast %cst_33 : f32 to vector<8x6xf32>
    %82 = arith.subf %80, %81 : vector<8x6xf32>
    %83 = vector.extract_strided_slice %75 {offsets = [0, 18], sizes = [8, 6], strides = [1, 1]} : vector<8x24xf32> to vector<8x6xf32>
    %84 = arith.mulf %77, %38 : vector<8x6xf32>
    %85 = arith.mulf %76, %82 : vector<8x6xf32>
    %86 = arith.addf %84, %85 : vector<8x6xf32>
    %87 = math.tanh %86 : vector<8x6xf32>
    %88 = arith.mulf %83, %87 : vector<8x6xf32>
    %cst_34 = arith.constant dense<0.000000e+00> : vector<8x24xf32>
    %89 = tpu.matmul %88, %4, %cst_34 {dimension_numbers = #tpu.dot_dimension_numbers<[1], [0], [0], [1], [0, 0, 1, 1], [], []>} : vector<8x6xf32>, vector<6x24xf32>, vector<8x24xf32> -> vector<8x24xf32>
    %90 = arith.addf %89, %66 : vector<8x24xf32>
    %91 = arith.negf %90 : vector<8x24xf32>
    %92 = math.exp %91 : vector<8x24xf32>
    %cst_35 = arith.constant 1.000000e+00 : f32
    %93 = vector.broadcast %cst_35 : f32 to vector<8x24xf32>
    %94 = arith.addf %93, %92 : vector<8x24xf32>
    %95 = arith.divf %93, %94 : vector<8x24xf32>
    %96 = vector.extract_strided_slice %95 {offsets = [0, 0], sizes = [8, 6], strides = [1, 1]} : vector<8x24xf32> to vector<8x6xf32>
    %97 = vector.extract_strided_slice %95 {offsets = [0, 6], sizes = [8, 6], strides = [1, 1]} : vector<8x24xf32> to vector<8x6xf32>
    %98 = vector.extract_strided_slice %95 {offsets = [0, 12], sizes = [8, 6], strides = [1, 1]} : vector<8x24xf32> to vector<8x6xf32>
    %cst_36 = arith.constant 2.000000e+00 : f32
    %99 = vector.broadcast %cst_36 : f32 to vector<8x6xf32>
    %100 = arith.mulf %99, %98 : vector<8x6xf32>
    %cst_37 = arith.constant 1.000000e+00 : f32
    %101 = vector.broadcast %cst_37 : f32 to vector<8x6xf32>
    %102 = arith.subf %100, %101 : vector<8x6xf32>
    %103 = vector.extract_strided_slice %95 {offsets = [0, 18], sizes = [8, 6], strides = [1, 1]} : vector<8x24xf32> to vector<8x6xf32>
    %104 = arith.mulf %97, %58 : vector<8x6xf32>
    %105 = arith.mulf %96, %102 : vector<8x6xf32>
    %106 = arith.addf %104, %105 : vector<8x6xf32>
    %107 = math.tanh %106 : vector<8x6xf32>
    %108 = arith.mulf %103, %107 : vector<8x6xf32>
    %c40 = arith.constant 40 : index
    %c0_38 = arith.constant 0 : index
    %109 = vector.load %arg1[%c40, %c0_38] : memref<192x128xf32, #tpu.memory_space<vmem>>, vector<6x6xf32>
    %cst_39 = arith.constant dense<0.000000e+00> : vector<8x6xf32>
    %110 = tpu.matmul %108, %109, %cst_39 {dimension_numbers = #tpu.dot_dimension_numbers<[1], [0], [0], [1], [0, 0, 1, 1], [], []>} : vector<8x6xf32>, vector<6x6xf32>, vector<8x6xf32> -> vector<8x6xf32>
    %111 = arith.addf %63, %110 : vector<8x6xf32>
    %cst_40 = arith.constant dense<0.000000e+00> : vector<8x24xf32>
    %112 = tpu.matmul %108, %5, %cst_40 {dimension_numbers = #tpu.dot_dimension_numbers<[1], [0], [0], [1], [0, 0, 1, 1], [], []>} : vector<8x6xf32>, vector<6x24xf32>, vector<8x24xf32> -> vector<8x24xf32>
    %113 = vector.broadcast %2 : vector<1x24xf32> to vector<8x24xf32>
    %114 = arith.addf %112, %113 : vector<8x24xf32>
    %c2_41 = arith.constant 2 : index
    %c0_42 = arith.constant 0 : index
    %c0_43 = arith.constant 0 : index
    %115 = vector.load %arg3[%c2_41, %c0_42, %c0_43] : memref<20x8x24xf32, #tpu.memory_space<vmem>>, vector<1x8x24xf32>
    %116 = vector.shape_cast %115 : vector<1x8x24xf32> to vector<8x24xf32>
    %cst_44 = arith.constant dense<0.000000e+00> : vector<8x24xf32>
    %117 = tpu.matmul %88, %3, %cst_44 {dimension_numbers = #tpu.dot_dimension_numbers<[1], [0], [0], [1], [0, 0, 1, 1], [], []>} : vector<8x6xf32>, vector<6x24xf32>, vector<8x24xf32> -> vector<8x24xf32>
    %118 = arith.addf %116, %117 : vector<8x24xf32>
    %119 = arith.negf %118 : vector<8x24xf32>
    %120 = math.exp %119 : vector<8x24xf32>
    %cst_45 = arith.constant 1.000000e+00 : f32
    %121 = vector.broadcast %cst_45 : f32 to vector<8x24xf32>
    %122 = arith.addf %121, %120 : vector<8x24xf32>
    %123 = arith.divf %121, %122 : vector<8x24xf32>
    %124 = vector.extract_strided_slice %123 {offsets = [0, 0], sizes = [8, 6], strides = [1, 1]} : vector<8x24xf32> to vector<8x6xf32>
    %125 = vector.extract_strided_slice %123 {offsets = [0, 6], sizes = [8, 6], strides = [1, 1]} : vector<8x24xf32> to vector<8x6xf32>
    %126 = vector.extract_strided_slice %123 {offsets = [0, 12], sizes = [8, 6], strides = [1, 1]} : vector<8x24xf32> to vector<8x6xf32>
    %cst_46 = arith.constant 2.000000e+00 : f32
    %127 = vector.broadcast %cst_46 : f32 to vector<8x6xf32>
    %128 = arith.mulf %127, %126 : vector<8x6xf32>
    %cst_47 = arith.constant 1.000000e+00 : f32
    %129 = vector.broadcast %cst_47 : f32 to vector<8x6xf32>
    %130 = arith.subf %128, %129 : vector<8x6xf32>
    %131 = vector.extract_strided_slice %123 {offsets = [0, 18], sizes = [8, 6], strides = [1, 1]} : vector<8x24xf32> to vector<8x6xf32>
    %132 = arith.mulf %125, %86 : vector<8x6xf32>
    %133 = arith.mulf %124, %130 : vector<8x6xf32>
    %134 = arith.addf %132, %133 : vector<8x6xf32>
    %135 = math.tanh %134 : vector<8x6xf32>
    %136 = arith.mulf %131, %135 : vector<8x6xf32>
    %cst_48 = arith.constant dense<0.000000e+00> : vector<8x24xf32>
    %137 = tpu.matmul %136, %4, %cst_48 {dimension_numbers = #tpu.dot_dimension_numbers<[1], [0], [0], [1], [0, 0, 1, 1], [], []>} : vector<8x6xf32>, vector<6x24xf32>, vector<8x24xf32> -> vector<8x24xf32>
    %138 = arith.addf %137, %114 : vector<8x24xf32>
    %139 = arith.negf %138 : vector<8x24xf32>
    %140 = math.exp %139 : vector<8x24xf32>
    %cst_49 = arith.constant 1.000000e+00 : f32
    %141 = vector.broadcast %cst_49 : f32 to vector<8x24xf32>
    %142 = arith.addf %141, %140 : vector<8x24xf32>
    %143 = arith.divf %141, %142 : vector<8x24xf32>
    %144 = vector.extract_strided_slice %143 {offsets = [0, 0], sizes = [8, 6], strides = [1, 1]} : vector<8x24xf32> to vector<8x6xf32>
    %145 = vector.extract_strided_slice %143 {offsets = [0, 6], sizes = [8, 6], strides = [1, 1]} : vector<8x24xf32> to vector<8x6xf32>
    %146 = vector.extract_strided_slice %143 {offsets = [0, 12], sizes = [8, 6], strides = [1, 1]} : vector<8x24xf32> to vector<8x6xf32>
    %cst_50 = arith.constant 2.000000e+00 : f32
    %147 = vector.broadcast %cst_50 : f32 to vector<8x6xf32>
    %148 = arith.mulf %147, %146 : vector<8x6xf32>
    %cst_51 = arith.constant 1.000000e+00 : f32
    %149 = vector.broadcast %cst_51 : f32 to vector<8x6xf32>
    %150 = arith.subf %148, %149 : vector<8x6xf32>
    %151 = vector.extract_strided_slice %143 {offsets = [0, 18], sizes = [8, 6], strides = [1, 1]} : vector<8x24xf32> to vector<8x6xf32>
    %152 = arith.mulf %145, %106 : vector<8x6xf32>
    %153 = arith.mulf %144, %150 : vector<8x6xf32>
    %154 = arith.addf %152, %153 : vector<8x6xf32>
    %155 = math.tanh %154 : vector<8x6xf32>
    %156 = arith.mulf %151, %155 : vector<8x6xf32>
    %c48 = arith.constant 48 : index
    %c0_52 = arith.constant 0 : index
    %157 = vector.load %arg1[%c48, %c0_52] : memref<192x128xf32, #tpu.memory_space<vmem>>, vector<6x6xf32>
    %cst_53 = arith.constant dense<0.000000e+00> : vector<8x6xf32>
    %158 = tpu.matmul %156, %157, %cst_53 {dimension_numbers = #tpu.dot_dimension_numbers<[1], [0], [0], [1], [0, 0, 1, 1], [], []>} : vector<8x6xf32>, vector<6x6xf32>, vector<8x6xf32> -> vector<8x6xf32>
    %159 = arith.addf %111, %158 : vector<8x6xf32>
    %cst_54 = arith.constant dense<0.000000e+00> : vector<8x24xf32>
    %160 = tpu.matmul %156, %5, %cst_54 {dimension_numbers = #tpu.dot_dimension_numbers<[1], [0], [0], [1], [0, 0, 1, 1], [], []>} : vector<8x6xf32>, vector<6x24xf32>, vector<8x24xf32> -> vector<8x24xf32>
    %161 = vector.broadcast %2 : vector<1x24xf32> to vector<8x24xf32>
    %162 = arith.addf %160, %161 : vector<8x24xf32>
    %c3 = arith.constant 3 : index
    %c0_55 = arith.constant 0 : index
    %c0_56 = arith.constant 0 : index
    %163 = vector.load %arg3[%c3, %c0_55, %c0_56] : memref<20x8x24xf32, #tpu.memory_space<vmem>>, vector<1x8x24xf32>
    %164 = vector.shape_cast %163 : vector<1x8x24xf32> to vector<8x24xf32>
    %cst_57 = arith.constant dense<0.000000e+00> : vector<8x24xf32>
    %165 = tpu.matmul %136, %3, %cst_57 {dimension_numbers = #tpu.dot_dimension_numbers<[1], [0], [0], [1], [0, 0, 1, 1], [], []>} : vector<8x6xf32>, vector<6x24xf32>, vector<8x24xf32> -> vector<8x24xf32>
    %166 = arith.addf %164, %165 : vector<8x24xf32>
    %167 = arith.negf %166 : vector<8x24xf32>
    %168 = math.exp %167 : vector<8x24xf32>
    %cst_58 = arith.constant 1.000000e+00 : f32
    %169 = vector.broadcast %cst_58 : f32 to vector<8x24xf32>
    %170 = arith.addf %169, %168 : vector<8x24xf32>
    %171 = arith.divf %169, %170 : vector<8x24xf32>
    %172 = vector.extract_strided_slice %171 {offsets = [0, 0], sizes = [8, 6], strides = [1, 1]} : vector<8x24xf32> to vector<8x6xf32>
    %173 = vector.extract_strided_slice %171 {offsets = [0, 6], sizes = [8, 6], strides = [1, 1]} : vector<8x24xf32> to vector<8x6xf32>
    %174 = vector.extract_strided_slice %171 {offsets = [0, 12], sizes = [8, 6], strides = [1, 1]} : vector<8x24xf32> to vector<8x6xf32>
    %cst_59 = arith.constant 2.000000e+00 : f32
    %175 = vector.broadcast %cst_59 : f32 to vector<8x6xf32>
    %176 = arith.mulf %175, %174 : vector<8x6xf32>
    %cst_60 = arith.constant 1.000000e+00 : f32
    %177 = vector.broadcast %cst_60 : f32 to vector<8x6xf32>
    %178 = arith.subf %176, %177 : vector<8x6xf32>
    %179 = vector.extract_strided_slice %171 {offsets = [0, 18], sizes = [8, 6], strides = [1, 1]} : vector<8x24xf32> to vector<8x6xf32>
    %180 = arith.mulf %173, %134 : vector<8x6xf32>
    %181 = arith.mulf %172, %178 : vector<8x6xf32>
    %182 = arith.addf %180, %181 : vector<8x6xf32>
    %183 = math.tanh %182 : vector<8x6xf32>
    %184 = arith.mulf %179, %183 : vector<8x6xf32>
    %cst_61 = arith.constant dense<0.000000e+00> : vector<8x24xf32>
    %185 = tpu.matmul %184, %4, %cst_61 {dimension_numbers = #tpu.dot_dimension_numbers<[1], [0], [0], [1], [0, 0, 1, 1], [], []>} : vector<8x6xf32>, vector<6x24xf32>, vector<8x24xf32> -> vector<8x24xf32>
    %186 = arith.addf %185, %162 : vector<8x24xf32>
    %187 = arith.negf %186 : vector<8x24xf32>
    %188 = math.exp %187 : vector<8x24xf32>
    %cst_62 = arith.constant 1.000000e+00 : f32
    %189 = vector.broadcast %cst_62 : f32 to vector<8x24xf32>
    %190 = arith.addf %189, %188 : vector<8x24xf32>
    %191 = arith.divf %189, %190 : vector<8x24xf32>
    %192 = vector.extract_strided_slice %191 {offsets = [0, 0], sizes = [8, 6], strides = [1, 1]} : vector<8x24xf32> to vector<8x6xf32>
    %193 = vector.extract_strided_slice %191 {offsets = [0, 6], sizes = [8, 6], strides = [1, 1]} : vector<8x24xf32> to vector<8x6xf32>
    %194 = vector.extract_strided_slice %191 {offsets = [0, 12], sizes = [8, 6], strides = [1, 1]} : vector<8x24xf32> to vector<8x6xf32>
    %cst_63 = arith.constant 2.000000e+00 : f32
    %195 = vector.broadcast %cst_63 : f32 to vector<8x6xf32>
    %196 = arith.mulf %195, %194 : vector<8x6xf32>
    %cst_64 = arith.constant 1.000000e+00 : f32
    %197 = vector.broadcast %cst_64 : f32 to vector<8x6xf32>
    %198 = arith.subf %196, %197 : vector<8x6xf32>
    %199 = vector.extract_strided_slice %191 {offsets = [0, 18], sizes = [8, 6], strides = [1, 1]} : vector<8x24xf32> to vector<8x6xf32>
    %200 = arith.mulf %193, %154 : vector<8x6xf32>
    %201 = arith.mulf %192, %198 : vector<8x6xf32>
    %202 = arith.addf %200, %201 : vector<8x6xf32>
    %203 = math.tanh %202 : vector<8x6xf32>
    %204 = arith.mulf %199, %203 : vector<8x6xf32>
    %c56 = arith.constant 56 : index
    %c0_65 = arith.constant 0 : index
    %205 = vector.load %arg1[%c56, %c0_65] : memref<192x128xf32, #tpu.memory_space<vmem>>, vector<6x6xf32>
    %cst_66 = arith.constant dense<0.000000e+00> : vector<8x6xf32>
    %206 = tpu.matmul %204, %205, %cst_66 {dimension_numbers = #tpu.dot_dimension_numbers<[1], [0], [0], [1], [0, 0, 1, 1], [], []>} : vector<8x6xf32>, vector<6x6xf32>, vector<8x6xf32> -> vector<8x6xf32>
    %207 = arith.addf %159, %206 : vector<8x6xf32>
    %cst_67 = arith.constant dense<0.000000e+00> : vector<8x24xf32>
    %208 = tpu.matmul %204, %5, %cst_67 {dimension_numbers = #tpu.dot_dimension_numbers<[1], [0], [0], [1], [0, 0, 1, 1], [], []>} : vector<8x6xf32>, vector<6x24xf32>, vector<8x24xf32> -> vector<8x24xf32>
    %209 = vector.broadcast %2 : vector<1x24xf32> to vector<8x24xf32>
    %210 = arith.addf %208, %209 : vector<8x24xf32>
    %c4 = arith.constant 4 : index
    %c0_68 = arith.constant 0 : index
    %c0_69 = arith.constant 0 : index
    %211 = vector.load %arg3[%c4, %c0_68, %c0_69] : memref<20x8x24xf32, #tpu.memory_space<vmem>>, vector<1x8x24xf32>
    %212 = vector.shape_cast %211 : vector<1x8x24xf32> to vector<8x24xf32>
    %cst_70 = arith.constant dense<0.000000e+00> : vector<8x24xf32>
    %213 = tpu.matmul %184, %3, %cst_70 {dimension_numbers = #tpu.dot_dimension_numbers<[1], [0], [0], [1], [0, 0, 1, 1], [], []>} : vector<8x6xf32>, vector<6x24xf32>, vector<8x24xf32> -> vector<8x24xf32>
    %214 = arith.addf %212, %213 : vector<8x24xf32>
    %215 = arith.negf %214 : vector<8x24xf32>
    %216 = math.exp %215 : vector<8x24xf32>
    %cst_71 = arith.constant 1.000000e+00 : f32
    %217 = vector.broadcast %cst_71 : f32 to vector<8x24xf32>
    %218 = arith.addf %217, %216 : vector<8x24xf32>
    %219 = arith.divf %217, %218 : vector<8x24xf32>
    %220 = vector.extract_strided_slice %219 {offsets = [0, 0], sizes = [8, 6], strides = [1, 1]} : vector<8x24xf32> to vector<8x6xf32>
    %221 = vector.extract_strided_slice %219 {offsets = [0, 6], sizes = [8, 6], strides = [1, 1]} : vector<8x24xf32> to vector<8x6xf32>
    %222 = vector.extract_strided_slice %219 {offsets = [0, 12], sizes = [8, 6], strides = [1, 1]} : vector<8x24xf32> to vector<8x6xf32>
    %cst_72 = arith.constant 2.000000e+00 : f32
    %223 = vector.broadcast %cst_72 : f32 to vector<8x6xf32>
    %224 = arith.mulf %223, %222 : vector<8x6xf32>
    %cst_73 = arith.constant 1.000000e+00 : f32
    %225 = vector.broadcast %cst_73 : f32 to vector<8x6xf32>
    %226 = arith.subf %224, %225 : vector<8x6xf32>
    %227 = vector.extract_strided_slice %219 {offsets = [0, 18], sizes = [8, 6], strides = [1, 1]} : vector<8x24xf32> to vector<8x6xf32>
    %228 = arith.mulf %221, %182 : vector<8x6xf32>
    %229 = arith.mulf %220, %226 : vector<8x6xf32>
    %230 = arith.addf %228, %229 : vector<8x6xf32>
    %231 = math.tanh %230 : vector<8x6xf32>
    %232 = arith.mulf %227, %231 : vector<8x6xf32>
    %cst_74 = arith.constant dense<0.000000e+00> : vector<8x24xf32>
    %233 = tpu.matmul %232, %4, %cst_74 {dimension_numbers = #tpu.dot_dimension_numbers<[1], [0], [0], [1], [0, 0, 1, 1], [], []>} : vector<8x6xf32>, vector<6x24xf32>, vector<8x24xf32> -> vector<8x24xf32>
    %234 = arith.addf %233, %210 : vector<8x24xf32>
    %235 = arith.negf %234 : vector<8x24xf32>
    %236 = math.exp %235 : vector<8x24xf32>
    %cst_75 = arith.constant 1.000000e+00 : f32
    %237 = vector.broadcast %cst_75 : f32 to vector<8x24xf32>
    %238 = arith.addf %237, %236 : vector<8x24xf32>
    %239 = arith.divf %237, %238 : vector<8x24xf32>
    %240 = vector.extract_strided_slice %239 {offsets = [0, 0], sizes = [8, 6], strides = [1, 1]} : vector<8x24xf32> to vector<8x6xf32>
    %241 = vector.extract_strided_slice %239 {offsets = [0, 6], sizes = [8, 6], strides = [1, 1]} : vector<8x24xf32> to vector<8x6xf32>
    %242 = vector.extract_strided_slice %239 {offsets = [0, 12], sizes = [8, 6], strides = [1, 1]} : vector<8x24xf32> to vector<8x6xf32>
    %cst_76 = arith.constant 2.000000e+00 : f32
    %243 = vector.broadcast %cst_76 : f32 to vector<8x6xf32>
    %244 = arith.mulf %243, %242 : vector<8x6xf32>
    %cst_77 = arith.constant 1.000000e+00 : f32
    %245 = vector.broadcast %cst_77 : f32 to vector<8x6xf32>
    %246 = arith.subf %244, %245 : vector<8x6xf32>
    %247 = vector.extract_strided_slice %239 {offsets = [0, 18], sizes = [8, 6], strides = [1, 1]} : vector<8x24xf32> to vector<8x6xf32>
    %248 = arith.mulf %241, %202 : vector<8x6xf32>
    %249 = arith.mulf %240, %246 : vector<8x6xf32>
    %250 = arith.addf %248, %249 : vector<8x6xf32>
    %251 = math.tanh %250 : vector<8x6xf32>
    %252 = arith.mulf %247, %251 : vector<8x6xf32>
    %c64 = arith.constant 64 : index
    %c0_78 = arith.constant 0 : index
    %253 = vector.load %arg1[%c64, %c0_78] : memref<192x128xf32, #tpu.memory_space<vmem>>, vector<6x6xf32>
    %cst_79 = arith.constant dense<0.000000e+00> : vector<8x6xf32>
    %254 = tpu.matmul %252, %253, %cst_79 {dimension_numbers = #tpu.dot_dimension_numbers<[1], [0], [0], [1], [0, 0, 1, 1], [], []>} : vector<8x6xf32>, vector<6x6xf32>, vector<8x6xf32> -> vector<8x6xf32>
    %255 = arith.addf %207, %254 : vector<8x6xf32>
    %cst_80 = arith.constant dense<0.000000e+00> : vector<8x24xf32>
    %256 = tpu.matmul %252, %5, %cst_80 {dimension_numbers = #tpu.dot_dimension_numbers<[1], [0], [0], [1], [0, 0, 1, 1], [], []>} : vector<8x6xf32>, vector<6x24xf32>, vector<8x24xf32> -> vector<8x24xf32>
    %257 = vector.broadcast %2 : vector<1x24xf32> to vector<8x24xf32>
    %258 = arith.addf %256, %257 : vector<8x24xf32>
    %c5 = arith.constant 5 : index
    %c0_81 = arith.constant 0 : index
    %c0_82 = arith.constant 0 : index
    %259 = vector.load %arg3[%c5, %c0_81, %c0_82] : memref<20x8x24xf32, #tpu.memory_space<vmem>>, vector<1x8x24xf32>
    %260 = vector.shape_cast %259 : vector<1x8x24xf32> to vector<8x24xf32>
    %cst_83 = arith.constant dense<0.000000e+00> : vector<8x24xf32>
    %261 = tpu.matmul %232, %3, %cst_83 {dimension_numbers = #tpu.dot_dimension_numbers<[1], [0], [0], [1], [0, 0, 1, 1], [], []>} : vector<8x6xf32>, vector<6x24xf32>, vector<8x24xf32> -> vector<8x24xf32>
    %262 = arith.addf %260, %261 : vector<8x24xf32>
    %263 = arith.negf %262 : vector<8x24xf32>
    %264 = math.exp %263 : vector<8x24xf32>
    %cst_84 = arith.constant 1.000000e+00 : f32
    %265 = vector.broadcast %cst_84 : f32 to vector<8x24xf32>
    %266 = arith.addf %265, %264 : vector<8x24xf32>
    %267 = arith.divf %265, %266 : vector<8x24xf32>
    %268 = vector.extract_strided_slice %267 {offsets = [0, 0], sizes = [8, 6], strides = [1, 1]} : vector<8x24xf32> to vector<8x6xf32>
    %269 = vector.extract_strided_slice %267 {offsets = [0, 6], sizes = [8, 6], strides = [1, 1]} : vector<8x24xf32> to vector<8x6xf32>
    %270 = vector.extract_strided_slice %267 {offsets = [0, 12], sizes = [8, 6], strides = [1, 1]} : vector<8x24xf32> to vector<8x6xf32>
    %cst_85 = arith.constant 2.000000e+00 : f32
    %271 = vector.broadcast %cst_85 : f32 to vector<8x6xf32>
    %272 = arith.mulf %271, %270 : vector<8x6xf32>
    %cst_86 = arith.constant 1.000000e+00 : f32
    %273 = vector.broadcast %cst_86 : f32 to vector<8x6xf32>
    %274 = arith.subf %272, %273 : vector<8x6xf32>
    %275 = vector.extract_strided_slice %267 {offsets = [0, 18], sizes = [8, 6], strides = [1, 1]} : vector<8x24xf32> to vector<8x6xf32>
    %276 = arith.mulf %269, %230 : vector<8x6xf32>
    %277 = arith.mulf %268, %274 : vector<8x6xf32>
    %278 = arith.addf %276, %277 : vector<8x6xf32>
    %279 = math.tanh %278 : vector<8x6xf32>
    %280 = arith.mulf %275, %279 : vector<8x6xf32>
    %cst_87 = arith.constant dense<0.000000e+00> : vector<8x24xf32>
    %281 = tpu.matmul %280, %4, %cst_87 {dimension_numbers = #tpu.dot_dimension_numbers<[1], [0], [0], [1], [0, 0, 1, 1], [], []>} : vector<8x6xf32>, vector<6x24xf32>, vector<8x24xf32> -> vector<8x24xf32>
    %282 = arith.addf %281, %258 : vector<8x24xf32>
    %283 = arith.negf %282 : vector<8x24xf32>
    %284 = math.exp %283 : vector<8x24xf32>
    %cst_88 = arith.constant 1.000000e+00 : f32
    %285 = vector.broadcast %cst_88 : f32 to vector<8x24xf32>
    %286 = arith.addf %285, %284 : vector<8x24xf32>
    %287 = arith.divf %285, %286 : vector<8x24xf32>
    %288 = vector.extract_strided_slice %287 {offsets = [0, 0], sizes = [8, 6], strides = [1, 1]} : vector<8x24xf32> to vector<8x6xf32>
    %289 = vector.extract_strided_slice %287 {offsets = [0, 6], sizes = [8, 6], strides = [1, 1]} : vector<8x24xf32> to vector<8x6xf32>
    %290 = vector.extract_strided_slice %287 {offsets = [0, 12], sizes = [8, 6], strides = [1, 1]} : vector<8x24xf32> to vector<8x6xf32>
    %cst_89 = arith.constant 2.000000e+00 : f32
    %291 = vector.broadcast %cst_89 : f32 to vector<8x6xf32>
    %292 = arith.mulf %291, %290 : vector<8x6xf32>
    %cst_90 = arith.constant 1.000000e+00 : f32
    %293 = vector.broadcast %cst_90 : f32 to vector<8x6xf32>
    %294 = arith.subf %292, %293 : vector<8x6xf32>
    %295 = vector.extract_strided_slice %287 {offsets = [0, 18], sizes = [8, 6], strides = [1, 1]} : vector<8x24xf32> to vector<8x6xf32>
    %296 = arith.mulf %289, %250 : vector<8x6xf32>
    %297 = arith.mulf %288, %294 : vector<8x6xf32>
    %298 = arith.addf %296, %297 : vector<8x6xf32>
    %299 = math.tanh %298 : vector<8x6xf32>
    %300 = arith.mulf %295, %299 : vector<8x6xf32>
    %c72 = arith.constant 72 : index
    %c0_91 = arith.constant 0 : index
    %301 = vector.load %arg1[%c72, %c0_91] : memref<192x128xf32, #tpu.memory_space<vmem>>, vector<6x6xf32>
    %cst_92 = arith.constant dense<0.000000e+00> : vector<8x6xf32>
    %302 = tpu.matmul %300, %301, %cst_92 {dimension_numbers = #tpu.dot_dimension_numbers<[1], [0], [0], [1], [0, 0, 1, 1], [], []>} : vector<8x6xf32>, vector<6x6xf32>, vector<8x6xf32> -> vector<8x6xf32>
    %303 = arith.addf %255, %302 : vector<8x6xf32>
    %cst_93 = arith.constant dense<0.000000e+00> : vector<8x24xf32>
    %304 = tpu.matmul %300, %5, %cst_93 {dimension_numbers = #tpu.dot_dimension_numbers<[1], [0], [0], [1], [0, 0, 1, 1], [], []>} : vector<8x6xf32>, vector<6x24xf32>, vector<8x24xf32> -> vector<8x24xf32>
    %305 = vector.broadcast %2 : vector<1x24xf32> to vector<8x24xf32>
    %306 = arith.addf %304, %305 : vector<8x24xf32>
    %c6 = arith.constant 6 : index
    %c0_94 = arith.constant 0 : index
    %c0_95 = arith.constant 0 : index
    %307 = vector.load %arg3[%c6, %c0_94, %c0_95] : memref<20x8x24xf32, #tpu.memory_space<vmem>>, vector<1x8x24xf32>
    %308 = vector.shape_cast %307 : vector<1x8x24xf32> to vector<8x24xf32>
    %cst_96 = arith.constant dense<0.000000e+00> : vector<8x24xf32>
    %309 = tpu.matmul %280, %3, %cst_96 {dimension_numbers = #tpu.dot_dimension_numbers<[1], [0], [0], [1], [0, 0, 1, 1], [], []>} : vector<8x6xf32>, vector<6x24xf32>, vector<8x24xf32> -> vector<8x24xf32>
    %310 = arith.addf %308, %309 : vector<8x24xf32>
    %311 = arith.negf %310 : vector<8x24xf32>
    %312 = math.exp %311 : vector<8x24xf32>
    %cst_97 = arith.constant 1.000000e+00 : f32
    %313 = vector.broadcast %cst_97 : f32 to vector<8x24xf32>
    %314 = arith.addf %313, %312 : vector<8x24xf32>
    %315 = arith.divf %313, %314 : vector<8x24xf32>
    %316 = vector.extract_strided_slice %315 {offsets = [0, 0], sizes = [8, 6], strides = [1, 1]} : vector<8x24xf32> to vector<8x6xf32>
    %317 = vector.extract_strided_slice %315 {offsets = [0, 6], sizes = [8, 6], strides = [1, 1]} : vector<8x24xf32> to vector<8x6xf32>
    %318 = vector.extract_strided_slice %315 {offsets = [0, 12], sizes = [8, 6], strides = [1, 1]} : vector<8x24xf32> to vector<8x6xf32>
    %cst_98 = arith.constant 2.000000e+00 : f32
    %319 = vector.broadcast %cst_98 : f32 to vector<8x6xf32>
    %320 = arith.mulf %319, %318 : vector<8x6xf32>
    %cst_99 = arith.constant 1.000000e+00 : f32
    %321 = vector.broadcast %cst_99 : f32 to vector<8x6xf32>
    %322 = arith.subf %320, %321 : vector<8x6xf32>
    %323 = vector.extract_strided_slice %315 {offsets = [0, 18], sizes = [8, 6], strides = [1, 1]} : vector<8x24xf32> to vector<8x6xf32>
    %324 = arith.mulf %317, %278 : vector<8x6xf32>
    %325 = arith.mulf %316, %322 : vector<8x6xf32>
    %326 = arith.addf %324, %325 : vector<8x6xf32>
    %327 = math.tanh %326 : vector<8x6xf32>
    %328 = arith.mulf %323, %327 : vector<8x6xf32>
    %cst_100 = arith.constant dense<0.000000e+00> : vector<8x24xf32>
    %329 = tpu.matmul %328, %4, %cst_100 {dimension_numbers = #tpu.dot_dimension_numbers<[1], [0], [0], [1], [0, 0, 1, 1], [], []>} : vector<8x6xf32>, vector<6x24xf32>, vector<8x24xf32> -> vector<8x24xf32>
    %330 = arith.addf %329, %306 : vector<8x24xf32>
    %331 = arith.negf %330 : vector<8x24xf32>
    %332 = math.exp %331 : vector<8x24xf32>
    %cst_101 = arith.constant 1.000000e+00 : f32
    %333 = vector.broadcast %cst_101 : f32 to vector<8x24xf32>
    %334 = arith.addf %333, %332 : vector<8x24xf32>
    %335 = arith.divf %333, %334 : vector<8x24xf32>
    %336 = vector.extract_strided_slice %335 {offsets = [0, 0], sizes = [8, 6], strides = [1, 1]} : vector<8x24xf32> to vector<8x6xf32>
    %337 = vector.extract_strided_slice %335 {offsets = [0, 6], sizes = [8, 6], strides = [1, 1]} : vector<8x24xf32> to vector<8x6xf32>
    %338 = vector.extract_strided_slice %335 {offsets = [0, 12], sizes = [8, 6], strides = [1, 1]} : vector<8x24xf32> to vector<8x6xf32>
    %cst_102 = arith.constant 2.000000e+00 : f32
    %339 = vector.broadcast %cst_102 : f32 to vector<8x6xf32>
    %340 = arith.mulf %339, %338 : vector<8x6xf32>
    %cst_103 = arith.constant 1.000000e+00 : f32
    %341 = vector.broadcast %cst_103 : f32 to vector<8x6xf32>
    %342 = arith.subf %340, %341 : vector<8x6xf32>
    %343 = vector.extract_strided_slice %335 {offsets = [0, 18], sizes = [8, 6], strides = [1, 1]} : vector<8x24xf32> to vector<8x6xf32>
    %344 = arith.mulf %337, %298 : vector<8x6xf32>
    %345 = arith.mulf %336, %342 : vector<8x6xf32>
    %346 = arith.addf %344, %345 : vector<8x6xf32>
    %347 = math.tanh %346 : vector<8x6xf32>
    %348 = arith.mulf %343, %347 : vector<8x6xf32>
    %c80 = arith.constant 80 : index
    %c0_104 = arith.constant 0 : index
    %349 = vector.load %arg1[%c80, %c0_104] : memref<192x128xf32, #tpu.memory_space<vmem>>, vector<6x6xf32>
    %cst_105 = arith.constant dense<0.000000e+00> : vector<8x6xf32>
    %350 = tpu.matmul %348, %349, %cst_105 {dimension_numbers = #tpu.dot_dimension_numbers<[1], [0], [0], [1], [0, 0, 1, 1], [], []>} : vector<8x6xf32>, vector<6x6xf32>, vector<8x6xf32> -> vector<8x6xf32>
    %351 = arith.addf %303, %350 : vector<8x6xf32>
    %cst_106 = arith.constant dense<0.000000e+00> : vector<8x24xf32>
    %352 = tpu.matmul %348, %5, %cst_106 {dimension_numbers = #tpu.dot_dimension_numbers<[1], [0], [0], [1], [0, 0, 1, 1], [], []>} : vector<8x6xf32>, vector<6x24xf32>, vector<8x24xf32> -> vector<8x24xf32>
    %353 = vector.broadcast %2 : vector<1x24xf32> to vector<8x24xf32>
    %354 = arith.addf %352, %353 : vector<8x24xf32>
    %c7 = arith.constant 7 : index
    %c0_107 = arith.constant 0 : index
    %c0_108 = arith.constant 0 : index
    %355 = vector.load %arg3[%c7, %c0_107, %c0_108] : memref<20x8x24xf32, #tpu.memory_space<vmem>>, vector<1x8x24xf32>
    %356 = vector.shape_cast %355 : vector<1x8x24xf32> to vector<8x24xf32>
    %cst_109 = arith.constant dense<0.000000e+00> : vector<8x24xf32>
    %357 = tpu.matmul %328, %3, %cst_109 {dimension_numbers = #tpu.dot_dimension_numbers<[1], [0], [0], [1], [0, 0, 1, 1], [], []>} : vector<8x6xf32>, vector<6x24xf32>, vector<8x24xf32> -> vector<8x24xf32>
    %358 = arith.addf %356, %357 : vector<8x24xf32>
    %359 = arith.negf %358 : vector<8x24xf32>
    %360 = math.exp %359 : vector<8x24xf32>
    %cst_110 = arith.constant 1.000000e+00 : f32
    %361 = vector.broadcast %cst_110 : f32 to vector<8x24xf32>
    %362 = arith.addf %361, %360 : vector<8x24xf32>
    %363 = arith.divf %361, %362 : vector<8x24xf32>
    %364 = vector.extract_strided_slice %363 {offsets = [0, 0], sizes = [8, 6], strides = [1, 1]} : vector<8x24xf32> to vector<8x6xf32>
    %365 = vector.extract_strided_slice %363 {offsets = [0, 6], sizes = [8, 6], strides = [1, 1]} : vector<8x24xf32> to vector<8x6xf32>
    %366 = vector.extract_strided_slice %363 {offsets = [0, 12], sizes = [8, 6], strides = [1, 1]} : vector<8x24xf32> to vector<8x6xf32>
    %cst_111 = arith.constant 2.000000e+00 : f32
    %367 = vector.broadcast %cst_111 : f32 to vector<8x6xf32>
    %368 = arith.mulf %367, %366 : vector<8x6xf32>
    %cst_112 = arith.constant 1.000000e+00 : f32
    %369 = vector.broadcast %cst_112 : f32 to vector<8x6xf32>
    %370 = arith.subf %368, %369 : vector<8x6xf32>
    %371 = vector.extract_strided_slice %363 {offsets = [0, 18], sizes = [8, 6], strides = [1, 1]} : vector<8x24xf32> to vector<8x6xf32>
    %372 = arith.mulf %365, %326 : vector<8x6xf32>
    %373 = arith.mulf %364, %370 : vector<8x6xf32>
    %374 = arith.addf %372, %373 : vector<8x6xf32>
    %375 = math.tanh %374 : vector<8x6xf32>
    %376 = arith.mulf %371, %375 : vector<8x6xf32>
    %cst_113 = arith.constant dense<0.000000e+00> : vector<8x24xf32>
    %377 = tpu.matmul %376, %4, %cst_113 {dimension_numbers = #tpu.dot_dimension_numbers<[1], [0], [0], [1], [0, 0, 1, 1], [], []>} : vector<8x6xf32>, vector<6x24xf32>, vector<8x24xf32> -> vector<8x24xf32>
    %378 = arith.addf %377, %354 : vector<8x24xf32>
    %379 = arith.negf %378 : vector<8x24xf32>
    %380 = math.exp %379 : vector<8x24xf32>
    %cst_114 = arith.constant 1.000000e+00 : f32
    %381 = vector.broadcast %cst_114 : f32 to vector<8x24xf32>
    %382 = arith.addf %381, %380 : vector<8x24xf32>
    %383 = arith.divf %381, %382 : vector<8x24xf32>
    %384 = vector.extract_strided_slice %383 {offsets = [0, 0], sizes = [8, 6], strides = [1, 1]} : vector<8x24xf32> to vector<8x6xf32>
    %385 = vector.extract_strided_slice %383 {offsets = [0, 6], sizes = [8, 6], strides = [1, 1]} : vector<8x24xf32> to vector<8x6xf32>
    %386 = vector.extract_strided_slice %383 {offsets = [0, 12], sizes = [8, 6], strides = [1, 1]} : vector<8x24xf32> to vector<8x6xf32>
    %cst_115 = arith.constant 2.000000e+00 : f32
    %387 = vector.broadcast %cst_115 : f32 to vector<8x6xf32>
    %388 = arith.mulf %387, %386 : vector<8x6xf32>
    %cst_116 = arith.constant 1.000000e+00 : f32
    %389 = vector.broadcast %cst_116 : f32 to vector<8x6xf32>
    %390 = arith.subf %388, %389 : vector<8x6xf32>
    %391 = vector.extract_strided_slice %383 {offsets = [0, 18], sizes = [8, 6], strides = [1, 1]} : vector<8x24xf32> to vector<8x6xf32>
    %392 = arith.mulf %385, %346 : vector<8x6xf32>
    %393 = arith.mulf %384, %390 : vector<8x6xf32>
    %394 = arith.addf %392, %393 : vector<8x6xf32>
    %395 = math.tanh %394 : vector<8x6xf32>
    %396 = arith.mulf %391, %395 : vector<8x6xf32>
    %c88 = arith.constant 88 : index
    %c0_117 = arith.constant 0 : index
    %397 = vector.load %arg1[%c88, %c0_117] : memref<192x128xf32, #tpu.memory_space<vmem>>, vector<6x6xf32>
    %cst_118 = arith.constant dense<0.000000e+00> : vector<8x6xf32>
    %398 = tpu.matmul %396, %397, %cst_118 {dimension_numbers = #tpu.dot_dimension_numbers<[1], [0], [0], [1], [0, 0, 1, 1], [], []>} : vector<8x6xf32>, vector<6x6xf32>, vector<8x6xf32> -> vector<8x6xf32>
    %399 = arith.addf %351, %398 : vector<8x6xf32>
    %cst_119 = arith.constant dense<0.000000e+00> : vector<8x24xf32>
    %400 = tpu.matmul %396, %5, %cst_119 {dimension_numbers = #tpu.dot_dimension_numbers<[1], [0], [0], [1], [0, 0, 1, 1], [], []>} : vector<8x6xf32>, vector<6x24xf32>, vector<8x24xf32> -> vector<8x24xf32>
    %401 = vector.broadcast %2 : vector<1x24xf32> to vector<8x24xf32>
    %402 = arith.addf %400, %401 : vector<8x24xf32>
    %c8_120 = arith.constant 8 : index
    %c0_121 = arith.constant 0 : index
    %c0_122 = arith.constant 0 : index
    %403 = vector.load %arg3[%c8_120, %c0_121, %c0_122] : memref<20x8x24xf32, #tpu.memory_space<vmem>>, vector<1x8x24xf32>
    %404 = vector.shape_cast %403 : vector<1x8x24xf32> to vector<8x24xf32>
    %cst_123 = arith.constant dense<0.000000e+00> : vector<8x24xf32>
    %405 = tpu.matmul %376, %3, %cst_123 {dimension_numbers = #tpu.dot_dimension_numbers<[1], [0], [0], [1], [0, 0, 1, 1], [], []>} : vector<8x6xf32>, vector<6x24xf32>, vector<8x24xf32> -> vector<8x24xf32>
    %406 = arith.addf %404, %405 : vector<8x24xf32>
    %407 = arith.negf %406 : vector<8x24xf32>
    %408 = math.exp %407 : vector<8x24xf32>
    %cst_124 = arith.constant 1.000000e+00 : f32
    %409 = vector.broadcast %cst_124 : f32 to vector<8x24xf32>
    %410 = arith.addf %409, %408 : vector<8x24xf32>
    %411 = arith.divf %409, %410 : vector<8x24xf32>
    %412 = vector.extract_strided_slice %411 {offsets = [0, 0], sizes = [8, 6], strides = [1, 1]} : vector<8x24xf32> to vector<8x6xf32>
    %413 = vector.extract_strided_slice %411 {offsets = [0, 6], sizes = [8, 6], strides = [1, 1]} : vector<8x24xf32> to vector<8x6xf32>
    %414 = vector.extract_strided_slice %411 {offsets = [0, 12], sizes = [8, 6], strides = [1, 1]} : vector<8x24xf32> to vector<8x6xf32>
    %cst_125 = arith.constant 2.000000e+00 : f32
    %415 = vector.broadcast %cst_125 : f32 to vector<8x6xf32>
    %416 = arith.mulf %415, %414 : vector<8x6xf32>
    %cst_126 = arith.constant 1.000000e+00 : f32
    %417 = vector.broadcast %cst_126 : f32 to vector<8x6xf32>
    %418 = arith.subf %416, %417 : vector<8x6xf32>
    %419 = vector.extract_strided_slice %411 {offsets = [0, 18], sizes = [8, 6], strides = [1, 1]} : vector<8x24xf32> to vector<8x6xf32>
    %420 = arith.mulf %413, %374 : vector<8x6xf32>
    %421 = arith.mulf %412, %418 : vector<8x6xf32>
    %422 = arith.addf %420, %421 : vector<8x6xf32>
    %423 = math.tanh %422 : vector<8x6xf32>
    %424 = arith.mulf %419, %423 : vector<8x6xf32>
    %cst_127 = arith.constant dense<0.000000e+00> : vector<8x24xf32>
    %425 = tpu.matmul %424, %4, %cst_127 {dimension_numbers = #tpu.dot_dimension_numbers<[1], [0], [0], [1], [0, 0, 1, 1], [], []>} : vector<8x6xf32>, vector<6x24xf32>, vector<8x24xf32> -> vector<8x24xf32>
    %426 = arith.addf %425, %402 : vector<8x24xf32>
    %427 = arith.negf %426 : vector<8x24xf32>
    %428 = math.exp %427 : vector<8x24xf32>
    %cst_128 = arith.constant 1.000000e+00 : f32
    %429 = vector.broadcast %cst_128 : f32 to vector<8x24xf32>
    %430 = arith.addf %429, %428 : vector<8x24xf32>
    %431 = arith.divf %429, %430 : vector<8x24xf32>
    %432 = vector.extract_strided_slice %431 {offsets = [0, 0], sizes = [8, 6], strides = [1, 1]} : vector<8x24xf32> to vector<8x6xf32>
    %433 = vector.extract_strided_slice %431 {offsets = [0, 6], sizes = [8, 6], strides = [1, 1]} : vector<8x24xf32> to vector<8x6xf32>
    %434 = vector.extract_strided_slice %431 {offsets = [0, 12], sizes = [8, 6], strides = [1, 1]} : vector<8x24xf32> to vector<8x6xf32>
    %cst_129 = arith.constant 2.000000e+00 : f32
    %435 = vector.broadcast %cst_129 : f32 to vector<8x6xf32>
    %436 = arith.mulf %435, %434 : vector<8x6xf32>
    %cst_130 = arith.constant 1.000000e+00 : f32
    %437 = vector.broadcast %cst_130 : f32 to vector<8x6xf32>
    %438 = arith.subf %436, %437 : vector<8x6xf32>
    %439 = vector.extract_strided_slice %431 {offsets = [0, 18], sizes = [8, 6], strides = [1, 1]} : vector<8x24xf32> to vector<8x6xf32>
    %440 = arith.mulf %433, %394 : vector<8x6xf32>
    %441 = arith.mulf %432, %438 : vector<8x6xf32>
    %442 = arith.addf %440, %441 : vector<8x6xf32>
    %443 = math.tanh %442 : vector<8x6xf32>
    %444 = arith.mulf %439, %443 : vector<8x6xf32>
    %c96 = arith.constant 96 : index
    %c0_131 = arith.constant 0 : index
    %445 = vector.load %arg1[%c96, %c0_131] : memref<192x128xf32, #tpu.memory_space<vmem>>, vector<6x6xf32>
    %cst_132 = arith.constant dense<0.000000e+00> : vector<8x6xf32>
    %446 = tpu.matmul %444, %445, %cst_132 {dimension_numbers = #tpu.dot_dimension_numbers<[1], [0], [0], [1], [0, 0, 1, 1], [], []>} : vector<8x6xf32>, vector<6x6xf32>, vector<8x6xf32> -> vector<8x6xf32>
    %447 = arith.addf %399, %446 : vector<8x6xf32>
    %cst_133 = arith.constant dense<0.000000e+00> : vector<8x24xf32>
    %448 = tpu.matmul %444, %5, %cst_133 {dimension_numbers = #tpu.dot_dimension_numbers<[1], [0], [0], [1], [0, 0, 1, 1], [], []>} : vector<8x6xf32>, vector<6x24xf32>, vector<8x24xf32> -> vector<8x24xf32>
    %449 = vector.broadcast %2 : vector<1x24xf32> to vector<8x24xf32>
    %450 = arith.addf %448, %449 : vector<8x24xf32>
    %c9 = arith.constant 9 : index
    %c0_134 = arith.constant 0 : index
    %c0_135 = arith.constant 0 : index
    %451 = vector.load %arg3[%c9, %c0_134, %c0_135] : memref<20x8x24xf32, #tpu.memory_space<vmem>>, vector<1x8x24xf32>
    %452 = vector.shape_cast %451 : vector<1x8x24xf32> to vector<8x24xf32>
    %cst_136 = arith.constant dense<0.000000e+00> : vector<8x24xf32>
    %453 = tpu.matmul %424, %3, %cst_136 {dimension_numbers = #tpu.dot_dimension_numbers<[1], [0], [0], [1], [0, 0, 1, 1], [], []>} : vector<8x6xf32>, vector<6x24xf32>, vector<8x24xf32> -> vector<8x24xf32>
    %454 = arith.addf %452, %453 : vector<8x24xf32>
    %455 = arith.negf %454 : vector<8x24xf32>
    %456 = math.exp %455 : vector<8x24xf32>
    %cst_137 = arith.constant 1.000000e+00 : f32
    %457 = vector.broadcast %cst_137 : f32 to vector<8x24xf32>
    %458 = arith.addf %457, %456 : vector<8x24xf32>
    %459 = arith.divf %457, %458 : vector<8x24xf32>
    %460 = vector.extract_strided_slice %459 {offsets = [0, 0], sizes = [8, 6], strides = [1, 1]} : vector<8x24xf32> to vector<8x6xf32>
    %461 = vector.extract_strided_slice %459 {offsets = [0, 6], sizes = [8, 6], strides = [1, 1]} : vector<8x24xf32> to vector<8x6xf32>
    %462 = vector.extract_strided_slice %459 {offsets = [0, 12], sizes = [8, 6], strides = [1, 1]} : vector<8x24xf32> to vector<8x6xf32>
    %cst_138 = arith.constant 2.000000e+00 : f32
    %463 = vector.broadcast %cst_138 : f32 to vector<8x6xf32>
    %464 = arith.mulf %463, %462 : vector<8x6xf32>
    %cst_139 = arith.constant 1.000000e+00 : f32
    %465 = vector.broadcast %cst_139 : f32 to vector<8x6xf32>
    %466 = arith.subf %464, %465 : vector<8x6xf32>
    %467 = vector.extract_strided_slice %459 {offsets = [0, 18], sizes = [8, 6], strides = [1, 1]} : vector<8x24xf32> to vector<8x6xf32>
    %468 = arith.mulf %461, %422 : vector<8x6xf32>
    %469 = arith.mulf %460, %466 : vector<8x6xf32>
    %470 = arith.addf %468, %469 : vector<8x6xf32>
    %471 = math.tanh %470 : vector<8x6xf32>
    %472 = arith.mulf %467, %471 : vector<8x6xf32>
    %cst_140 = arith.constant dense<0.000000e+00> : vector<8x24xf32>
    %473 = tpu.matmul %472, %4, %cst_140 {dimension_numbers = #tpu.dot_dimension_numbers<[1], [0], [0], [1], [0, 0, 1, 1], [], []>} : vector<8x6xf32>, vector<6x24xf32>, vector<8x24xf32> -> vector<8x24xf32>
    %474 = arith.addf %473, %450 : vector<8x24xf32>
    %475 = arith.negf %474 : vector<8x24xf32>
    %476 = math.exp %475 : vector<8x24xf32>
    %cst_141 = arith.constant 1.000000e+00 : f32
    %477 = vector.broadcast %cst_141 : f32 to vector<8x24xf32>
    %478 = arith.addf %477, %476 : vector<8x24xf32>
    %479 = arith.divf %477, %478 : vector<8x24xf32>
    %480 = vector.extract_strided_slice %479 {offsets = [0, 0], sizes = [8, 6], strides = [1, 1]} : vector<8x24xf32> to vector<8x6xf32>
    %481 = vector.extract_strided_slice %479 {offsets = [0, 6], sizes = [8, 6], strides = [1, 1]} : vector<8x24xf32> to vector<8x6xf32>
    %482 = vector.extract_strided_slice %479 {offsets = [0, 12], sizes = [8, 6], strides = [1, 1]} : vector<8x24xf32> to vector<8x6xf32>
    %cst_142 = arith.constant 2.000000e+00 : f32
    %483 = vector.broadcast %cst_142 : f32 to vector<8x6xf32>
    %484 = arith.mulf %483, %482 : vector<8x6xf32>
    %cst_143 = arith.constant 1.000000e+00 : f32
    %485 = vector.broadcast %cst_143 : f32 to vector<8x6xf32>
    %486 = arith.subf %484, %485 : vector<8x6xf32>
    %487 = vector.extract_strided_slice %479 {offsets = [0, 18], sizes = [8, 6], strides = [1, 1]} : vector<8x24xf32> to vector<8x6xf32>
    %488 = arith.mulf %481, %442 : vector<8x6xf32>
    %489 = arith.mulf %480, %486 : vector<8x6xf32>
    %490 = arith.addf %488, %489 : vector<8x6xf32>
    %491 = math.tanh %490 : vector<8x6xf32>
    %492 = arith.mulf %487, %491 : vector<8x6xf32>
    %c104 = arith.constant 104 : index
    %c0_144 = arith.constant 0 : index
    %493 = vector.load %arg1[%c104, %c0_144] : memref<192x128xf32, #tpu.memory_space<vmem>>, vector<6x6xf32>
    %cst_145 = arith.constant dense<0.000000e+00> : vector<8x6xf32>
    %494 = tpu.matmul %492, %493, %cst_145 {dimension_numbers = #tpu.dot_dimension_numbers<[1], [0], [0], [1], [0, 0, 1, 1], [], []>} : vector<8x6xf32>, vector<6x6xf32>, vector<8x6xf32> -> vector<8x6xf32>
    %495 = arith.addf %447, %494 : vector<8x6xf32>
    %cst_146 = arith.constant dense<0.000000e+00> : vector<8x24xf32>
    %496 = tpu.matmul %492, %5, %cst_146 {dimension_numbers = #tpu.dot_dimension_numbers<[1], [0], [0], [1], [0, 0, 1, 1], [], []>} : vector<8x6xf32>, vector<6x24xf32>, vector<8x24xf32> -> vector<8x24xf32>
    %497 = vector.broadcast %2 : vector<1x24xf32> to vector<8x24xf32>
    %498 = arith.addf %496, %497 : vector<8x24xf32>
    %c10 = arith.constant 10 : index
    %c0_147 = arith.constant 0 : index
    %c0_148 = arith.constant 0 : index
    %499 = vector.load %arg3[%c10, %c0_147, %c0_148] : memref<20x8x24xf32, #tpu.memory_space<vmem>>, vector<1x8x24xf32>
    %500 = vector.shape_cast %499 : vector<1x8x24xf32> to vector<8x24xf32>
    %cst_149 = arith.constant dense<0.000000e+00> : vector<8x24xf32>
    %501 = tpu.matmul %472, %3, %cst_149 {dimension_numbers = #tpu.dot_dimension_numbers<[1], [0], [0], [1], [0, 0, 1, 1], [], []>} : vector<8x6xf32>, vector<6x24xf32>, vector<8x24xf32> -> vector<8x24xf32>
    %502 = arith.addf %500, %501 : vector<8x24xf32>
    %503 = arith.negf %502 : vector<8x24xf32>
    %504 = math.exp %503 : vector<8x24xf32>
    %cst_150 = arith.constant 1.000000e+00 : f32
    %505 = vector.broadcast %cst_150 : f32 to vector<8x24xf32>
    %506 = arith.addf %505, %504 : vector<8x24xf32>
    %507 = arith.divf %505, %506 : vector<8x24xf32>
    %508 = vector.extract_strided_slice %507 {offsets = [0, 0], sizes = [8, 6], strides = [1, 1]} : vector<8x24xf32> to vector<8x6xf32>
    %509 = vector.extract_strided_slice %507 {offsets = [0, 6], sizes = [8, 6], strides = [1, 1]} : vector<8x24xf32> to vector<8x6xf32>
    %510 = vector.extract_strided_slice %507 {offsets = [0, 12], sizes = [8, 6], strides = [1, 1]} : vector<8x24xf32> to vector<8x6xf32>
    %cst_151 = arith.constant 2.000000e+00 : f32
    %511 = vector.broadcast %cst_151 : f32 to vector<8x6xf32>
    %512 = arith.mulf %511, %510 : vector<8x6xf32>
    %cst_152 = arith.constant 1.000000e+00 : f32
    %513 = vector.broadcast %cst_152 : f32 to vector<8x6xf32>
    %514 = arith.subf %512, %513 : vector<8x6xf32>
    %515 = vector.extract_strided_slice %507 {offsets = [0, 18], sizes = [8, 6], strides = [1, 1]} : vector<8x24xf32> to vector<8x6xf32>
    %516 = arith.mulf %509, %470 : vector<8x6xf32>
    %517 = arith.mulf %508, %514 : vector<8x6xf32>
    %518 = arith.addf %516, %517 : vector<8x6xf32>
    %519 = math.tanh %518 : vector<8x6xf32>
    %520 = arith.mulf %515, %519 : vector<8x6xf32>
    %cst_153 = arith.constant dense<0.000000e+00> : vector<8x24xf32>
    %521 = tpu.matmul %520, %4, %cst_153 {dimension_numbers = #tpu.dot_dimension_numbers<[1], [0], [0], [1], [0, 0, 1, 1], [], []>} : vector<8x6xf32>, vector<6x24xf32>, vector<8x24xf32> -> vector<8x24xf32>
    %522 = arith.addf %521, %498 : vector<8x24xf32>
    %523 = arith.negf %522 : vector<8x24xf32>
    %524 = math.exp %523 : vector<8x24xf32>
    %cst_154 = arith.constant 1.000000e+00 : f32
    %525 = vector.broadcast %cst_154 : f32 to vector<8x24xf32>
    %526 = arith.addf %525, %524 : vector<8x24xf32>
    %527 = arith.divf %525, %526 : vector<8x24xf32>
    %528 = vector.extract_strided_slice %527 {offsets = [0, 0], sizes = [8, 6], strides = [1, 1]} : vector<8x24xf32> to vector<8x6xf32>
    %529 = vector.extract_strided_slice %527 {offsets = [0, 6], sizes = [8, 6], strides = [1, 1]} : vector<8x24xf32> to vector<8x6xf32>
    %530 = vector.extract_strided_slice %527 {offsets = [0, 12], sizes = [8, 6], strides = [1, 1]} : vector<8x24xf32> to vector<8x6xf32>
    %cst_155 = arith.constant 2.000000e+00 : f32
    %531 = vector.broadcast %cst_155 : f32 to vector<8x6xf32>
    %532 = arith.mulf %531, %530 : vector<8x6xf32>
    %cst_156 = arith.constant 1.000000e+00 : f32
    %533 = vector.broadcast %cst_156 : f32 to vector<8x6xf32>
    %534 = arith.subf %532, %533 : vector<8x6xf32>
    %535 = vector.extract_strided_slice %527 {offsets = [0, 18], sizes = [8, 6], strides = [1, 1]} : vector<8x24xf32> to vector<8x6xf32>
    %536 = arith.mulf %529, %490 : vector<8x6xf32>
    %537 = arith.mulf %528, %534 : vector<8x6xf32>
    %538 = arith.addf %536, %537 : vector<8x6xf32>
    %539 = math.tanh %538 : vector<8x6xf32>
    %540 = arith.mulf %535, %539 : vector<8x6xf32>
    %c112 = arith.constant 112 : index
    %c0_157 = arith.constant 0 : index
    %541 = vector.load %arg1[%c112, %c0_157] : memref<192x128xf32, #tpu.memory_space<vmem>>, vector<6x6xf32>
    %cst_158 = arith.constant dense<0.000000e+00> : vector<8x6xf32>
    %542 = tpu.matmul %540, %541, %cst_158 {dimension_numbers = #tpu.dot_dimension_numbers<[1], [0], [0], [1], [0, 0, 1, 1], [], []>} : vector<8x6xf32>, vector<6x6xf32>, vector<8x6xf32> -> vector<8x6xf32>
    %543 = arith.addf %495, %542 : vector<8x6xf32>
    %cst_159 = arith.constant dense<0.000000e+00> : vector<8x24xf32>
    %544 = tpu.matmul %540, %5, %cst_159 {dimension_numbers = #tpu.dot_dimension_numbers<[1], [0], [0], [1], [0, 0, 1, 1], [], []>} : vector<8x6xf32>, vector<6x24xf32>, vector<8x24xf32> -> vector<8x24xf32>
    %545 = vector.broadcast %2 : vector<1x24xf32> to vector<8x24xf32>
    %546 = arith.addf %544, %545 : vector<8x24xf32>
    %c11 = arith.constant 11 : index
    %c0_160 = arith.constant 0 : index
    %c0_161 = arith.constant 0 : index
    %547 = vector.load %arg3[%c11, %c0_160, %c0_161] : memref<20x8x24xf32, #tpu.memory_space<vmem>>, vector<1x8x24xf32>
    %548 = vector.shape_cast %547 : vector<1x8x24xf32> to vector<8x24xf32>
    %cst_162 = arith.constant dense<0.000000e+00> : vector<8x24xf32>
    %549 = tpu.matmul %520, %3, %cst_162 {dimension_numbers = #tpu.dot_dimension_numbers<[1], [0], [0], [1], [0, 0, 1, 1], [], []>} : vector<8x6xf32>, vector<6x24xf32>, vector<8x24xf32> -> vector<8x24xf32>
    %550 = arith.addf %548, %549 : vector<8x24xf32>
    %551 = arith.negf %550 : vector<8x24xf32>
    %552 = math.exp %551 : vector<8x24xf32>
    %cst_163 = arith.constant 1.000000e+00 : f32
    %553 = vector.broadcast %cst_163 : f32 to vector<8x24xf32>
    %554 = arith.addf %553, %552 : vector<8x24xf32>
    %555 = arith.divf %553, %554 : vector<8x24xf32>
    %556 = vector.extract_strided_slice %555 {offsets = [0, 0], sizes = [8, 6], strides = [1, 1]} : vector<8x24xf32> to vector<8x6xf32>
    %557 = vector.extract_strided_slice %555 {offsets = [0, 6], sizes = [8, 6], strides = [1, 1]} : vector<8x24xf32> to vector<8x6xf32>
    %558 = vector.extract_strided_slice %555 {offsets = [0, 12], sizes = [8, 6], strides = [1, 1]} : vector<8x24xf32> to vector<8x6xf32>
    %cst_164 = arith.constant 2.000000e+00 : f32
    %559 = vector.broadcast %cst_164 : f32 to vector<8x6xf32>
    %560 = arith.mulf %559, %558 : vector<8x6xf32>
    %cst_165 = arith.constant 1.000000e+00 : f32
    %561 = vector.broadcast %cst_165 : f32 to vector<8x6xf32>
    %562 = arith.subf %560, %561 : vector<8x6xf32>
    %563 = vector.extract_strided_slice %555 {offsets = [0, 18], sizes = [8, 6], strides = [1, 1]} : vector<8x24xf32> to vector<8x6xf32>
    %564 = arith.mulf %557, %518 : vector<8x6xf32>
    %565 = arith.mulf %556, %562 : vector<8x6xf32>
    %566 = arith.addf %564, %565 : vector<8x6xf32>
    %567 = math.tanh %566 : vector<8x6xf32>
    %568 = arith.mulf %563, %567 : vector<8x6xf32>
    %cst_166 = arith.constant dense<0.000000e+00> : vector<8x24xf32>
    %569 = tpu.matmul %568, %4, %cst_166 {dimension_numbers = #tpu.dot_dimension_numbers<[1], [0], [0], [1], [0, 0, 1, 1], [], []>} : vector<8x6xf32>, vector<6x24xf32>, vector<8x24xf32> -> vector<8x24xf32>
    %570 = arith.addf %569, %546 : vector<8x24xf32>
    %571 = arith.negf %570 : vector<8x24xf32>
    %572 = math.exp %571 : vector<8x24xf32>
    %cst_167 = arith.constant 1.000000e+00 : f32
    %573 = vector.broadcast %cst_167 : f32 to vector<8x24xf32>
    %574 = arith.addf %573, %572 : vector<8x24xf32>
    %575 = arith.divf %573, %574 : vector<8x24xf32>
    %576 = vector.extract_strided_slice %575 {offsets = [0, 0], sizes = [8, 6], strides = [1, 1]} : vector<8x24xf32> to vector<8x6xf32>
    %577 = vector.extract_strided_slice %575 {offsets = [0, 6], sizes = [8, 6], strides = [1, 1]} : vector<8x24xf32> to vector<8x6xf32>
    %578 = vector.extract_strided_slice %575 {offsets = [0, 12], sizes = [8, 6], strides = [1, 1]} : vector<8x24xf32> to vector<8x6xf32>
    %cst_168 = arith.constant 2.000000e+00 : f32
    %579 = vector.broadcast %cst_168 : f32 to vector<8x6xf32>
    %580 = arith.mulf %579, %578 : vector<8x6xf32>
    %cst_169 = arith.constant 1.000000e+00 : f32
    %581 = vector.broadcast %cst_169 : f32 to vector<8x6xf32>
    %582 = arith.subf %580, %581 : vector<8x6xf32>
    %583 = vector.extract_strided_slice %575 {offsets = [0, 18], sizes = [8, 6], strides = [1, 1]} : vector<8x24xf32> to vector<8x6xf32>
    %584 = arith.mulf %577, %538 : vector<8x6xf32>
    %585 = arith.mulf %576, %582 : vector<8x6xf32>
    %586 = arith.addf %584, %585 : vector<8x6xf32>
    %587 = math.tanh %586 : vector<8x6xf32>
    %588 = arith.mulf %583, %587 : vector<8x6xf32>
    %c120 = arith.constant 120 : index
    %c0_170 = arith.constant 0 : index
    %589 = vector.load %arg1[%c120, %c0_170] : memref<192x128xf32, #tpu.memory_space<vmem>>, vector<6x6xf32>
    %cst_171 = arith.constant dense<0.000000e+00> : vector<8x6xf32>
    %590 = tpu.matmul %588, %589, %cst_171 {dimension_numbers = #tpu.dot_dimension_numbers<[1], [0], [0], [1], [0, 0, 1, 1], [], []>} : vector<8x6xf32>, vector<6x6xf32>, vector<8x6xf32> -> vector<8x6xf32>
    %591 = arith.addf %543, %590 : vector<8x6xf32>
    %cst_172 = arith.constant dense<0.000000e+00> : vector<8x24xf32>
    %592 = tpu.matmul %588, %5, %cst_172 {dimension_numbers = #tpu.dot_dimension_numbers<[1], [0], [0], [1], [0, 0, 1, 1], [], []>} : vector<8x6xf32>, vector<6x24xf32>, vector<8x24xf32> -> vector<8x24xf32>
    %593 = vector.broadcast %2 : vector<1x24xf32> to vector<8x24xf32>
    %594 = arith.addf %592, %593 : vector<8x24xf32>
    %c12 = arith.constant 12 : index
    %c0_173 = arith.constant 0 : index
    %c0_174 = arith.constant 0 : index
    %595 = vector.load %arg3[%c12, %c0_173, %c0_174] : memref<20x8x24xf32, #tpu.memory_space<vmem>>, vector<1x8x24xf32>
    %596 = vector.shape_cast %595 : vector<1x8x24xf32> to vector<8x24xf32>
    %cst_175 = arith.constant dense<0.000000e+00> : vector<8x24xf32>
    %597 = tpu.matmul %568, %3, %cst_175 {dimension_numbers = #tpu.dot_dimension_numbers<[1], [0], [0], [1], [0, 0, 1, 1], [], []>} : vector<8x6xf32>, vector<6x24xf32>, vector<8x24xf32> -> vector<8x24xf32>
    %598 = arith.addf %596, %597 : vector<8x24xf32>
    %599 = arith.negf %598 : vector<8x24xf32>
    %600 = math.exp %599 : vector<8x24xf32>
    %cst_176 = arith.constant 1.000000e+00 : f32
    %601 = vector.broadcast %cst_176 : f32 to vector<8x24xf32>
    %602 = arith.addf %601, %600 : vector<8x24xf32>
    %603 = arith.divf %601, %602 : vector<8x24xf32>
    %604 = vector.extract_strided_slice %603 {offsets = [0, 0], sizes = [8, 6], strides = [1, 1]} : vector<8x24xf32> to vector<8x6xf32>
    %605 = vector.extract_strided_slice %603 {offsets = [0, 6], sizes = [8, 6], strides = [1, 1]} : vector<8x24xf32> to vector<8x6xf32>
    %606 = vector.extract_strided_slice %603 {offsets = [0, 12], sizes = [8, 6], strides = [1, 1]} : vector<8x24xf32> to vector<8x6xf32>
    %cst_177 = arith.constant 2.000000e+00 : f32
    %607 = vector.broadcast %cst_177 : f32 to vector<8x6xf32>
    %608 = arith.mulf %607, %606 : vector<8x6xf32>
    %cst_178 = arith.constant 1.000000e+00 : f32
    %609 = vector.broadcast %cst_178 : f32 to vector<8x6xf32>
    %610 = arith.subf %608, %609 : vector<8x6xf32>
    %611 = vector.extract_strided_slice %603 {offsets = [0, 18], sizes = [8, 6], strides = [1, 1]} : vector<8x24xf32> to vector<8x6xf32>
    %612 = arith.mulf %605, %566 : vector<8x6xf32>
    %613 = arith.mulf %604, %610 : vector<8x6xf32>
    %614 = arith.addf %612, %613 : vector<8x6xf32>
    %615 = math.tanh %614 : vector<8x6xf32>
    %616 = arith.mulf %611, %615 : vector<8x6xf32>
    %cst_179 = arith.constant dense<0.000000e+00> : vector<8x24xf32>
    %617 = tpu.matmul %616, %4, %cst_179 {dimension_numbers = #tpu.dot_dimension_numbers<[1], [0], [0], [1], [0, 0, 1, 1], [], []>} : vector<8x6xf32>, vector<6x24xf32>, vector<8x24xf32> -> vector<8x24xf32>
    %618 = arith.addf %617, %594 : vector<8x24xf32>
    %619 = arith.negf %618 : vector<8x24xf32>
    %620 = math.exp %619 : vector<8x24xf32>
    %cst_180 = arith.constant 1.000000e+00 : f32
    %621 = vector.broadcast %cst_180 : f32 to vector<8x24xf32>
    %622 = arith.addf %621, %620 : vector<8x24xf32>
    %623 = arith.divf %621, %622 : vector<8x24xf32>
    %624 = vector.extract_strided_slice %623 {offsets = [0, 0], sizes = [8, 6], strides = [1, 1]} : vector<8x24xf32> to vector<8x6xf32>
    %625 = vector.extract_strided_slice %623 {offsets = [0, 6], sizes = [8, 6], strides = [1, 1]} : vector<8x24xf32> to vector<8x6xf32>
    %626 = vector.extract_strided_slice %623 {offsets = [0, 12], sizes = [8, 6], strides = [1, 1]} : vector<8x24xf32> to vector<8x6xf32>
    %cst_181 = arith.constant 2.000000e+00 : f32
    %627 = vector.broadcast %cst_181 : f32 to vector<8x6xf32>
    %628 = arith.mulf %627, %626 : vector<8x6xf32>
    %cst_182 = arith.constant 1.000000e+00 : f32
    %629 = vector.broadcast %cst_182 : f32 to vector<8x6xf32>
    %630 = arith.subf %628, %629 : vector<8x6xf32>
    %631 = vector.extract_strided_slice %623 {offsets = [0, 18], sizes = [8, 6], strides = [1, 1]} : vector<8x24xf32> to vector<8x6xf32>
    %632 = arith.mulf %625, %586 : vector<8x6xf32>
    %633 = arith.mulf %624, %630 : vector<8x6xf32>
    %634 = arith.addf %632, %633 : vector<8x6xf32>
    %635 = math.tanh %634 : vector<8x6xf32>
    %636 = arith.mulf %631, %635 : vector<8x6xf32>
    %c128 = arith.constant 128 : index
    %c0_183 = arith.constant 0 : index
    %637 = vector.load %arg1[%c128, %c0_183] : memref<192x128xf32, #tpu.memory_space<vmem>>, vector<6x6xf32>
    %cst_184 = arith.constant dense<0.000000e+00> : vector<8x6xf32>
    %638 = tpu.matmul %636, %637, %cst_184 {dimension_numbers = #tpu.dot_dimension_numbers<[1], [0], [0], [1], [0, 0, 1, 1], [], []>} : vector<8x6xf32>, vector<6x6xf32>, vector<8x6xf32> -> vector<8x6xf32>
    %639 = arith.addf %591, %638 : vector<8x6xf32>
    %cst_185 = arith.constant dense<0.000000e+00> : vector<8x24xf32>
    %640 = tpu.matmul %636, %5, %cst_185 {dimension_numbers = #tpu.dot_dimension_numbers<[1], [0], [0], [1], [0, 0, 1, 1], [], []>} : vector<8x6xf32>, vector<6x24xf32>, vector<8x24xf32> -> vector<8x24xf32>
    %641 = vector.broadcast %2 : vector<1x24xf32> to vector<8x24xf32>
    %642 = arith.addf %640, %641 : vector<8x24xf32>
    %c13 = arith.constant 13 : index
    %c0_186 = arith.constant 0 : index
    %c0_187 = arith.constant 0 : index
    %643 = vector.load %arg3[%c13, %c0_186, %c0_187] : memref<20x8x24xf32, #tpu.memory_space<vmem>>, vector<1x8x24xf32>
    %644 = vector.shape_cast %643 : vector<1x8x24xf32> to vector<8x24xf32>
    %cst_188 = arith.constant dense<0.000000e+00> : vector<8x24xf32>
    %645 = tpu.matmul %616, %3, %cst_188 {dimension_numbers = #tpu.dot_dimension_numbers<[1], [0], [0], [1], [0, 0, 1, 1], [], []>} : vector<8x6xf32>, vector<6x24xf32>, vector<8x24xf32> -> vector<8x24xf32>
    %646 = arith.addf %644, %645 : vector<8x24xf32>
    %647 = arith.negf %646 : vector<8x24xf32>
    %648 = math.exp %647 : vector<8x24xf32>
    %cst_189 = arith.constant 1.000000e+00 : f32
    %649 = vector.broadcast %cst_189 : f32 to vector<8x24xf32>
    %650 = arith.addf %649, %648 : vector<8x24xf32>
    %651 = arith.divf %649, %650 : vector<8x24xf32>
    %652 = vector.extract_strided_slice %651 {offsets = [0, 0], sizes = [8, 6], strides = [1, 1]} : vector<8x24xf32> to vector<8x6xf32>
    %653 = vector.extract_strided_slice %651 {offsets = [0, 6], sizes = [8, 6], strides = [1, 1]} : vector<8x24xf32> to vector<8x6xf32>
    %654 = vector.extract_strided_slice %651 {offsets = [0, 12], sizes = [8, 6], strides = [1, 1]} : vector<8x24xf32> to vector<8x6xf32>
    %cst_190 = arith.constant 2.000000e+00 : f32
    %655 = vector.broadcast %cst_190 : f32 to vector<8x6xf32>
    %656 = arith.mulf %655, %654 : vector<8x6xf32>
    %cst_191 = arith.constant 1.000000e+00 : f32
    %657 = vector.broadcast %cst_191 : f32 to vector<8x6xf32>
    %658 = arith.subf %656, %657 : vector<8x6xf32>
    %659 = vector.extract_strided_slice %651 {offsets = [0, 18], sizes = [8, 6], strides = [1, 1]} : vector<8x24xf32> to vector<8x6xf32>
    %660 = arith.mulf %653, %614 : vector<8x6xf32>
    %661 = arith.mulf %652, %658 : vector<8x6xf32>
    %662 = arith.addf %660, %661 : vector<8x6xf32>
    %663 = math.tanh %662 : vector<8x6xf32>
    %664 = arith.mulf %659, %663 : vector<8x6xf32>
    %cst_192 = arith.constant dense<0.000000e+00> : vector<8x24xf32>
    %665 = tpu.matmul %664, %4, %cst_192 {dimension_numbers = #tpu.dot_dimension_numbers<[1], [0], [0], [1], [0, 0, 1, 1], [], []>} : vector<8x6xf32>, vector<6x24xf32>, vector<8x24xf32> -> vector<8x24xf32>
    %666 = arith.addf %665, %642 : vector<8x24xf32>
    %667 = arith.negf %666 : vector<8x24xf32>
    %668 = math.exp %667 : vector<8x24xf32>
    %cst_193 = arith.constant 1.000000e+00 : f32
    %669 = vector.broadcast %cst_193 : f32 to vector<8x24xf32>
    %670 = arith.addf %669, %668 : vector<8x24xf32>
    %671 = arith.divf %669, %670 : vector<8x24xf32>
    %672 = vector.extract_strided_slice %671 {offsets = [0, 0], sizes = [8, 6], strides = [1, 1]} : vector<8x24xf32> to vector<8x6xf32>
    %673 = vector.extract_strided_slice %671 {offsets = [0, 6], sizes = [8, 6], strides = [1, 1]} : vector<8x24xf32> to vector<8x6xf32>
    %674 = vector.extract_strided_slice %671 {offsets = [0, 12], sizes = [8, 6], strides = [1, 1]} : vector<8x24xf32> to vector<8x6xf32>
    %cst_194 = arith.constant 2.000000e+00 : f32
    %675 = vector.broadcast %cst_194 : f32 to vector<8x6xf32>
    %676 = arith.mulf %675, %674 : vector<8x6xf32>
    %cst_195 = arith.constant 1.000000e+00 : f32
    %677 = vector.broadcast %cst_195 : f32 to vector<8x6xf32>
    %678 = arith.subf %676, %677 : vector<8x6xf32>
    %679 = vector.extract_strided_slice %671 {offsets = [0, 18], sizes = [8, 6], strides = [1, 1]} : vector<8x24xf32> to vector<8x6xf32>
    %680 = arith.mulf %673, %634 : vector<8x6xf32>
    %681 = arith.mulf %672, %678 : vector<8x6xf32>
    %682 = arith.addf %680, %681 : vector<8x6xf32>
    %683 = math.tanh %682 : vector<8x6xf32>
    %684 = arith.mulf %679, %683 : vector<8x6xf32>
    %c136 = arith.constant 136 : index
    %c0_196 = arith.constant 0 : index
    %685 = vector.load %arg1[%c136, %c0_196] : memref<192x128xf32, #tpu.memory_space<vmem>>, vector<6x6xf32>
    %cst_197 = arith.constant dense<0.000000e+00> : vector<8x6xf32>
    %686 = tpu.matmul %684, %685, %cst_197 {dimension_numbers = #tpu.dot_dimension_numbers<[1], [0], [0], [1], [0, 0, 1, 1], [], []>} : vector<8x6xf32>, vector<6x6xf32>, vector<8x6xf32> -> vector<8x6xf32>
    %687 = arith.addf %639, %686 : vector<8x6xf32>
    %cst_198 = arith.constant dense<0.000000e+00> : vector<8x24xf32>
    %688 = tpu.matmul %684, %5, %cst_198 {dimension_numbers = #tpu.dot_dimension_numbers<[1], [0], [0], [1], [0, 0, 1, 1], [], []>} : vector<8x6xf32>, vector<6x24xf32>, vector<8x24xf32> -> vector<8x24xf32>
    %689 = vector.broadcast %2 : vector<1x24xf32> to vector<8x24xf32>
    %690 = arith.addf %688, %689 : vector<8x24xf32>
    %c14 = arith.constant 14 : index
    %c0_199 = arith.constant 0 : index
    %c0_200 = arith.constant 0 : index
    %691 = vector.load %arg3[%c14, %c0_199, %c0_200] : memref<20x8x24xf32, #tpu.memory_space<vmem>>, vector<1x8x24xf32>
    %692 = vector.shape_cast %691 : vector<1x8x24xf32> to vector<8x24xf32>
    %cst_201 = arith.constant dense<0.000000e+00> : vector<8x24xf32>
    %693 = tpu.matmul %664, %3, %cst_201 {dimension_numbers = #tpu.dot_dimension_numbers<[1], [0], [0], [1], [0, 0, 1, 1], [], []>} : vector<8x6xf32>, vector<6x24xf32>, vector<8x24xf32> -> vector<8x24xf32>
    %694 = arith.addf %692, %693 : vector<8x24xf32>
    %695 = arith.negf %694 : vector<8x24xf32>
    %696 = math.exp %695 : vector<8x24xf32>
    %cst_202 = arith.constant 1.000000e+00 : f32
    %697 = vector.broadcast %cst_202 : f32 to vector<8x24xf32>
    %698 = arith.addf %697, %696 : vector<8x24xf32>
    %699 = arith.divf %697, %698 : vector<8x24xf32>
    %700 = vector.extract_strided_slice %699 {offsets = [0, 0], sizes = [8, 6], strides = [1, 1]} : vector<8x24xf32> to vector<8x6xf32>
    %701 = vector.extract_strided_slice %699 {offsets = [0, 6], sizes = [8, 6], strides = [1, 1]} : vector<8x24xf32> to vector<8x6xf32>
    %702 = vector.extract_strided_slice %699 {offsets = [0, 12], sizes = [8, 6], strides = [1, 1]} : vector<8x24xf32> to vector<8x6xf32>
    %cst_203 = arith.constant 2.000000e+00 : f32
    %703 = vector.broadcast %cst_203 : f32 to vector<8x6xf32>
    %704 = arith.mulf %703, %702 : vector<8x6xf32>
    %cst_204 = arith.constant 1.000000e+00 : f32
    %705 = vector.broadcast %cst_204 : f32 to vector<8x6xf32>
    %706 = arith.subf %704, %705 : vector<8x6xf32>
    %707 = vector.extract_strided_slice %699 {offsets = [0, 18], sizes = [8, 6], strides = [1, 1]} : vector<8x24xf32> to vector<8x6xf32>
    %708 = arith.mulf %701, %662 : vector<8x6xf32>
    %709 = arith.mulf %700, %706 : vector<8x6xf32>
    %710 = arith.addf %708, %709 : vector<8x6xf32>
    %711 = math.tanh %710 : vector<8x6xf32>
    %712 = arith.mulf %707, %711 : vector<8x6xf32>
    %cst_205 = arith.constant dense<0.000000e+00> : vector<8x24xf32>
    %713 = tpu.matmul %712, %4, %cst_205 {dimension_numbers = #tpu.dot_dimension_numbers<[1], [0], [0], [1], [0, 0, 1, 1], [], []>} : vector<8x6xf32>, vector<6x24xf32>, vector<8x24xf32> -> vector<8x24xf32>
    %714 = arith.addf %713, %690 : vector<8x24xf32>
    %715 = arith.negf %714 : vector<8x24xf32>
    %716 = math.exp %715 : vector<8x24xf32>
    %cst_206 = arith.constant 1.000000e+00 : f32
    %717 = vector.broadcast %cst_206 : f32 to vector<8x24xf32>
    %718 = arith.addf %717, %716 : vector<8x24xf32>
    %719 = arith.divf %717, %718 : vector<8x24xf32>
    %720 = vector.extract_strided_slice %719 {offsets = [0, 0], sizes = [8, 6], strides = [1, 1]} : vector<8x24xf32> to vector<8x6xf32>
    %721 = vector.extract_strided_slice %719 {offsets = [0, 6], sizes = [8, 6], strides = [1, 1]} : vector<8x24xf32> to vector<8x6xf32>
    %722 = vector.extract_strided_slice %719 {offsets = [0, 12], sizes = [8, 6], strides = [1, 1]} : vector<8x24xf32> to vector<8x6xf32>
    %cst_207 = arith.constant 2.000000e+00 : f32
    %723 = vector.broadcast %cst_207 : f32 to vector<8x6xf32>
    %724 = arith.mulf %723, %722 : vector<8x6xf32>
    %cst_208 = arith.constant 1.000000e+00 : f32
    %725 = vector.broadcast %cst_208 : f32 to vector<8x6xf32>
    %726 = arith.subf %724, %725 : vector<8x6xf32>
    %727 = vector.extract_strided_slice %719 {offsets = [0, 18], sizes = [8, 6], strides = [1, 1]} : vector<8x24xf32> to vector<8x6xf32>
    %728 = arith.mulf %721, %682 : vector<8x6xf32>
    %729 = arith.mulf %720, %726 : vector<8x6xf32>
    %730 = arith.addf %728, %729 : vector<8x6xf32>
    %731 = math.tanh %730 : vector<8x6xf32>
    %732 = arith.mulf %727, %731 : vector<8x6xf32>
    %c144 = arith.constant 144 : index
    %c0_209 = arith.constant 0 : index
    %733 = vector.load %arg1[%c144, %c0_209] : memref<192x128xf32, #tpu.memory_space<vmem>>, vector<6x6xf32>
    %cst_210 = arith.constant dense<0.000000e+00> : vector<8x6xf32>
    %734 = tpu.matmul %732, %733, %cst_210 {dimension_numbers = #tpu.dot_dimension_numbers<[1], [0], [0], [1], [0, 0, 1, 1], [], []>} : vector<8x6xf32>, vector<6x6xf32>, vector<8x6xf32> -> vector<8x6xf32>
    %735 = arith.addf %687, %734 : vector<8x6xf32>
    %cst_211 = arith.constant dense<0.000000e+00> : vector<8x24xf32>
    %736 = tpu.matmul %732, %5, %cst_211 {dimension_numbers = #tpu.dot_dimension_numbers<[1], [0], [0], [1], [0, 0, 1, 1], [], []>} : vector<8x6xf32>, vector<6x24xf32>, vector<8x24xf32> -> vector<8x24xf32>
    %737 = vector.broadcast %2 : vector<1x24xf32> to vector<8x24xf32>
    %738 = arith.addf %736, %737 : vector<8x24xf32>
    %c15 = arith.constant 15 : index
    %c0_212 = arith.constant 0 : index
    %c0_213 = arith.constant 0 : index
    %739 = vector.load %arg3[%c15, %c0_212, %c0_213] : memref<20x8x24xf32, #tpu.memory_space<vmem>>, vector<1x8x24xf32>
    %740 = vector.shape_cast %739 : vector<1x8x24xf32> to vector<8x24xf32>
    %cst_214 = arith.constant dense<0.000000e+00> : vector<8x24xf32>
    %741 = tpu.matmul %712, %3, %cst_214 {dimension_numbers = #tpu.dot_dimension_numbers<[1], [0], [0], [1], [0, 0, 1, 1], [], []>} : vector<8x6xf32>, vector<6x24xf32>, vector<8x24xf32> -> vector<8x24xf32>
    %742 = arith.addf %740, %741 : vector<8x24xf32>
    %743 = arith.negf %742 : vector<8x24xf32>
    %744 = math.exp %743 : vector<8x24xf32>
    %cst_215 = arith.constant 1.000000e+00 : f32
    %745 = vector.broadcast %cst_215 : f32 to vector<8x24xf32>
    %746 = arith.addf %745, %744 : vector<8x24xf32>
    %747 = arith.divf %745, %746 : vector<8x24xf32>
    %748 = vector.extract_strided_slice %747 {offsets = [0, 0], sizes = [8, 6], strides = [1, 1]} : vector<8x24xf32> to vector<8x6xf32>
    %749 = vector.extract_strided_slice %747 {offsets = [0, 6], sizes = [8, 6], strides = [1, 1]} : vector<8x24xf32> to vector<8x6xf32>
    %750 = vector.extract_strided_slice %747 {offsets = [0, 12], sizes = [8, 6], strides = [1, 1]} : vector<8x24xf32> to vector<8x6xf32>
    %cst_216 = arith.constant 2.000000e+00 : f32
    %751 = vector.broadcast %cst_216 : f32 to vector<8x6xf32>
    %752 = arith.mulf %751, %750 : vector<8x6xf32>
    %cst_217 = arith.constant 1.000000e+00 : f32
    %753 = vector.broadcast %cst_217 : f32 to vector<8x6xf32>
    %754 = arith.subf %752, %753 : vector<8x6xf32>
    %755 = vector.extract_strided_slice %747 {offsets = [0, 18], sizes = [8, 6], strides = [1, 1]} : vector<8x24xf32> to vector<8x6xf32>
    %756 = arith.mulf %749, %710 : vector<8x6xf32>
    %757 = arith.mulf %748, %754 : vector<8x6xf32>
    %758 = arith.addf %756, %757 : vector<8x6xf32>
    %759 = math.tanh %758 : vector<8x6xf32>
    %760 = arith.mulf %755, %759 : vector<8x6xf32>
    %cst_218 = arith.constant dense<0.000000e+00> : vector<8x24xf32>
    %761 = tpu.matmul %760, %4, %cst_218 {dimension_numbers = #tpu.dot_dimension_numbers<[1], [0], [0], [1], [0, 0, 1, 1], [], []>} : vector<8x6xf32>, vector<6x24xf32>, vector<8x24xf32> -> vector<8x24xf32>
    %762 = arith.addf %761, %738 : vector<8x24xf32>
    %763 = arith.negf %762 : vector<8x24xf32>
    %764 = math.exp %763 : vector<8x24xf32>
    %cst_219 = arith.constant 1.000000e+00 : f32
    %765 = vector.broadcast %cst_219 : f32 to vector<8x24xf32>
    %766 = arith.addf %765, %764 : vector<8x24xf32>
    %767 = arith.divf %765, %766 : vector<8x24xf32>
    %768 = vector.extract_strided_slice %767 {offsets = [0, 0], sizes = [8, 6], strides = [1, 1]} : vector<8x24xf32> to vector<8x6xf32>
    %769 = vector.extract_strided_slice %767 {offsets = [0, 6], sizes = [8, 6], strides = [1, 1]} : vector<8x24xf32> to vector<8x6xf32>
    %770 = vector.extract_strided_slice %767 {offsets = [0, 12], sizes = [8, 6], strides = [1, 1]} : vector<8x24xf32> to vector<8x6xf32>
    %cst_220 = arith.constant 2.000000e+00 : f32
    %771 = vector.broadcast %cst_220 : f32 to vector<8x6xf32>
    %772 = arith.mulf %771, %770 : vector<8x6xf32>
    %cst_221 = arith.constant 1.000000e+00 : f32
    %773 = vector.broadcast %cst_221 : f32 to vector<8x6xf32>
    %774 = arith.subf %772, %773 : vector<8x6xf32>
    %775 = vector.extract_strided_slice %767 {offsets = [0, 18], sizes = [8, 6], strides = [1, 1]} : vector<8x24xf32> to vector<8x6xf32>
    %776 = arith.mulf %769, %730 : vector<8x6xf32>
    %777 = arith.mulf %768, %774 : vector<8x6xf32>
    %778 = arith.addf %776, %777 : vector<8x6xf32>
    %779 = math.tanh %778 : vector<8x6xf32>
    %780 = arith.mulf %775, %779 : vector<8x6xf32>
    %c152 = arith.constant 152 : index
    %c0_222 = arith.constant 0 : index
    %781 = vector.load %arg1[%c152, %c0_222] : memref<192x128xf32, #tpu.memory_space<vmem>>, vector<6x6xf32>
    %cst_223 = arith.constant dense<0.000000e+00> : vector<8x6xf32>
    %782 = tpu.matmul %780, %781, %cst_223 {dimension_numbers = #tpu.dot_dimension_numbers<[1], [0], [0], [1], [0, 0, 1, 1], [], []>} : vector<8x6xf32>, vector<6x6xf32>, vector<8x6xf32> -> vector<8x6xf32>
    %783 = arith.addf %735, %782 : vector<8x6xf32>
    %cst_224 = arith.constant dense<0.000000e+00> : vector<8x24xf32>
    %784 = tpu.matmul %780, %5, %cst_224 {dimension_numbers = #tpu.dot_dimension_numbers<[1], [0], [0], [1], [0, 0, 1, 1], [], []>} : vector<8x6xf32>, vector<6x24xf32>, vector<8x24xf32> -> vector<8x24xf32>
    %785 = vector.broadcast %2 : vector<1x24xf32> to vector<8x24xf32>
    %786 = arith.addf %784, %785 : vector<8x24xf32>
    %c16_225 = arith.constant 16 : index
    %c0_226 = arith.constant 0 : index
    %c0_227 = arith.constant 0 : index
    %787 = vector.load %arg3[%c16_225, %c0_226, %c0_227] : memref<20x8x24xf32, #tpu.memory_space<vmem>>, vector<1x8x24xf32>
    %788 = vector.shape_cast %787 : vector<1x8x24xf32> to vector<8x24xf32>
    %cst_228 = arith.constant dense<0.000000e+00> : vector<8x24xf32>
    %789 = tpu.matmul %760, %3, %cst_228 {dimension_numbers = #tpu.dot_dimension_numbers<[1], [0], [0], [1], [0, 0, 1, 1], [], []>} : vector<8x6xf32>, vector<6x24xf32>, vector<8x24xf32> -> vector<8x24xf32>
    %790 = arith.addf %788, %789 : vector<8x24xf32>
    %791 = arith.negf %790 : vector<8x24xf32>
    %792 = math.exp %791 : vector<8x24xf32>
    %cst_229 = arith.constant 1.000000e+00 : f32
    %793 = vector.broadcast %cst_229 : f32 to vector<8x24xf32>
    %794 = arith.addf %793, %792 : vector<8x24xf32>
    %795 = arith.divf %793, %794 : vector<8x24xf32>
    %796 = vector.extract_strided_slice %795 {offsets = [0, 0], sizes = [8, 6], strides = [1, 1]} : vector<8x24xf32> to vector<8x6xf32>
    %797 = vector.extract_strided_slice %795 {offsets = [0, 6], sizes = [8, 6], strides = [1, 1]} : vector<8x24xf32> to vector<8x6xf32>
    %798 = vector.extract_strided_slice %795 {offsets = [0, 12], sizes = [8, 6], strides = [1, 1]} : vector<8x24xf32> to vector<8x6xf32>
    %cst_230 = arith.constant 2.000000e+00 : f32
    %799 = vector.broadcast %cst_230 : f32 to vector<8x6xf32>
    %800 = arith.mulf %799, %798 : vector<8x6xf32>
    %cst_231 = arith.constant 1.000000e+00 : f32
    %801 = vector.broadcast %cst_231 : f32 to vector<8x6xf32>
    %802 = arith.subf %800, %801 : vector<8x6xf32>
    %803 = vector.extract_strided_slice %795 {offsets = [0, 18], sizes = [8, 6], strides = [1, 1]} : vector<8x24xf32> to vector<8x6xf32>
    %804 = arith.mulf %797, %758 : vector<8x6xf32>
    %805 = arith.mulf %796, %802 : vector<8x6xf32>
    %806 = arith.addf %804, %805 : vector<8x6xf32>
    %807 = math.tanh %806 : vector<8x6xf32>
    %808 = arith.mulf %803, %807 : vector<8x6xf32>
    %cst_232 = arith.constant dense<0.000000e+00> : vector<8x24xf32>
    %809 = tpu.matmul %808, %4, %cst_232 {dimension_numbers = #tpu.dot_dimension_numbers<[1], [0], [0], [1], [0, 0, 1, 1], [], []>} : vector<8x6xf32>, vector<6x24xf32>, vector<8x24xf32> -> vector<8x24xf32>
    %810 = arith.addf %809, %786 : vector<8x24xf32>
    %811 = arith.negf %810 : vector<8x24xf32>
    %812 = math.exp %811 : vector<8x24xf32>
    %cst_233 = arith.constant 1.000000e+00 : f32
    %813 = vector.broadcast %cst_233 : f32 to vector<8x24xf32>
    %814 = arith.addf %813, %812 : vector<8x24xf32>
    %815 = arith.divf %813, %814 : vector<8x24xf32>
    %816 = vector.extract_strided_slice %815 {offsets = [0, 0], sizes = [8, 6], strides = [1, 1]} : vector<8x24xf32> to vector<8x6xf32>
    %817 = vector.extract_strided_slice %815 {offsets = [0, 6], sizes = [8, 6], strides = [1, 1]} : vector<8x24xf32> to vector<8x6xf32>
    %818 = vector.extract_strided_slice %815 {offsets = [0, 12], sizes = [8, 6], strides = [1, 1]} : vector<8x24xf32> to vector<8x6xf32>
    %cst_234 = arith.constant 2.000000e+00 : f32
    %819 = vector.broadcast %cst_234 : f32 to vector<8x6xf32>
    %820 = arith.mulf %819, %818 : vector<8x6xf32>
    %cst_235 = arith.constant 1.000000e+00 : f32
    %821 = vector.broadcast %cst_235 : f32 to vector<8x6xf32>
    %822 = arith.subf %820, %821 : vector<8x6xf32>
    %823 = vector.extract_strided_slice %815 {offsets = [0, 18], sizes = [8, 6], strides = [1, 1]} : vector<8x24xf32> to vector<8x6xf32>
    %824 = arith.mulf %817, %778 : vector<8x6xf32>
    %825 = arith.mulf %816, %822 : vector<8x6xf32>
    %826 = arith.addf %824, %825 : vector<8x6xf32>
    %827 = math.tanh %826 : vector<8x6xf32>
    %828 = arith.mulf %823, %827 : vector<8x6xf32>
    %c160 = arith.constant 160 : index
    %c0_236 = arith.constant 0 : index
    %829 = vector.load %arg1[%c160, %c0_236] : memref<192x128xf32, #tpu.memory_space<vmem>>, vector<6x6xf32>
    %cst_237 = arith.constant dense<0.000000e+00> : vector<8x6xf32>
    %830 = tpu.matmul %828, %829, %cst_237 {dimension_numbers = #tpu.dot_dimension_numbers<[1], [0], [0], [1], [0, 0, 1, 1], [], []>} : vector<8x6xf32>, vector<6x6xf32>, vector<8x6xf32> -> vector<8x6xf32>
    %831 = arith.addf %783, %830 : vector<8x6xf32>
    %cst_238 = arith.constant dense<0.000000e+00> : vector<8x24xf32>
    %832 = tpu.matmul %828, %5, %cst_238 {dimension_numbers = #tpu.dot_dimension_numbers<[1], [0], [0], [1], [0, 0, 1, 1], [], []>} : vector<8x6xf32>, vector<6x24xf32>, vector<8x24xf32> -> vector<8x24xf32>
    %833 = vector.broadcast %2 : vector<1x24xf32> to vector<8x24xf32>
    %834 = arith.addf %832, %833 : vector<8x24xf32>
    %c17 = arith.constant 17 : index
    %c0_239 = arith.constant 0 : index
    %c0_240 = arith.constant 0 : index
    %835 = vector.load %arg3[%c17, %c0_239, %c0_240] : memref<20x8x24xf32, #tpu.memory_space<vmem>>, vector<1x8x24xf32>
    %836 = vector.shape_cast %835 : vector<1x8x24xf32> to vector<8x24xf32>
    %cst_241 = arith.constant dense<0.000000e+00> : vector<8x24xf32>
    %837 = tpu.matmul %808, %3, %cst_241 {dimension_numbers = #tpu.dot_dimension_numbers<[1], [0], [0], [1], [0, 0, 1, 1], [], []>} : vector<8x6xf32>, vector<6x24xf32>, vector<8x24xf32> -> vector<8x24xf32>
    %838 = arith.addf %836, %837 : vector<8x24xf32>
    %839 = arith.negf %838 : vector<8x24xf32>
    %840 = math.exp %839 : vector<8x24xf32>
    %cst_242 = arith.constant 1.000000e+00 : f32
    %841 = vector.broadcast %cst_242 : f32 to vector<8x24xf32>
    %842 = arith.addf %841, %840 : vector<8x24xf32>
    %843 = arith.divf %841, %842 : vector<8x24xf32>
    %844 = vector.extract_strided_slice %843 {offsets = [0, 0], sizes = [8, 6], strides = [1, 1]} : vector<8x24xf32> to vector<8x6xf32>
    %845 = vector.extract_strided_slice %843 {offsets = [0, 6], sizes = [8, 6], strides = [1, 1]} : vector<8x24xf32> to vector<8x6xf32>
    %846 = vector.extract_strided_slice %843 {offsets = [0, 12], sizes = [8, 6], strides = [1, 1]} : vector<8x24xf32> to vector<8x6xf32>
    %cst_243 = arith.constant 2.000000e+00 : f32
    %847 = vector.broadcast %cst_243 : f32 to vector<8x6xf32>
    %848 = arith.mulf %847, %846 : vector<8x6xf32>
    %cst_244 = arith.constant 1.000000e+00 : f32
    %849 = vector.broadcast %cst_244 : f32 to vector<8x6xf32>
    %850 = arith.subf %848, %849 : vector<8x6xf32>
    %851 = vector.extract_strided_slice %843 {offsets = [0, 18], sizes = [8, 6], strides = [1, 1]} : vector<8x24xf32> to vector<8x6xf32>
    %852 = arith.mulf %845, %806 : vector<8x6xf32>
    %853 = arith.mulf %844, %850 : vector<8x6xf32>
    %854 = arith.addf %852, %853 : vector<8x6xf32>
    %855 = math.tanh %854 : vector<8x6xf32>
    %856 = arith.mulf %851, %855 : vector<8x6xf32>
    %cst_245 = arith.constant dense<0.000000e+00> : vector<8x24xf32>
    %857 = tpu.matmul %856, %4, %cst_245 {dimension_numbers = #tpu.dot_dimension_numbers<[1], [0], [0], [1], [0, 0, 1, 1], [], []>} : vector<8x6xf32>, vector<6x24xf32>, vector<8x24xf32> -> vector<8x24xf32>
    %858 = arith.addf %857, %834 : vector<8x24xf32>
    %859 = arith.negf %858 : vector<8x24xf32>
    %860 = math.exp %859 : vector<8x24xf32>
    %cst_246 = arith.constant 1.000000e+00 : f32
    %861 = vector.broadcast %cst_246 : f32 to vector<8x24xf32>
    %862 = arith.addf %861, %860 : vector<8x24xf32>
    %863 = arith.divf %861, %862 : vector<8x24xf32>
    %864 = vector.extract_strided_slice %863 {offsets = [0, 0], sizes = [8, 6], strides = [1, 1]} : vector<8x24xf32> to vector<8x6xf32>
    %865 = vector.extract_strided_slice %863 {offsets = [0, 6], sizes = [8, 6], strides = [1, 1]} : vector<8x24xf32> to vector<8x6xf32>
    %866 = vector.extract_strided_slice %863 {offsets = [0, 12], sizes = [8, 6], strides = [1, 1]} : vector<8x24xf32> to vector<8x6xf32>
    %cst_247 = arith.constant 2.000000e+00 : f32
    %867 = vector.broadcast %cst_247 : f32 to vector<8x6xf32>
    %868 = arith.mulf %867, %866 : vector<8x6xf32>
    %cst_248 = arith.constant 1.000000e+00 : f32
    %869 = vector.broadcast %cst_248 : f32 to vector<8x6xf32>
    %870 = arith.subf %868, %869 : vector<8x6xf32>
    %871 = vector.extract_strided_slice %863 {offsets = [0, 18], sizes = [8, 6], strides = [1, 1]} : vector<8x24xf32> to vector<8x6xf32>
    %872 = arith.mulf %865, %826 : vector<8x6xf32>
    %873 = arith.mulf %864, %870 : vector<8x6xf32>
    %874 = arith.addf %872, %873 : vector<8x6xf32>
    %875 = math.tanh %874 : vector<8x6xf32>
    %876 = arith.mulf %871, %875 : vector<8x6xf32>
    %c168 = arith.constant 168 : index
    %c0_249 = arith.constant 0 : index
    %877 = vector.load %arg1[%c168, %c0_249] : memref<192x128xf32, #tpu.memory_space<vmem>>, vector<6x6xf32>
    %cst_250 = arith.constant dense<0.000000e+00> : vector<8x6xf32>
    %878 = tpu.matmul %876, %877, %cst_250 {dimension_numbers = #tpu.dot_dimension_numbers<[1], [0], [0], [1], [0, 0, 1, 1], [], []>} : vector<8x6xf32>, vector<6x6xf32>, vector<8x6xf32> -> vector<8x6xf32>
    %879 = arith.addf %831, %878 : vector<8x6xf32>
    %cst_251 = arith.constant dense<0.000000e+00> : vector<8x24xf32>
    %880 = tpu.matmul %876, %5, %cst_251 {dimension_numbers = #tpu.dot_dimension_numbers<[1], [0], [0], [1], [0, 0, 1, 1], [], []>} : vector<8x6xf32>, vector<6x24xf32>, vector<8x24xf32> -> vector<8x24xf32>
    %881 = vector.broadcast %2 : vector<1x24xf32> to vector<8x24xf32>
    %882 = arith.addf %880, %881 : vector<8x24xf32>
    %c18 = arith.constant 18 : index
    %c0_252 = arith.constant 0 : index
    %c0_253 = arith.constant 0 : index
    %883 = vector.load %arg3[%c18, %c0_252, %c0_253] : memref<20x8x24xf32, #tpu.memory_space<vmem>>, vector<1x8x24xf32>
    %884 = vector.shape_cast %883 : vector<1x8x24xf32> to vector<8x24xf32>
    %cst_254 = arith.constant dense<0.000000e+00> : vector<8x24xf32>
    %885 = tpu.matmul %856, %3, %cst_254 {dimension_numbers = #tpu.dot_dimension_numbers<[1], [0], [0], [1], [0, 0, 1, 1], [], []>} : vector<8x6xf32>, vector<6x24xf32>, vector<8x24xf32> -> vector<8x24xf32>
    %886 = arith.addf %884, %885 : vector<8x24xf32>
    %887 = arith.negf %886 : vector<8x24xf32>
    %888 = math.exp %887 : vector<8x24xf32>
    %cst_255 = arith.constant 1.000000e+00 : f32
    %889 = vector.broadcast %cst_255 : f32 to vector<8x24xf32>
    %890 = arith.addf %889, %888 : vector<8x24xf32>
    %891 = arith.divf %889, %890 : vector<8x24xf32>
    %892 = vector.extract_strided_slice %891 {offsets = [0, 0], sizes = [8, 6], strides = [1, 1]} : vector<8x24xf32> to vector<8x6xf32>
    %893 = vector.extract_strided_slice %891 {offsets = [0, 6], sizes = [8, 6], strides = [1, 1]} : vector<8x24xf32> to vector<8x6xf32>
    %894 = vector.extract_strided_slice %891 {offsets = [0, 12], sizes = [8, 6], strides = [1, 1]} : vector<8x24xf32> to vector<8x6xf32>
    %cst_256 = arith.constant 2.000000e+00 : f32
    %895 = vector.broadcast %cst_256 : f32 to vector<8x6xf32>
    %896 = arith.mulf %895, %894 : vector<8x6xf32>
    %cst_257 = arith.constant 1.000000e+00 : f32
    %897 = vector.broadcast %cst_257 : f32 to vector<8x6xf32>
    %898 = arith.subf %896, %897 : vector<8x6xf32>
    %899 = vector.extract_strided_slice %891 {offsets = [0, 18], sizes = [8, 6], strides = [1, 1]} : vector<8x24xf32> to vector<8x6xf32>
    %900 = arith.mulf %893, %854 : vector<8x6xf32>
    %901 = arith.mulf %892, %898 : vector<8x6xf32>
    %902 = arith.addf %900, %901 : vector<8x6xf32>
    %903 = math.tanh %902 : vector<8x6xf32>
    %904 = arith.mulf %899, %903 : vector<8x6xf32>
    %cst_258 = arith.constant dense<0.000000e+00> : vector<8x24xf32>
    %905 = tpu.matmul %904, %4, %cst_258 {dimension_numbers = #tpu.dot_dimension_numbers<[1], [0], [0], [1], [0, 0, 1, 1], [], []>} : vector<8x6xf32>, vector<6x24xf32>, vector<8x24xf32> -> vector<8x24xf32>
    %906 = arith.addf %905, %882 : vector<8x24xf32>
    %907 = arith.negf %906 : vector<8x24xf32>
    %908 = math.exp %907 : vector<8x24xf32>
    %cst_259 = arith.constant 1.000000e+00 : f32
    %909 = vector.broadcast %cst_259 : f32 to vector<8x24xf32>
    %910 = arith.addf %909, %908 : vector<8x24xf32>
    %911 = arith.divf %909, %910 : vector<8x24xf32>
    %912 = vector.extract_strided_slice %911 {offsets = [0, 0], sizes = [8, 6], strides = [1, 1]} : vector<8x24xf32> to vector<8x6xf32>
    %913 = vector.extract_strided_slice %911 {offsets = [0, 6], sizes = [8, 6], strides = [1, 1]} : vector<8x24xf32> to vector<8x6xf32>
    %914 = vector.extract_strided_slice %911 {offsets = [0, 12], sizes = [8, 6], strides = [1, 1]} : vector<8x24xf32> to vector<8x6xf32>
    %cst_260 = arith.constant 2.000000e+00 : f32
    %915 = vector.broadcast %cst_260 : f32 to vector<8x6xf32>
    %916 = arith.mulf %915, %914 : vector<8x6xf32>
    %cst_261 = arith.constant 1.000000e+00 : f32
    %917 = vector.broadcast %cst_261 : f32 to vector<8x6xf32>
    %918 = arith.subf %916, %917 : vector<8x6xf32>
    %919 = vector.extract_strided_slice %911 {offsets = [0, 18], sizes = [8, 6], strides = [1, 1]} : vector<8x24xf32> to vector<8x6xf32>
    %920 = arith.mulf %913, %874 : vector<8x6xf32>
    %921 = arith.mulf %912, %918 : vector<8x6xf32>
    %922 = arith.addf %920, %921 : vector<8x6xf32>
    %923 = math.tanh %922 : vector<8x6xf32>
    %924 = arith.mulf %919, %923 : vector<8x6xf32>
    %c176 = arith.constant 176 : index
    %c0_262 = arith.constant 0 : index
    %925 = vector.load %arg1[%c176, %c0_262] : memref<192x128xf32, #tpu.memory_space<vmem>>, vector<6x6xf32>
    %cst_263 = arith.constant dense<0.000000e+00> : vector<8x6xf32>
    %926 = tpu.matmul %924, %925, %cst_263 {dimension_numbers = #tpu.dot_dimension_numbers<[1], [0], [0], [1], [0, 0, 1, 1], [], []>} : vector<8x6xf32>, vector<6x6xf32>, vector<8x6xf32> -> vector<8x6xf32>
    %927 = arith.addf %879, %926 : vector<8x6xf32>
    %cst_264 = arith.constant dense<0.000000e+00> : vector<8x24xf32>
    %928 = tpu.matmul %924, %5, %cst_264 {dimension_numbers = #tpu.dot_dimension_numbers<[1], [0], [0], [1], [0, 0, 1, 1], [], []>} : vector<8x6xf32>, vector<6x24xf32>, vector<8x24xf32> -> vector<8x24xf32>
    %929 = vector.broadcast %2 : vector<1x24xf32> to vector<8x24xf32>
    %930 = arith.addf %928, %929 : vector<8x24xf32>
    %c19 = arith.constant 19 : index
    %c0_265 = arith.constant 0 : index
    %c0_266 = arith.constant 0 : index
    %931 = vector.load %arg3[%c19, %c0_265, %c0_266] : memref<20x8x24xf32, #tpu.memory_space<vmem>>, vector<1x8x24xf32>
    %932 = vector.shape_cast %931 : vector<1x8x24xf32> to vector<8x24xf32>
    %cst_267 = arith.constant dense<0.000000e+00> : vector<8x24xf32>
    %933 = tpu.matmul %904, %3, %cst_267 {dimension_numbers = #tpu.dot_dimension_numbers<[1], [0], [0], [1], [0, 0, 1, 1], [], []>} : vector<8x6xf32>, vector<6x24xf32>, vector<8x24xf32> -> vector<8x24xf32>
    %934 = arith.addf %932, %933 : vector<8x24xf32>
    %935 = arith.negf %934 : vector<8x24xf32>
    %936 = math.exp %935 : vector<8x24xf32>
    %cst_268 = arith.constant 1.000000e+00 : f32
    %937 = vector.broadcast %cst_268 : f32 to vector<8x24xf32>
    %938 = arith.addf %937, %936 : vector<8x24xf32>
    %939 = arith.divf %937, %938 : vector<8x24xf32>
    %940 = vector.extract_strided_slice %939 {offsets = [0, 0], sizes = [8, 6], strides = [1, 1]} : vector<8x24xf32> to vector<8x6xf32>
    %941 = vector.extract_strided_slice %939 {offsets = [0, 6], sizes = [8, 6], strides = [1, 1]} : vector<8x24xf32> to vector<8x6xf32>
    %942 = vector.extract_strided_slice %939 {offsets = [0, 12], sizes = [8, 6], strides = [1, 1]} : vector<8x24xf32> to vector<8x6xf32>
    %cst_269 = arith.constant 2.000000e+00 : f32
    %943 = vector.broadcast %cst_269 : f32 to vector<8x6xf32>
    %944 = arith.mulf %943, %942 : vector<8x6xf32>
    %cst_270 = arith.constant 1.000000e+00 : f32
    %945 = vector.broadcast %cst_270 : f32 to vector<8x6xf32>
    %946 = arith.subf %944, %945 : vector<8x6xf32>
    %947 = vector.extract_strided_slice %939 {offsets = [0, 18], sizes = [8, 6], strides = [1, 1]} : vector<8x24xf32> to vector<8x6xf32>
    %948 = arith.mulf %941, %902 : vector<8x6xf32>
    %949 = arith.mulf %940, %946 : vector<8x6xf32>
    %950 = arith.addf %948, %949 : vector<8x6xf32>
    %951 = math.tanh %950 : vector<8x6xf32>
    %952 = arith.mulf %947, %951 : vector<8x6xf32>
    %cst_271 = arith.constant dense<0.000000e+00> : vector<8x24xf32>
    %953 = tpu.matmul %952, %4, %cst_271 {dimension_numbers = #tpu.dot_dimension_numbers<[1], [0], [0], [1], [0, 0, 1, 1], [], []>} : vector<8x6xf32>, vector<6x24xf32>, vector<8x24xf32> -> vector<8x24xf32>
    %954 = arith.addf %953, %930 : vector<8x24xf32>
    %955 = arith.negf %954 : vector<8x24xf32>
    %956 = math.exp %955 : vector<8x24xf32>
    %cst_272 = arith.constant 1.000000e+00 : f32
    %957 = vector.broadcast %cst_272 : f32 to vector<8x24xf32>
    %958 = arith.addf %957, %956 : vector<8x24xf32>
    %959 = arith.divf %957, %958 : vector<8x24xf32>
    %960 = vector.extract_strided_slice %959 {offsets = [0, 0], sizes = [8, 6], strides = [1, 1]} : vector<8x24xf32> to vector<8x6xf32>
    %961 = vector.extract_strided_slice %959 {offsets = [0, 6], sizes = [8, 6], strides = [1, 1]} : vector<8x24xf32> to vector<8x6xf32>
    %962 = vector.extract_strided_slice %959 {offsets = [0, 12], sizes = [8, 6], strides = [1, 1]} : vector<8x24xf32> to vector<8x6xf32>
    %cst_273 = arith.constant 2.000000e+00 : f32
    %963 = vector.broadcast %cst_273 : f32 to vector<8x6xf32>
    %964 = arith.mulf %963, %962 : vector<8x6xf32>
    %cst_274 = arith.constant 1.000000e+00 : f32
    %965 = vector.broadcast %cst_274 : f32 to vector<8x6xf32>
    %966 = arith.subf %964, %965 : vector<8x6xf32>
    %967 = vector.extract_strided_slice %959 {offsets = [0, 18], sizes = [8, 6], strides = [1, 1]} : vector<8x24xf32> to vector<8x6xf32>
    %968 = arith.mulf %961, %922 : vector<8x6xf32>
    %969 = arith.mulf %960, %966 : vector<8x6xf32>
    %970 = arith.addf %968, %969 : vector<8x6xf32>
    %971 = math.tanh %970 : vector<8x6xf32>
    %972 = arith.mulf %967, %971 : vector<8x6xf32>
    %c184 = arith.constant 184 : index
    %c0_275 = arith.constant 0 : index
    %973 = vector.load %arg1[%c184, %c0_275] : memref<192x128xf32, #tpu.memory_space<vmem>>, vector<6x6xf32>
    %cst_276 = arith.constant dense<0.000000e+00> : vector<8x6xf32>
    %974 = tpu.matmul %972, %973, %cst_276 {dimension_numbers = #tpu.dot_dimension_numbers<[1], [0], [0], [1], [0, 0, 1, 1], [], []>} : vector<8x6xf32>, vector<6x6xf32>, vector<8x6xf32> -> vector<8x6xf32>
    %975 = arith.addf %927, %974 : vector<8x6xf32>
    %c3_277 = arith.constant 3 : index
    %c0_278 = arith.constant 0 : index
    %976 = vector.load %arg1[%c3_277, %c0_278] : memref<192x128xf32, #tpu.memory_space<vmem>>, vector<1x6xf32>
    %c4_279 = arith.constant 4 : index
    %c0_280 = arith.constant 0 : index
    %977 = vector.load %arg1[%c4_279, %c0_280] : memref<192x128xf32, #tpu.memory_space<vmem>>, vector<1x6xf32>
    %c5_281 = arith.constant 5 : index
    %c0_282 = arith.constant 0 : index
    %978 = vector.load %arg1[%c5_281, %c0_282] : memref<192x128xf32, #tpu.memory_space<vmem>>, vector<1x6xf32>
    %c7_283 = arith.constant 7 : index
    %c0_284 = arith.constant 0 : index
    %979 = vector.load %arg1[%c7_283, %c0_284] : memref<192x128xf32, #tpu.memory_space<vmem>>, vector<1x6xf32>
    %c6_285 = arith.constant 6 : index
    %c0_286 = arith.constant 0 : index
    %980 = vector.load %arg1[%c6_285, %c0_286] : memref<192x128xf32, #tpu.memory_space<vmem>>, vector<1x1xf32>
    %981 = vector.broadcast %976 : vector<1x6xf32> to vector<8x6xf32>
    %982 = arith.addf %975, %981 : vector<8x6xf32>
    %cst_287 = arith.constant dense<0.000000e+00> : vector<6xf32>
    %983 = vector.multi_reduction <add>, %982, %cst_287 [0] : vector<8x6xf32> to vector<6xf32>
    %984 = vector.shape_cast %983 : vector<6xf32> to vector<1x6xf32>
    %cst_288 = arith.constant 8.000000e+00 : f32
    %985 = vector.broadcast %cst_288 : f32 to vector<1x6xf32>
    %986 = arith.divf %984, %985 : vector<1x6xf32>
    %987 = vector.broadcast %986 : vector<1x6xf32> to vector<8x6xf32>
    %988 = arith.subf %982, %987 : vector<8x6xf32>
    %989 = arith.mulf %988, %988 : vector<8x6xf32>
    %cst_289 = arith.constant dense<0.000000e+00> : vector<6xf32>
    %990 = vector.multi_reduction <add>, %989, %cst_289 [0] : vector<8x6xf32> to vector<6xf32>
    %991 = vector.shape_cast %990 : vector<6xf32> to vector<1x6xf32>
    %cst_290 = arith.constant 8.000000e+00 : f32
    %992 = vector.broadcast %cst_290 : f32 to vector<1x6xf32>
    %993 = arith.divf %991, %992 : vector<1x6xf32>
    %994 = vector.broadcast %986 : vector<1x6xf32> to vector<8x6xf32>
    %995 = arith.subf %982, %994 : vector<8x6xf32>
    %cst_291 = arith.constant 9.99999974E-6 : f32
    %996 = vector.broadcast %cst_291 : f32 to vector<1x6xf32>
    %997 = arith.addf %993, %996 : vector<1x6xf32>
    %998 = math.rsqrt %997 : vector<1x6xf32>
    %999 = vector.broadcast %998 : vector<1x6xf32> to vector<8x6xf32>
    %1000 = arith.mulf %995, %999 : vector<8x6xf32>
    %1001 = vector.broadcast %977 : vector<1x6xf32> to vector<8x6xf32>
    %1002 = arith.mulf %1000, %1001 : vector<8x6xf32>
    %1003 = vector.broadcast %978 : vector<1x6xf32> to vector<8x6xf32>
    %1004 = arith.addf %1002, %1003 : vector<8x6xf32>
    %cst_292 = arith.constant 0.000000e+00 : f32
    %1005 = vector.broadcast %cst_292 : f32 to vector<8x6xf32>
    %1006 = arith.maximumf %1004, %1005 : vector<8x6xf32>
    %1007 = vector.broadcast %979 : vector<1x6xf32> to vector<8x6xf32>
    %1008 = arith.mulf %1006, %1007 : vector<8x6xf32>
    %cst_293 = arith.constant dense<0.000000e+00> : vector<8xf32>
    %1009 = vector.multi_reduction <add>, %1008, %cst_293 [1] : vector<8x6xf32> to vector<8xf32>
    %1010 = vector.shape_cast %1009 : vector<8xf32> to vector<8x1xf32>
    %1011 = vector.broadcast %980 : vector<1x1xf32> to vector<8x1xf32>
    %1012 = arith.addf %1010, %1011 : vector<8x1xf32>
    %c0_294 = arith.constant 0 : index
    %c0_295 = arith.constant 0 : index
    %1013 = vector.load %arg2[%c0_294, %c0_295] : memref<8x1xf32, #tpu.memory_space<vmem>>, vector<8x1xf32>
    tpu.vector_store %arg2[%c0_294, %c0_295], %1012 {strides = array<i32>} : memref<8x1xf32, #tpu.memory_space<vmem>>, vector<8x1xf32>,
    return
  }
}

</mosaic_0001>

<llo_original>
// kernel: tpu_custom_call.1
$region0: #{tpu_custom_call.1}
  #allocation0 [shape = 'u32[]', space=smem, size = 0x4, offset = 0x4, fixed_abs, tag = 'smem constant byte address 0x4 - core index']
  #allocation1 [shape = 'u32[72,128]{1,0:T(1,128)}', space=vmem, size = 0x9000, scoped, tag = 'internal scratch']
  #allocation2 [shape = 'f32[20,8,24]{2,1,0:T(8,128)}', space=vmem, size = 0x14000, scoped, tag = 'scratch operand']
  %s0 = inlined_call_operand.vmem [shape: f32[20,8,1], index: 0, kind: input, shape index: {}]
  %s1 = inlined_call_operand.hbm [shape: f32[192,128], index: 1, kind: input, shape index: {}]
  %s2 = inlined_call_operand.vmem [shape: f32[8,1], index: 2, kind: output, shape index: {}]
  %s3 = sld [smem:[#allocation0]]
  $region22: #{tpu_custom_call.1} parent=0
    _
  %s5 = ssub.s32 1, %s3
  %s6 = scalar_select 0, %s5, %s3
  $region1: #{tpu_custom_call.1} parent=0
    #allocation3 [shape = 'u8[98304]{0}', space=vmem, size = 0x18000, scoped, tag = 'input window, operand 1, single buffered']
    #allocation4 [shape = 's32[1]{0}', space=sflag, size = 0x4, scoped, tag = 'scoped memory for tpu_custom_call.1']
    %7 = vsyncpa [#allocation4], 0
    // Predicated region
    $region2: #{tpu_custom_call.1} parent=1 // pred_check
      _
    $region3: #{tpu_custom_call.1} parent=1 // pred_check_branch
      %9 = sbr.rel (0) target = $region5
    $region4: #{tpu_custom_call.1} parent=1 // pred_region
      _
    $region5: #{tpu_custom_call.1} parent=1 // pred_fallthru
      _
    // Predicated region
    $region6: #{tpu_custom_call.1} parent=1 // pred_check
      _
    $region7: #{tpu_custom_call.1} parent=1 // pred_check_branch
      %11 = sbr.rel (0) target = $region9
    $region8: #{tpu_custom_call.1} parent=1 // pred_region
      %13 = vsyncadd [#allocation4], 0
      %s14 = sshll.u32 %s1, 4
      %s15 = int_to_ptr.hbm [resolvable:$true] %s14
      %s16 = sshll.u32 [#allocation3], 4
      %s17 = int_to_ptr.vmem [resolvable:$true] %s16
      %22 = dma.hbm_to_vmem [thread:$0]  %s15, 3072, %s17, [#allocation4], 128, 128, 8
    $region9: #{tpu_custom_call.1} parent=1 // pred_fallthru
      _
    // Predicated region
    $region10: #{tpu_custom_call.1} parent=1 // pred_check
      _
    $region11: #{tpu_custom_call.1} parent=1 // pred_check_branch
      %24 = sbr.rel (0) target = $region13
    $region12: #{tpu_custom_call.1} parent=1 // pred_region
      %26 = dma.done [#allocation4], 3072
    $region13: #{tpu_custom_call.1} parent=1 // pred_fallthru
      _
    %v27 = vld [vmem:[#allocation3] sm:$0x1]
    %v28 = vld [vmem:[#allocation3 + $0x1] sm:$0x1]
    %v29 = vld [vmem:[#allocation3 + $0x2] sm:$0x1]
    %v30 = vld [vmem:[#allocation3 + $0x8] sm:$0x3f]
    %v31 = vld [vmem:[#allocation3 + $0x10] sm:$0x3f]
    %v32 = vld [vmem:[#allocation3 + $0x18] sm:$0x3f]
    %v33 = vld [vmem:[%s0] sm:$0xff]
    %v34 = vld [vmem:[%s0 + $0x8] sm:$0xff]
    %v35 = vld [vmem:[%s0 + $0x10] sm:$0xff]
    %v36 = vld [vmem:[%s0 + $0x18] sm:$0xff]
    %v37 = vld [vmem:[%s0 + $0x20] sm:$0xff]
    %v38 = vld [vmem:[%s0 + $0x28] sm:$0xff]
    %v39 = vld [vmem:[%s0 + $0x30] sm:$0xff]
    %v40 = vld [vmem:[%s0 + $0x38] sm:$0xff]
    %v41 = vld [vmem:[%s0 + $0x40] sm:$0xff]
    %v42 = vld [vmem:[%s0 + $0x48] sm:$0xff]
    %v43 = vld [vmem:[%s0 + $0x50] sm:$0xff]
    %v44 = vld [vmem:[%s0 + $0x58] sm:$0xff]
    %v45 = vld [vmem:[%s0 + $0x60] sm:$0xff]
    %v46 = vld [vmem:[%s0 + $0x68] sm:$0xff]
    %v47 = vld [vmem:[%s0 + $0x70] sm:$0xff]
    %v48 = vld [vmem:[%s0 + $0x78] sm:$0xff]
    %v49 = vld [vmem:[%s0 + $0x80] sm:$0xff]
    %v50 = vld [vmem:[%s0 + $0x88] sm:$0xff]
    %v51 = vld [vmem:[%s0 + $0x90] sm:$0xff]
    %v52 = vld [vmem:[%s0 + $0x98] sm:$0xff]
    %54 = vset.pattern.permute.xlu0 0
    %55 = vperm.xlu0 %54, %v33
    %v56 = vpop.permute.xlu0 %55
    %59 = vset.pattern.permute.xlu0 0
    %60 = vperm.xlu0 %59, %v34
    %v61 = vpop.permute.xlu0 %60
    %64 = vset.pattern.permute.xlu0 0
    %65 = vperm.xlu0 %64, %v35
    %v66 = vpop.permute.xlu0 %65
    %69 = vset.pattern.permute.xlu0 0
    %70 = vperm.xlu0 %69, %v36
    %v71 = vpop.permute.xlu0 %70
    %74 = vset.pattern.permute.xlu0 0
    %75 = vperm.xlu0 %74, %v37
    %v76 = vpop.permute.xlu0 %75
    %79 = vset.pattern.permute.xlu0 0
    %80 = vperm.xlu0 %79, %v38
    %v81 = vpop.permute.xlu0 %80
    %84 = vset.pattern.permute.xlu0 0
    %85 = vperm.xlu0 %84, %v39
    %v86 = vpop.permute.xlu0 %85
    %89 = vset.pattern.permute.xlu0 0
    %90 = vperm.xlu0 %89, %v40
    %v91 = vpop.permute.xlu0 %90
    %94 = vset.pattern.permute.xlu0 0
    %95 = vperm.xlu0 %94, %v41
    %v96 = vpop.permute.xlu0 %95
    %99 = vset.pattern.permute.xlu0 0
    %100 = vperm.xlu0 %99, %v42
    %v101 = vpop.permute.xlu0 %100
    %104 = vset.pattern.permute.xlu0 0
    %105 = vperm.xlu0 %104, %v43
    %v106 = vpop.permute.xlu0 %105
    %109 = vset.pattern.permute.xlu0 0
    %110 = vperm.xlu0 %109, %v44
    %v111 = vpop.permute.xlu0 %110
    %114 = vset.pattern.permute.xlu0 0
    %115 = vperm.xlu0 %114, %v45
    %v116 = vpop.permute.xlu0 %115
    %119 = vset.pattern.permute.xlu0 0
    %120 = vperm.xlu0 %119, %v46
    %v121 = vpop.permute.xlu0 %120
    %124 = vset.pattern.permute.xlu0 0
    %125 = vperm.xlu0 %124, %v47
    %v126 = vpop.permute.xlu0 %125
    %129 = vset.pattern.permute.xlu0 0
    %130 = vperm.xlu0 %129, %v48
    %v131 = vpop.permute.xlu0 %130
    %134 = vset.pattern.permute.xlu0 0
    %135 = vperm.xlu0 %134, %v49
    %v136 = vpop.permute.xlu0 %135
    %139 = vset.pattern.permute.xlu0 0
    %140 = vperm.xlu0 %139, %v50
    %v141 = vpop.permute.xlu0 %140
    %144 = vset.pattern.permute.xlu0 0
    %145 = vperm.xlu0 %144, %v51
    %v146 = vpop.permute.xlu0 %145
    %149 = vset.pattern.permute.xlu0 0
    %150 = vperm.xlu0 %149, %v52
    %v151 = vpop.permute.xlu0 %150
    %v153 = vperm.slane %v27, 0
    %v154 = vmul.f32 %v56, %v153
    %v155 = vmul.f32 %v61, %v153
    %v156 = vmul.f32 %v66, %v153
    %v157 = vmul.f32 %v71, %v153
    %v158 = vmul.f32 %v76, %v153
    %v159 = vmul.f32 %v81, %v153
    %v160 = vmul.f32 %v86, %v153
    %v161 = vmul.f32 %v91, %v153
    %v162 = vmul.f32 %v96, %v153
    %v163 = vmul.f32 %v101, %v153
    %v164 = vmul.f32 %v106, %v153
    %v165 = vmul.f32 %v111, %v153
    %v166 = vmul.f32 %v116, %v153
    %v167 = vmul.f32 %v121, %v153
    %v168 = vmul.f32 %v126, %v153
    %v169 = vmul.f32 %v131, %v153
    %v170 = vmul.f32 %v136, %v153
    %v171 = vmul.f32 %v141, %v153
    %v172 = vmul.f32 %v146, %v153
    %v173 = vmul.f32 %v151, %v153
    %v174 = vperm.slane %v28, 0
    %v175 = vadd.f32 %v154, %v174
    %v176 = vadd.f32 %v155, %v174
    %v177 = vadd.f32 %v156, %v174
    %v178 = vadd.f32 %v157, %v174
    %v179 = vadd.f32 %v158, %v174
    %v180 = vadd.f32 %v159, %v174
    %v181 = vadd.f32 %v160, %v174
    %v182 = vadd.f32 %v161, %v174
    %v183 = vadd.f32 %v162, %v174
    %v184 = vadd.f32 %v163, %v174
    %v185 = vadd.f32 %v164, %v174
    %v186 = vadd.f32 %v165, %v174
    %v187 = vadd.f32 %v166, %v174
    %v188 = vadd.f32 %v167, %v174
    %v189 = vadd.f32 %v168, %v174
    %v190 = vadd.f32 %v169, %v174
    %v191 = vadd.f32 %v170, %v174
    %v192 = vadd.f32 %v171, %v174
    %v193 = vadd.f32 %v172, %v174
    %v194 = vadd.f32 %v173, %v174
    %vm195 = vcmask 195584
    %196 = vst.msk [vmem:[#allocation2] sm:$0xff] %vm195, %v175
    %197 = vst.msk [vmem:[#allocation2 + $0x8] sm:$0xff] %vm195, %v176
    %198 = vst.msk [vmem:[#allocation2 + $0x10] sm:$0xff] %vm195, %v177
    %199 = vst.msk [vmem:[#allocation2 + $0x18] sm:$0xff] %vm195, %v178
    %200 = vst.msk [vmem:[#allocation2 + $0x20] sm:$0xff] %vm195, %v179
    %201 = vst.msk [vmem:[#allocation2 + $0x28] sm:$0xff] %vm195, %v180
    %202 = vst.msk [vmem:[#allocation2 + $0x30] sm:$0xff] %vm195, %v181
    %203 = vst.msk [vmem:[#allocation2 + $0x38] sm:$0xff] %vm195, %v182
    %204 = vst.msk [vmem:[#allocation2 + $0x40] sm:$0xff] %vm195, %v183
    %205 = vst.msk [vmem:[#allocation2 + $0x48] sm:$0xff] %vm195, %v184
    %206 = vst.msk [vmem:[#allocation2 + $0x50] sm:$0xff] %vm195, %v185
    %207 = vst.msk [vmem:[#allocation2 + $0x58] sm:$0xff] %vm195, %v186
    %208 = vst.msk [vmem:[#allocation2 + $0x60] sm:$0xff] %vm195, %v187
    %209 = vst.msk [vmem:[#allocation2 + $0x68] sm:$0xff] %vm195, %v188
    %210 = vst.msk [vmem:[#allocation2 + $0x70] sm:$0xff] %vm195, %v189
    %211 = vst.msk [vmem:[#allocation2 + $0x78] sm:$0xff] %vm195, %v190
    %212 = vst.msk [vmem:[#allocation2 + $0x80] sm:$0xff] %vm195, %v191
    %213 = vst.msk [vmem:[#allocation2 + $0x88] sm:$0xff] %vm195, %v192
    %214 = vst.msk [vmem:[#allocation2 + $0x90] sm:$0xff] %vm195, %v193
    %215 = vst.msk [vmem:[#allocation2 + $0x98] sm:$0xff] %vm195, %v194
    %v216 = vperm.slane %v29, 0
    %vm217 = vcmask 48128
    %v219 = vsel %vm217, 0.0, 0
    %vm221 = vcmask 1045504
    %v223 = vsel %vm221, %v32, 0
    %225 = vmatpush.msra.mxu0 0.0
    %226 = vmatpush.msra.mxu0 0.0
    %227 = vmatpush.msra.mxu0 0.0
    %228 = vmatpush.msra.mxu0 0.0
    %229 = vmatpush.msra.mxu0 0.0
    %230 = vmatpush.msra.mxu0 0.0
    %231 = vmatpush.msra.mxu0 0.0
    %232 = vmatpush.msra.mxu0 0.0
    %233 = vmatpush.msra.mxu0 0.0
    %234 = vmatpush.msra.mxu0 0.0
    %235 = vmatpush.msra.mxu0 0.0
    %236 = vmatpush.msra.mxu0 0.0
    %237 = vmatpush.msra.mxu0 0.0
    %238 = vmatpush.msra.mxu0 0.0
    %239 = vmatpush.msra.mxu0 0.0
    %240 = vmatpush.msra.mxu0 %v223
    %241 = vmatmul.f32.gmra.mxu0 %v219
    %v242 = vpop.f32.mrf.mxu0
    %v243 = vadd.f32 %v216, %v242
    %244 = vdwg.mxu0
    %v245 = vld [vmem:[#allocation2] sm:$0xff]
    %v247 = vsel %vm221, %v30, 0
    %249 = vmatpush.msra.mxu0 0.0
    %250 = vmatpush.msra.mxu0 0.0
    %251 = vmatpush.msra.mxu0 0.0
    %252 = vmatpush.msra.mxu0 0.0
    %253 = vmatpush.msra.mxu0 0.0
    %254 = vmatpush.msra.mxu0 0.0
    %255 = vmatpush.msra.mxu0 0.0
    %256 = vmatpush.msra.mxu0 0.0
    %257 = vmatpush.msra.mxu0 0.0
    %258 = vmatpush.msra.mxu0 0.0
    %259 = vmatpush.msra.mxu0 0.0
    %260 = vmatpush.msra.mxu0 0.0
    %261 = vmatpush.msra.mxu0 0.0
    %262 = vmatpush.msra.mxu0 0.0
    %263 = vmatpush.msra.mxu0 0.0
    %264 = vmatpush.msra.mxu0 %v247
    %265 = vmatmul.f32.gmra.mxu0 %v219
    %v266 = vpop.f32.mrf.mxu0
    %v267 = vadd.f32 0.0, %v266
    %268 = vdwg.mxu0
    %v269 = vadd.f32 %v245, %v267
    %v270 = vxor.u32 %v269, 2147483648
    %v271 = vmul.f32 %v270, 1.442695
    %v272 = vpow.pop %v271
    %v273 = vadd.f32 %v272, 1.0
    %v274 = vrcp.pop %v273
    %v275 = vmul.f32 %v273, %v274
    %v276 = vsub.f32 1.0, %v275
    %v277 = vmul.f32 %v274, %v276
    %v278 = vadd.f32 %v274, %v277
    %vm279 = vweird.f32 %v273
    %vm280 = vweird.f32 %v274
    %vm281 = vmor %vm279, %vm280
    %v282 = vsel %vm281, %v274, %v278
    %v283 = vand.u32 2147483647, %v273
    %vm284 = vcmp.eq.f32.partialorder %v283, 8.507059e+37
    %v285 = vand.u32 %v273, 2147483648
    %v286 = vor.u32 1.1754944e-38, %v285
    %v287 = vsel %vm284, %v286, %v282
    %v288 = vmul.f32 1.0, %v287
    %v289 = vmul.f32 %v288, 2.0
    %v290 = vsub.f32 %v289, 1.0
    %v291 = vmul.f32 %v288, 0.0
    %293 = vrot.lane.b32.xlu0 %v290, 116
    %v294 = vpop.permute.xlu0 %293
    %v296 = vmul.f32 %v288, %v294
    %298 = vrot.lane.b32.xlu0 %v296, 6
    %v299 = vpop.permute.xlu0 %298
    %v301 = vadd.f32 %v291, %v299
    %v302 = vtanh.pop %v301
    %304 = vrot.lane.b32.xlu0 %v302, 12
    %v305 = vpop.permute.xlu0 %304
    %v307 = vmul.f32 %v288, %v305
    %309 = vrot.lane.b32.xlu0 %v307, 110
    %v310 = vpop.permute.xlu0 %309
    %v311 = vsel %vm217, %v310, 0
    %v314 = vsel %vm221, %v31, 0
    %316 = vmatpush.msra.mxu0 0.0
    %317 = vmatpush.msra.mxu0 0.0
    %318 = vmatpush.msra.mxu0 0.0
    %319 = vmatpush.msra.mxu0 0.0
    %320 = vmatpush.msra.mxu0 0.0
    %321 = vmatpush.msra.mxu0 0.0
    %322 = vmatpush.msra.mxu0 0.0
    %323 = vmatpush.msra.mxu0 0.0
    %324 = vmatpush.msra.mxu0 0.0
    %325 = vmatpush.msra.mxu0 0.0
    %326 = vmatpush.msra.mxu0 0.0
    %327 = vmatpush.msra.mxu0 0.0
    %328 = vmatpush.msra.mxu0 0.0
    %329 = vmatpush.msra.mxu0 0.0
    %330 = vmatpush.msra.mxu0 0.0
    %331 = vmatpush.msra.mxu0 %v314
    %332 = vmatmul.f32.gmra.mxu0 %v311
    %v333 = vpop.f32.mrf.mxu0
    %v334 = vadd.f32 %v243, %v333
    %335 = vdwg.mxu0
    %v336 = vxor.u32 %v334, 2147483648
    %v337 = vmul.f32 %v336, 1.442695
    %v338 = vpow.pop %v337
    %v339 = vadd.f32 %v338, 1.0
    %v340 = vrcp.pop %v339
    %v341 = vmul.f32 %v339, %v340
    %v342 = vsub.f32 1.0, %v341
    %v343 = vmul.f32 %v340, %v342
    %v344 = vadd.f32 %v340, %v343
    %vm345 = vweird.f32 %v339
    %vm346 = vweird.f32 %v340
    %vm347 = vmor %vm345, %vm346
    %v348 = vsel %vm347, %v340, %v344
    %v349 = vand.u32 2147483647, %v339
    %vm350 = vcmp.eq.f32.partialorder %v349, 8.507059e+37
    %v351 = vand.u32 %v339, 2147483648
    %v352 = vor.u32 1.1754944e-38, %v351
    %v353 = vsel %vm350, %v352, %v348
    %v354 = vmul.f32 1.0, %v353
    %v355 = vmul.f32 %v354, 2.0
    %v356 = vsub.f32 %v355, 1.0
    %v357 = vmul.f32 %v354, 0.0
    %359 = vrot.lane.b32.xlu0 %v356, 116
    %v360 = vpop.permute.xlu0 %359
    %v362 = vmul.f32 %v354, %v360
    %364 = vrot.lane.b32.xlu0 %v362, 6
    %v365 = vpop.permute.xlu0 %364
    %v367 = vadd.f32 %v357, %v365
    %v368 = vtanh.pop %v367
    %370 = vrot.lane.b32.xlu0 %v368, 12
    %v371 = vpop.permute.xlu0 %370
    %v373 = vmul.f32 %v354, %v371
    %v374 = vld [vmem:[#allocation3 + $0x20] sm:$0x3f]
    %376 = vrot.lane.b32.xlu0 %v373, 110
    %v377 = vpop.permute.xlu0 %376
    %v378 = vsel %vm217, %v377, 0
    %380 = vmatpush.msra.mxu0 0.0
    %381 = vmatpush.msra.mxu0 0.0
    %382 = vmatpush.msra.mxu0 0.0
    %383 = vmatpush.msra.mxu0 0.0
    %384 = vmatpush.msra.mxu0 0.0
    %385 = vmatpush.msra.mxu0 0.0
    %386 = vmatpush.msra.mxu0 0.0
    %387 = vmatpush.msra.mxu0 0.0
    %388 = vmatpush.msra.mxu0 0.0
    %389 = vmatpush.msra.mxu0 0.0
    %390 = vmatpush.msra.mxu0 0.0
    %391 = vmatpush.msra.mxu0 0.0
    %392 = vmatpush.msra.mxu0 0.0
    %393 = vmatpush.msra.mxu0 0.0
    %394 = vmatpush.msra.mxu0 0.0
    %395 = vmatpush.msra.mxu0 %v223
    %396 = vmatmul.f32.gmra.mxu0 %v378
    %v397 = vpop.f32.mrf.mxu0
    %v398 = vadd.f32 %v216, %v397
    %399 = vdwg.mxu0
    %s400 = scalar_lea.vmem [#allocation2], 8
    %v401 = vld [vmem:[%s400] sm:$0xff]
    %402 = vmatpush.msra.mxu0 0.0
    %403 = vmatpush.msra.mxu0 0.0
    %404 = vmatpush.msra.mxu0 0.0
    %405 = vmatpush.msra.mxu0 0.0
    %406 = vmatpush.msra.mxu0 0.0
    %407 = vmatpush.msra.mxu0 0.0
    %408 = vmatpush.msra.mxu0 0.0
    %409 = vmatpush.msra.mxu0 0.0
    %410 = vmatpush.msra.mxu0 0.0
    %411 = vmatpush.msra.mxu0 0.0
    %412 = vmatpush.msra.mxu0 0.0
    %413 = vmatpush.msra.mxu0 0.0
    %414 = vmatpush.msra.mxu0 0.0
    %415 = vmatpush.msra.mxu0 0.0
    %416 = vmatpush.msra.mxu0 0.0
    %417 = vmatpush.msra.mxu0 %v247
    %418 = vmatmul.f32.gmra.mxu0 %v311
    %v419 = vpop.f32.mrf.mxu0
    %v420 = vadd.f32 0.0, %v419
    %421 = vdwg.mxu0
    %v422 = vadd.f32 %v401, %v420
    %v423 = vxor.u32 %v422, 2147483648
    %v424 = vmul.f32 %v423, 1.442695
    %v425 = vpow.pop %v424
    %v426 = vadd.f32 %v425, 1.0
    %v427 = vrcp.pop %v426
    %v428 = vmul.f32 %v426, %v427
    %v429 = vsub.f32 1.0, %v428
    %v430 = vmul.f32 %v427, %v429
    %v431 = vadd.f32 %v427, %v430
    %vm432 = vweird.f32 %v426
    %vm433 = vweird.f32 %v427
    %vm434 = vmor %vm432, %vm433
    %v435 = vsel %vm434, %v427, %v431
    %v436 = vand.u32 2147483647, %v426
    %vm437 = vcmp.eq.f32.partialorder %v436, 8.507059e+37
    %v438 = vand.u32 %v426, 2147483648
    %v439 = vor.u32 1.1754944e-38, %v438
    %v440 = vsel %vm437, %v439, %v435
    %v441 = vmul.f32 1.0, %v440
    %v442 = vmul.f32 %v441, 2.0
    %v443 = vsub.f32 %v442, 1.0
    %v444 = vmul.f32 %v441, %v301
    %446 = vrot.lane.b32.xlu0 %v443, 116
    %v447 = vpop.permute.xlu0 %446
    %v449 = vmul.f32 %v441, %v447
    %451 = vrot.lane.b32.xlu0 %v449, 6
    %v452 = vpop.permute.xlu0 %451
    %v454 = vadd.f32 %v444, %v452
    %v455 = vtanh.pop %v454
    %457 = vrot.lane.b32.xlu0 %v455, 12
    %v458 = vpop.permute.xlu0 %457
    %v460 = vmul.f32 %v441, %v458
    %462 = vrot.lane.b32.xlu0 %v460, 110
    %v463 = vpop.permute.xlu0 %462
    %v464 = vsel %vm217, %v463, 0
    %466 = vmatpush.msra.mxu0 0.0
    %467 = vmatpush.msra.mxu0 0.0
    %468 = vmatpush.msra.mxu0 0.0
    %469 = vmatpush.msra.mxu0 0.0
    %470 = vmatpush.msra.mxu0 0.0
    %471 = vmatpush.msra.mxu0 0.0
    %472 = vmatpush.msra.mxu0 0.0
    %473 = vmatpush.msra.mxu0 0.0
    %474 = vmatpush.msra.mxu0 0.0
    %475 = vmatpush.msra.mxu0 0.0
    %476 = vmatpush.msra.mxu0 0.0
    %477 = vmatpush.msra.mxu0 0.0
    %478 = vmatpush.msra.mxu0 0.0
    %479 = vmatpush.msra.mxu0 0.0
    %480 = vmatpush.msra.mxu0 0.0
    %481 = vmatpush.msra.mxu0 %v314
    %482 = vmatmul.f32.gmra.mxu0 %v464
    %v483 = vpop.f32.mrf.mxu0
    %v484 = vadd.f32 %v398, %v483
    %485 = vdwg.mxu0
    %v486 = vxor.u32 %v484, 2147483648
    %v487 = vmul.f32 %v486, 1.442695
    %v488 = vpow.pop %v487
    %v489 = vadd.f32 %v488, 1.0
    %v490 = vrcp.pop %v489
    %v491 = vmul.f32 %v489, %v490
    %v492 = vsub.f32 1.0, %v491
    %v493 = vmul.f32 %v490, %v492
    %v494 = vadd.f32 %v490, %v493
    %vm495 = vweird.f32 %v489
    %vm496 = vweird.f32 %v490
    %vm497 = vmor %vm495, %vm496
    %v498 = vsel %vm497, %v490, %v494
    %v499 = vand.u32 2147483647, %v489
    %vm500 = vcmp.eq.f32.partialorder %v499, 8.507059e+37
    %v501 = vand.u32 %v489, 2147483648
    %v502 = vor.u32 1.1754944e-38, %v501
    %v503 = vsel %vm500, %v502, %v498
    %v504 = vmul.f32 1.0, %v503
    %v505 = vmul.f32 %v504, 2.0
    %v506 = vsub.f32 %v505, 1.0
    %v507 = vmul.f32 %v504, %v367
    %509 = vrot.lane.b32.xlu0 %v506, 116
    %v510 = vpop.permute.xlu0 %509
    %v512 = vmul.f32 %v504, %v510
    %514 = vrot.lane.b32.xlu0 %v512, 6
    %v515 = vpop.permute.xlu0 %514
    %v517 = vadd.f32 %v507, %v515
    %v518 = vtanh.pop %v517
    %520 = vrot.lane.b32.xlu0 %v518, 12
    %v521 = vpop.permute.xlu0 %520
    %v523 = vmul.f32 %v504, %v521
    %v524 = vld [vmem:[#allocation3 + $0x28] sm:$0x3f]
    %526 = vrot.lane.b32.xlu0 %v523, 110
    %v527 = vpop.permute.xlu0 %526
    %v528 = vsel %vm217, %v527, 0
    %v531 = vsel %vm221, %v524, 0
    %533 = vmatpush.msra.mxu0 0.0
    %534 = vmatpush.msra.mxu0 0.0
    %535 = vmatpush.msra.mxu0 0.0
    %536 = vmatpush.msra.mxu0 0.0
    %537 = vmatpush.msra.mxu0 0.0
    %538 = vmatpush.msra.mxu0 0.0
    %539 = vmatpush.msra.mxu0 0.0
    %540 = vmatpush.msra.mxu0 0.0
    %541 = vmatpush.msra.mxu0 0.0
    %542 = vmatpush.msra.mxu0 0.0
    %543 = vmatpush.msra.mxu0 0.0
    %544 = vmatpush.msra.mxu0 0.0
    %545 = vmatpush.msra.mxu0 0.0
    %546 = vmatpush.msra.mxu0 0.0
    %547 = vmatpush.msra.mxu0 0.0
    %548 = vmatpush.msra.mxu0 %v531
    %549 = vmatmul.f32.gmra.mxu0 %v528
    %v550 = vpop.f32.mrf.mxu0
    %v551 = vadd.f32 0.0, %v550
    %552 = vdwg.mxu0
    %v554 = vsel %vm221, %v374, 0
    %556 = vmatpush.msra.mxu0 0.0
    %557 = vmatpush.msra.mxu0 0.0
    %558 = vmatpush.msra.mxu0 0.0
    %559 = vmatpush.msra.mxu0 0.0
    %560 = vmatpush.msra.mxu0 0.0
    %561 = vmatpush.msra.mxu0 0.0
    %562 = vmatpush.msra.mxu0 0.0
    %563 = vmatpush.msra.mxu0 0.0
    %564 = vmatpush.msra.mxu0 0.0
    %565 = vmatpush.msra.mxu0 0.0
    %566 = vmatpush.msra.mxu0 0.0
    %567 = vmatpush.msra.mxu0 0.0
    %568 = vmatpush.msra.mxu0 0.0
    %569 = vmatpush.msra.mxu0 0.0
    %570 = vmatpush.msra.mxu0 0.0
    %571 = vmatpush.msra.mxu0 %v554
    %572 = vmatmul.f32.gmra.mxu0 %v378
    %v573 = vpop.f32.mrf.mxu0
    %v574 = vadd.f32 %v551, %v573
    %575 = vdwg.mxu0
    %576 = vmatpush.msra.mxu0 0.0
    %577 = vmatpush.msra.mxu0 0.0
    %578 = vmatpush.msra.mxu0 0.0
    %579 = vmatpush.msra.mxu0 0.0
    %580 = vmatpush.msra.mxu0 0.0
    %581 = vmatpush.msra.mxu0 0.0
    %582 = vmatpush.msra.mxu0 0.0
    %583 = vmatpush.msra.mxu0 0.0
    %584 = vmatpush.msra.mxu0 0.0
    %585 = vmatpush.msra.mxu0 0.0
    %586 = vmatpush.msra.mxu0 0.0
    %587 = vmatpush.msra.mxu0 0.0
    %588 = vmatpush.msra.mxu0 0.0
    %589 = vmatpush.msra.mxu0 0.0
    %590 = vmatpush.msra.mxu0 0.0
    %591 = vmatpush.msra.mxu0 %v223
    %592 = vmatmul.f32.gmra.mxu0 %v528
    %v593 = vpop.f32.mrf.mxu0
    %v594 = vadd.f32 %v216, %v593
    %595 = vdwg.mxu0
    %s596 = scalar_lea.vmem [#allocation2], 16
    %v597 = vld [vmem:[%s596] sm:$0xff]
    %598 = vmatpush.msra.mxu0 0.0
    %599 = vmatpush.msra.mxu0 0.0
    %600 = vmatpush.msra.mxu0 0.0
    %601 = vmatpush.msra.mxu0 0.0
    %602 = vmatpush.msra.mxu0 0.0
    %603 = vmatpush.msra.mxu0 0.0
    %604 = vmatpush.msra.mxu0 0.0
    %605 = vmatpush.msra.mxu0 0.0
    %606 = vmatpush.msra.mxu0 0.0
    %607 = vmatpush.msra.mxu0 0.0
    %608 = vmatpush.msra.mxu0 0.0
    %609 = vmatpush.msra.mxu0 0.0
    %610 = vmatpush.msra.mxu0 0.0
    %611 = vmatpush.msra.mxu0 0.0
    %612 = vmatpush.msra.mxu0 0.0
    %613 = vmatpush.msra.mxu0 %v247
    %614 = vmatmul.f32.gmra.mxu0 %v464
    %v615 = vpop.f32.mrf.mxu0
    %v616 = vadd.f32 0.0, %v615
    %617 = vdwg.mxu0
    %v618 = vadd.f32 %v597, %v616
    %v619 = vxor.u32 %v618, 2147483648
    %v620 = vmul.f32 %v619, 1.442695
    %v621 = vpow.pop %v620
    %v622 = vadd.f32 %v621, 1.0
    %v623 = vrcp.pop %v622
    %v624 = vmul.f32 %v622, %v623
    %v625 = vsub.f32 1.0, %v624
    %v626 = vmul.f32 %v623, %v625
    %v627 = vadd.f32 %v623, %v626
    %vm628 = vweird.f32 %v622
    %vm629 = vweird.f32 %v623
    %vm630 = vmor %vm628, %vm629
    %v631 = vsel %vm630, %v623, %v627
    %v632 = vand.u32 2147483647, %v622
    %vm633 = vcmp.eq.f32.partialorder %v632, 8.507059e+37
    %v634 = vand.u32 %v622, 2147483648
    %v635 = vor.u32 1.1754944e-38, %v634
    %v636 = vsel %vm633, %v635, %v631
    %v637 = vmul.f32 1.0, %v636
    %v638 = vmul.f32 %v637, 2.0
    %v639 = vsub.f32 %v638, 1.0
    %v640 = vmul.f32 %v637, %v454
    %642 = vrot.lane.b32.xlu0 %v639, 116
    %v643 = vpop.permute.xlu0 %642
    %v645 = vmul.f32 %v637, %v643
    %647 = vrot.lane.b32.xlu0 %v645, 6
    %v648 = vpop.permute.xlu0 %647
    %v650 = vadd.f32 %v640, %v648
    %v651 = vtanh.pop %v650
    %653 = vrot.lane.b32.xlu0 %v651, 12
    %v654 = vpop.permute.xlu0 %653
    %v656 = vmul.f32 %v637, %v654
    %658 = vrot.lane.b32.xlu0 %v656, 110
    %v659 = vpop.permute.xlu0 %658
    %v660 = vsel %vm217, %v659, 0
    %662 = vmatpush.msra.mxu0 0.0
    %663 = vmatpush.msra.mxu0 0.0
    %664 = vmatpush.msra.mxu0 0.0
    %665 = vmatpush.msra.mxu0 0.0
    %666 = vmatpush.msra.mxu0 0.0
    %667 = vmatpush.msra.mxu0 0.0
    %668 = vmatpush.msra.mxu0 0.0
    %669 = vmatpush.msra.mxu0 0.0
    %670 = vmatpush.msra.mxu0 0.0
    %671 = vmatpush.msra.mxu0 0.0
    %672 = vmatpush.msra.mxu0 0.0
    %673 = vmatpush.msra.mxu0 0.0
    %674 = vmatpush.msra.mxu0 0.0
    %675 = vmatpush.msra.mxu0 0.0
    %676 = vmatpush.msra.mxu0 0.0
    %677 = vmatpush.msra.mxu0 %v314
    %678 = vmatmul.f32.gmra.mxu0 %v660
    %v679 = vpop.f32.mrf.mxu0
    %v680 = vadd.f32 %v594, %v679
    %681 = vdwg.mxu0
    %v682 = vxor.u32 %v680, 2147483648
    %v683 = vmul.f32 %v682, 1.442695
    %v684 = vpow.pop %v683
    %v685 = vadd.f32 %v684, 1.0
    %v686 = vrcp.pop %v685
    %v687 = vmul.f32 %v685, %v686
    %v688 = vsub.f32 1.0, %v687
    %v689 = vmul.f32 %v686, %v688
    %v690 = vadd.f32 %v686, %v689
    %vm691 = vweird.f32 %v685
    %vm692 = vweird.f32 %v686
    %vm693 = vmor %vm691, %vm692
    %v694 = vsel %vm693, %v686, %v690
    %v695 = vand.u32 2147483647, %v685
    %vm696 = vcmp.eq.f32.partialorder %v695, 8.507059e+37
    %v697 = vand.u32 %v685, 2147483648
    %v698 = vor.u32 1.1754944e-38, %v697
    %v699 = vsel %vm696, %v698, %v694
    %v700 = vmul.f32 1.0, %v699
    %v701 = vmul.f32 %v700, 2.0
    %v702 = vsub.f32 %v701, 1.0
    %v703 = vmul.f32 %v700, %v517
    %705 = vrot.lane.b32.xlu0 %v702, 116
    %v706 = vpop.permute.xlu0 %705
    %v708 = vmul.f32 %v700, %v706
    %710 = vrot.lane.b32.xlu0 %v708, 6
    %v711 = vpop.permute.xlu0 %710
    %v713 = vadd.f32 %v703, %v711
    %v714 = vtanh.pop %v713
    %716 = vrot.lane.b32.xlu0 %v714, 12
    %v717 = vpop.permute.xlu0 %716
    %v719 = vmul.f32 %v700, %v717
    %v720 = vld [vmem:[#allocation3 + $0x30] sm:$0x3f]
    %722 = vrot.lane.b32.xlu0 %v719, 110
    %v723 = vpop.permute.xlu0 %722
    %v724 = vsel %vm217, %v723, 0
    %v727 = vsel %vm221, %v720, 0
    %729 = vmatpush.msra.mxu0 0.0
    %730 = vmatpush.msra.mxu0 0.0
    %731 = vmatpush.msra.mxu0 0.0
    %732 = vmatpush.msra.mxu0 0.0
    %733 = vmatpush.msra.mxu0 0.0
    %734 = vmatpush.msra.mxu0 0.0
    %735 = vmatpush.msra.mxu0 0.0
    %736 = vmatpush.msra.mxu0 0.0
    %737 = vmatpush.msra.mxu0 0.0
    %738 = vmatpush.msra.mxu0 0.0
    %739 = vmatpush.msra.mxu0 0.0
    %740 = vmatpush.msra.mxu0 0.0
    %741 = vmatpush.msra.mxu0 0.0
    %742 = vmatpush.msra.mxu0 0.0
    %743 = vmatpush.msra.mxu0 0.0
    %744 = vmatpush.msra.mxu0 %v727
    %745 = vmatmul.f32.gmra.mxu0 %v724
    %v746 = vpop.f32.mrf.mxu0
    %v747 = vadd.f32 0.0, %v746
    %748 = vdwg.mxu0
    %v749 = vadd.f32 %v574, %v747
    %750 = vmatpush.msra.mxu0 0.0
    %751 = vmatpush.msra.mxu0 0.0
    %752 = vmatpush.msra.mxu0 0.0
    %753 = vmatpush.msra.mxu0 0.0
    %754 = vmatpush.msra.mxu0 0.0
    %755 = vmatpush.msra.mxu0 0.0
    %756 = vmatpush.msra.mxu0 0.0
    %757 = vmatpush.msra.mxu0 0.0
    %758 = vmatpush.msra.mxu0 0.0
    %759 = vmatpush.msra.mxu0 0.0
    %760 = vmatpush.msra.mxu0 0.0
    %761 = vmatpush.msra.mxu0 0.0
    %762 = vmatpush.msra.mxu0 0.0
    %763 = vmatpush.msra.mxu0 0.0
    %764 = vmatpush.msra.mxu0 0.0
    %765 = vmatpush.msra.mxu0 %v223
    %766 = vmatmul.f32.gmra.mxu0 %v724
    %v767 = vpop.f32.mrf.mxu0
    %v768 = vadd.f32 %v216, %v767
    %769 = vdwg.mxu0
    %s770 = scalar_lea.vmem [#allocation2], 24
    %v771 = vld [vmem:[%s770] sm:$0xff]
    %772 = vmatpush.msra.mxu0 0.0
    %773 = vmatpush.msra.mxu0 0.0
    %774 = vmatpush.msra.mxu0 0.0
    %775 = vmatpush.msra.mxu0 0.0
    %776 = vmatpush.msra.mxu0 0.0
    %777 = vmatpush.msra.mxu0 0.0
    %778 = vmatpush.msra.mxu0 0.0
    %779 = vmatpush.msra.mxu0 0.0
    %780 = vmatpush.msra.mxu0 0.0
    %781 = vmatpush.msra.mxu0 0.0
    %782 = vmatpush.msra.mxu0 0.0
    %783 = vmatpush.msra.mxu0 0.0
    %784 = vmatpush.msra.mxu0 0.0
    %785 = vmatpush.msra.mxu0 0.0
    %786 = vmatpush.msra.mxu0 0.0
    %787 = vmatpush.msra.mxu0 %v247
    %788 = vmatmul.f32.gmra.mxu0 %v660
    %v789 = vpop.f32.mrf.mxu0
    %v790 = vadd.f32 0.0, %v789
    %791 = vdwg.mxu0
    %v792 = vadd.f32 %v771, %v790
    %v793 = vxor.u32 %v792, 2147483648
    %v794 = vmul.f32 %v793, 1.442695
    %v795 = vpow.pop %v794
    %v796 = vadd.f32 %v795, 1.0
    %v797 = vrcp.pop %v796
    %v798 = vmul.f32 %v796, %v797
    %v799 = vsub.f32 1.0, %v798
    %v800 = vmul.f32 %v797, %v799
    %v801 = vadd.f32 %v797, %v800
    %vm802 = vweird.f32 %v796
    %vm803 = vweird.f32 %v797
    %vm804 = vmor %vm802, %vm803
    %v805 = vsel %vm804, %v797, %v801
    %v806 = vand.u32 2147483647, %v796
    %vm807 = vcmp.eq.f32.partialorder %v806, 8.507059e+37
    %v808 = vand.u32 %v796, 2147483648
    %v809 = vor.u32 1.1754944e-38, %v808
    %v810 = vsel %vm807, %v809, %v805
    %v811 = vmul.f32 1.0, %v810
    %v812 = vmul.f32 %v811, 2.0
    %v813 = vsub.f32 %v812, 1.0
    %v814 = vmul.f32 %v811, %v650
    %816 = vrot.lane.b32.xlu0 %v813, 116
    %v817 = vpop.permute.xlu0 %816
    %v819 = vmul.f32 %v811, %v817
    %821 = vrot.lane.b32.xlu0 %v819, 6
    %v822 = vpop.permute.xlu0 %821
    %v824 = vadd.f32 %v814, %v822
    %v825 = vtanh.pop %v824
    %827 = vrot.lane.b32.xlu0 %v825, 12
    %v828 = vpop.permute.xlu0 %827
    %v830 = vmul.f32 %v811, %v828
    %832 = vrot.lane.b32.xlu0 %v830, 110
    %v833 = vpop.permute.xlu0 %832
    %v834 = vsel %vm217, %v833, 0
    %836 = vmatpush.msra.mxu0 0.0
    %837 = vmatpush.msra.mxu0 0.0
    %838 = vmatpush.msra.mxu0 0.0
    %839 = vmatpush.msra.mxu0 0.0
    %840 = vmatpush.msra.mxu0 0.0
    %841 = vmatpush.msra.mxu0 0.0
    %842 = vmatpush.msra.mxu0 0.0
    %843 = vmatpush.msra.mxu0 0.0
    %844 = vmatpush.msra.mxu0 0.0
    %845 = vmatpush.msra.mxu0 0.0
    %846 = vmatpush.msra.mxu0 0.0
    %847 = vmatpush.msra.mxu0 0.0
    %848 = vmatpush.msra.mxu0 0.0
    %849 = vmatpush.msra.mxu0 0.0
    %850 = vmatpush.msra.mxu0 0.0
    %851 = vmatpush.msra.mxu0 %v314
    %852 = vmatmul.f32.gmra.mxu0 %v834
    %v853 = vpop.f32.mrf.mxu0
    %v854 = vadd.f32 %v768, %v853
    %855 = vdwg.mxu0
    %v856 = vxor.u32 %v854, 2147483648
    %v857 = vmul.f32 %v856, 1.442695
    %v858 = vpow.pop %v857
    %v859 = vadd.f32 %v858, 1.0
    %v860 = vrcp.pop %v859
    %v861 = vmul.f32 %v859, %v860
    %v862 = vsub.f32 1.0, %v861
    %v863 = vmul.f32 %v860, %v862
    %v864 = vadd.f32 %v860, %v863
    %vm865 = vweird.f32 %v859
    %vm866 = vweird.f32 %v860
    %vm867 = vmor %vm865, %vm866
    %v868 = vsel %vm867, %v860, %v864
    %v869 = vand.u32 2147483647, %v859
    %vm870 = vcmp.eq.f32.partialorder %v869, 8.507059e+37
    %v871 = vand.u32 %v859, 2147483648
    %v872 = vor.u32 1.1754944e-38, %v871
    %v873 = vsel %vm870, %v872, %v868
    %v874 = vmul.f32 1.0, %v873
    %v875 = vmul.f32 %v874, 2.0
    %v876 = vsub.f32 %v875, 1.0
    %v877 = vmul.f32 %v874, %v713
    %879 = vrot.lane.b32.xlu0 %v876, 116
    %v880 = vpop.permute.xlu0 %879
    %v882 = vmul.f32 %v874, %v880
    %884 = vrot.lane.b32.xlu0 %v882, 6
    %v885 = vpop.permute.xlu0 %884
    %v887 = vadd.f32 %v877, %v885
    %v888 = vtanh.pop %v887
    %890 = vrot.lane.b32.xlu0 %v888, 12
    %v891 = vpop.permute.xlu0 %890
    %v893 = vmul.f32 %v874, %v891
    %v894 = vld [vmem:[#allocation3 + $0x38] sm:$0x3f]
    %896 = vrot.lane.b32.xlu0 %v893, 110
    %v897 = vpop.permute.xlu0 %896
    %v898 = vsel %vm217, %v897, 0
    %v901 = vsel %vm221, %v894, 0
    %903 = vmatpush.msra.mxu0 0.0
    %904 = vmatpush.msra.mxu0 0.0
    %905 = vmatpush.msra.mxu0 0.0
    %906 = vmatpush.msra.mxu0 0.0
    %907 = vmatpush.msra.mxu0 0.0
    %908 = vmatpush.msra.mxu0 0.0
    %909 = vmatpush.msra.mxu0 0.0
    %910 = vmatpush.msra.mxu0 0.0
    %911 = vmatpush.msra.mxu0 0.0
    %912 = vmatpush.msra.mxu0 0.0
    %913 = vmatpush.msra.mxu0 0.0
    %914 = vmatpush.msra.mxu0 0.0
    %915 = vmatpush.msra.mxu0 0.0
    %916 = vmatpush.msra.mxu0 0.0
    %917 = vmatpush.msra.mxu0 0.0
    %918 = vmatpush.msra.mxu0 %v901
    %919 = vmatmul.f32.gmra.mxu0 %v898
    %v920 = vpop.f32.mrf.mxu0
    %v921 = vadd.f32 0.0, %v920
    %922 = vdwg.mxu0
    %v923 = vadd.f32 %v749, %v921
    %924 = vmatpush.msra.mxu0 0.0
    %925 = vmatpush.msra.mxu0 0.0
    %926 = vmatpush.msra.mxu0 0.0
    %927 = vmatpush.msra.mxu0 0.0
    %928 = vmatpush.msra.mxu0 0.0
    %929 = vmatpush.msra.mxu0 0.0
    %930 = vmatpush.msra.mxu0 0.0
    %931 = vmatpush.msra.mxu0 0.0
    %932 = vmatpush.msra.mxu0 0.0
    %933 = vmatpush.msra.mxu0 0.0
    %934 = vmatpush.msra.mxu0 0.0
    %935 = vmatpush.msra.mxu0 0.0
    %936 = vmatpush.msra.mxu0 0.0
    %937 = vmatpush.msra.mxu0 0.0
    %938 = vmatpush.msra.mxu0 0.0
    %939 = vmatpush.msra.mxu0 %v223
    %940 = vmatmul.f32.gmra.mxu0 %v898
    %v941 = vpop.f32.mrf.mxu0
    %v942 = vadd.f32 %v216, %v941
    %943 = vdwg.mxu0
    %s944 = scalar_lea.vmem [#allocation2], 32
    %v945 = vld [vmem:[%s944] sm:$0xff]
    %946 = vmatpush.msra.mxu0 0.0
    %947 = vmatpush.msra.mxu0 0.0
    %948 = vmatpush.msra.mxu0 0.0
    %949 = vmatpush.msra.mxu0 0.0
    %950 = vmatpush.msra.mxu0 0.0
    %951 = vmatpush.msra.mxu0 0.0
    %952 = vmatpush.msra.mxu0 0.0
    %953 = vmatpush.msra.mxu0 0.0
    %954 = vmatpush.msra.mxu0 0.0
    %955 = vmatpush.msra.mxu0 0.0
    %956 = vmatpush.msra.mxu0 0.0
    %957 = vmatpush.msra.mxu0 0.0
    %958 = vmatpush.msra.mxu0 0.0
    %959 = vmatpush.msra.mxu0 0.0
    %960 = vmatpush.msra.mxu0 0.0
    %961 = vmatpush.msra.mxu0 %v247
    %962 = vmatmul.f32.gmra.mxu0 %v834
    %v963 = vpop.f32.mrf.mxu0
    %v964 = vadd.f32 0.0, %v963
    %965 = vdwg.mxu0
    %v966 = vadd.f32 %v945, %v964
    %v967 = vxor.u32 %v966, 2147483648
    %v968 = vmul.f32 %v967, 1.442695
    %v969 = vpow.pop %v968
    %v970 = vadd.f32 %v969, 1.0
    %v971 = vrcp.pop %v970
    %v972 = vmul.f32 %v970, %v971
    %v973 = vsub.f32 1.0, %v972
    %v974 = vmul.f32 %v971, %v973
    %v975 = vadd.f32 %v971, %v974
    %vm976 = vweird.f32 %v970
    %vm977 = vweird.f32 %v971
    %vm978 = vmor %vm976, %vm977
    %v979 = vsel %vm978, %v971, %v975
    %v980 = vand.u32 2147483647, %v970
    %vm981 = vcmp.eq.f32.partialorder %v980, 8.507059e+37
    %v982 = vand.u32 %v970, 2147483648
    %v983 = vor.u32 1.1754944e-38, %v982
    %v984 = vsel %vm981, %v983, %v979
    %v985 = vmul.f32 1.0, %v984
    %v986 = vmul.f32 %v985, 2.0
    %v987 = vsub.f32 %v986, 1.0
    %v988 = vmul.f32 %v985, %v824
    %990 = vrot.lane.b32.xlu0 %v987, 116
    %v991 = vpop.permute.xlu0 %990
    %v993 = vmul.f32 %v985, %v991
    %995 = vrot.lane.b32.xlu0 %v993, 6
    %v996 = vpop.permute.xlu0 %995
    %v998 = vadd.f32 %v988, %v996
    %v999 = vtanh.pop %v998
    %1001 = vrot.lane.b32.xlu0 %v999, 12
    %v1002 = vpop.permute.xlu0 %1001
    %v1004 = vmul.f32 %v985, %v1002
    %1006 = vrot.lane.b32.xlu0 %v1004, 110
    %v1007 = vpop.permute.xlu0 %1006
    %v1008 = vsel %vm217, %v1007, 0
    %1010 = vmatpush.msra.mxu0 0.0
    %1011 = vmatpush.msra.mxu0 0.0
    %1012 = vmatpush.msra.mxu0 0.0
    %1013 = vmatpush.msra.mxu0 0.0
    %1014 = vmatpush.msra.mxu0 0.0
    %1015 = vmatpush.msra.mxu0 0.0
    %1016 = vmatpush.msra.mxu0 0.0
    %1017 = vmatpush.msra.mxu0 0.0
    %1018 = vmatpush.msra.mxu0 0.0
    %1019 = vmatpush.msra.mxu0 0.0
    %1020 = vmatpush.msra.mxu0 0.0
    %1021 = vmatpush.msra.mxu0 0.0
    %1022 = vmatpush.msra.mxu0 0.0
    %1023 = vmatpush.msra.mxu0 0.0
    %1024 = vmatpush.msra.mxu0 0.0
    %1025 = vmatpush.msra.mxu0 %v314
    %1026 = vmatmul.f32.gmra.mxu0 %v1008
    %v1027 = vpop.f32.mrf.mxu0
    %v1028 = vadd.f32 %v942, %v1027
    %1029 = vdwg.mxu0
    %v1030 = vxor.u32 %v1028, 2147483648
    %v1031 = vmul.f32 %v1030, 1.442695
    %v1032 = vpow.pop %v1031
    %v1033 = vadd.f32 %v1032, 1.0
    %v1034 = vrcp.pop %v1033
    %v1035 = vmul.f32 %v1033, %v1034
    %v1036 = vsub.f32 1.0, %v1035
    %v1037 = vmul.f32 %v1034, %v1036
    %v1038 = vadd.f32 %v1034, %v1037
    %vm1039 = vweird.f32 %v1033
    %vm1040 = vweird.f32 %v1034
    %vm1041 = vmor %vm1039, %vm1040
    %v1042 = vsel %vm1041, %v1034, %v1038
    %v1043 = vand.u32 2147483647, %v1033
    %vm1044 = vcmp.eq.f32.partialorder %v1043, 8.507059e+37
    %v1045 = vand.u32 %v1033, 2147483648
    %v1046 = vor.u32 1.1754944e-38, %v1045
    %v1047 = vsel %vm1044, %v1046, %v1042
    %v1048 = vmul.f32 1.0, %v1047
    %v1049 = vmul.f32 %v1048, 2.0
    %v1050 = vsub.f32 %v1049, 1.0
    %v1051 = vmul.f32 %v1048, %v887
    %1053 = vrot.lane.b32.xlu0 %v1050, 116
    %v1054 = vpop.permute.xlu0 %1053
    %v1056 = vmul.f32 %v1048, %v1054
    %1058 = vrot.lane.b32.xlu0 %v1056, 6
    %v1059 = vpop.permute.xlu0 %1058
    %v1061 = vadd.f32 %v1051, %v1059
    %v1062 = vtanh.pop %v1061
    %1064 = vrot.lane.b32.xlu0 %v1062, 12
    %v1065 = vpop.permute.xlu0 %1064
    %v1067 = vmul.f32 %v1048, %v1065
    %v1068 = vld [vmem:[#allocation3 + $0x40] sm:$0x3f]
    %1070 = vrot.lane.b32.xlu0 %v1067, 110
    %v1071 = vpop.permute.xlu0 %1070
    %v1072 = vsel %vm217, %v1071, 0
    %v1075 = vsel %vm221, %v1068, 0
    %1077 = vmatpush.msra.mxu0 0.0
    %1078 = vmatpush.msra.mxu0 0.0
    %1079 = vmatpush.msra.mxu0 0.0
    %1080 = vmatpush.msra.mxu0 0.0
    %1081 = vmatpush.msra.mxu0 0.0
    %1082 = vmatpush.msra.mxu0 0.0
    %1083 = vmatpush.msra.mxu0 0.0
    %1084 = vmatpush.msra.mxu0 0.0
    %1085 = vmatpush.msra.mxu0 0.0
    %1086 = vmatpush.msra.mxu0 0.0
    %1087 = vmatpush.msra.mxu0 0.0
    %1088 = vmatpush.msra.mxu0 0.0
    %1089 = vmatpush.msra.mxu0 0.0
    %1090 = vmatpush.msra.mxu0 0.0
    %1091 = vmatpush.msra.mxu0 0.0
    %1092 = vmatpush.msra.mxu0 %v1075
    %1093 = vmatmul.f32.gmra.mxu0 %v1072
    %v1094 = vpop.f32.mrf.mxu0
    %v1095 = vadd.f32 0.0, %v1094
    %1096 = vdwg.mxu0
    %v1097 = vadd.f32 %v923, %v1095
    %1098 = vmatpush.msra.mxu0 0.0
    %1099 = vmatpush.msra.mxu0 0.0
    %1100 = vmatpush.msra.mxu0 0.0
    %1101 = vmatpush.msra.mxu0 0.0
    %1102 = vmatpush.msra.mxu0 0.0
    %1103 = vmatpush.msra.mxu0 0.0
    %1104 = vmatpush.msra.mxu0 0.0
    %1105 = vmatpush.msra.mxu0 0.0
    %1106 = vmatpush.msra.mxu0 0.0
    %1107 = vmatpush.msra.mxu0 0.0
    %1108 = vmatpush.msra.mxu0 0.0
    %1109 = vmatpush.msra.mxu0 0.0
    %1110 = vmatpush.msra.mxu0 0.0
    %1111 = vmatpush.msra.mxu0 0.0
    %1112 = vmatpush.msra.mxu0 0.0
    %1113 = vmatpush.msra.mxu0 %v223
    %1114 = vmatmul.f32.gmra.mxu0 %v1072
    %v1115 = vpop.f32.mrf.mxu0
    %v1116 = vadd.f32 %v216, %v1115
    %1117 = vdwg.mxu0
    %s1118 = scalar_lea.vmem [#allocation2], 40
    %v1119 = vld [vmem:[%s1118] sm:$0xff]
    %1120 = vmatpush.msra.mxu0 0.0
    %1121 = vmatpush.msra.mxu0 0.0
    %1122 = vmatpush.msra.mxu0 0.0
    %1123 = vmatpush.msra.mxu0 0.0
    %1124 = vmatpush.msra.mxu0 0.0
    %1125 = vmatpush.msra.mxu0 0.0
    %1126 = vmatpush.msra.mxu0 0.0
    %1127 = vmatpush.msra.mxu0 0.0
    %1128 = vmatpush.msra.mxu0 0.0
    %1129 = vmatpush.msra.mxu0 0.0
    %1130 = vmatpush.msra.mxu0 0.0
    %1131 = vmatpush.msra.mxu0 0.0
    %1132 = vmatpush.msra.mxu0 0.0
    %1133 = vmatpush.msra.mxu0 0.0
    %1134 = vmatpush.msra.mxu0 0.0
    %1135 = vmatpush.msra.mxu0 %v247
    %1136 = vmatmul.f32.gmra.mxu0 %v1008
    %v1137 = vpop.f32.mrf.mxu0
    %v1138 = vadd.f32 0.0, %v1137
    %1139 = vdwg.mxu0
    %v1140 = vadd.f32 %v1119, %v1138
    %v1141 = vxor.u32 %v1140, 2147483648
    %v1142 = vmul.f32 %v1141, 1.442695
    %v1143 = vpow.pop %v1142
    %v1144 = vadd.f32 %v1143, 1.0
    %v1145 = vrcp.pop %v1144
    %v1146 = vmul.f32 %v1144, %v1145
    %v1147 = vsub.f32 1.0, %v1146
    %v1148 = vmul.f32 %v1145, %v1147
    %v1149 = vadd.f32 %v1145, %v1148
    %vm1150 = vweird.f32 %v1144
    %vm1151 = vweird.f32 %v1145
    %vm1152 = vmor %vm1150, %vm1151
    %v1153 = vsel %vm1152, %v1145, %v1149
    %v1154 = vand.u32 2147483647, %v1144
    %vm1155 = vcmp.eq.f32.partialorder %v1154, 8.507059e+37
    %v1156 = vand.u32 %v1144, 2147483648
    %v1157 = vor.u32 1.1754944e-38, %v1156
    %v1158 = vsel %vm1155, %v1157, %v1153
    %v1159 = vmul.f32 1.0, %v1158
    %v1160 = vmul.f32 %v1159, 2.0
    %v1161 = vsub.f32 %v1160, 1.0
    %v1162 = vmul.f32 %v1159, %v998
    %1164 = vrot.lane.b32.xlu0 %v1161, 116
    %v1165 = vpop.permute.xlu0 %1164
    %v1167 = vmul.f32 %v1159, %v1165
    %1169 = vrot.lane.b32.xlu0 %v1167, 6
    %v1170 = vpop.permute.xlu0 %1169
    %v1172 = vadd.f32 %v1162, %v1170
    %v1173 = vtanh.pop %v1172
    %1175 = vrot.lane.b32.xlu0 %v1173, 12
    %v1176 = vpop.permute.xlu0 %1175
    %v1178 = vmul.f32 %v1159, %v1176
    %1180 = vrot.lane.b32.xlu0 %v1178, 110
    %v1181 = vpop.permute.xlu0 %1180
    %v1182 = vsel %vm217, %v1181, 0
    %1184 = vmatpush.msra.mxu0 0.0
    %1185 = vmatpush.msra.mxu0 0.0
    %1186 = vmatpush.msra.mxu0 0.0
    %1187 = vmatpush.msra.mxu0 0.0
    %1188 = vmatpush.msra.mxu0 0.0
    %1189 = vmatpush.msra.mxu0 0.0
    %1190 = vmatpush.msra.mxu0 0.0
    %1191 = vmatpush.msra.mxu0 0.0
    %1192 = vmatpush.msra.mxu0 0.0
    %1193 = vmatpush.msra.mxu0 0.0
    %1194 = vmatpush.msra.mxu0 0.0
    %1195 = vmatpush.msra.mxu0 0.0
    %1196 = vmatpush.msra.mxu0 0.0
    %1197 = vmatpush.msra.mxu0 0.0
    %1198 = vmatpush.msra.mxu0 0.0
    %1199 = vmatpush.msra.mxu0 %v314
    %1200 = vmatmul.f32.gmra.mxu0 %v1182
    %v1201 = vpop.f32.mrf.mxu0
    %v1202 = vadd.f32 %v1116, %v1201
    %1203 = vdwg.mxu0
    %v1204 = vxor.u32 %v1202, 2147483648
    %v1205 = vmul.f32 %v1204, 1.442695
    %v1206 = vpow.pop %v1205
    %v1207 = vadd.f32 %v1206, 1.0
    %v1208 = vrcp.pop %v1207
    %v1209 = vmul.f32 %v1207, %v1208
    %v1210 = vsub.f32 1.0, %v1209
    %v1211 = vmul.f32 %v1208, %v1210
    %v1212 = vadd.f32 %v1208, %v1211
    %vm1213 = vweird.f32 %v1207
    %vm1214 = vweird.f32 %v1208
    %vm1215 = vmor %vm1213, %vm1214
    %v1216 = vsel %vm1215, %v1208, %v1212
    %v1217 = vand.u32 2147483647, %v1207
    %vm1218 = vcmp.eq.f32.partialorder %v1217, 8.507059e+37
    %v1219 = vand.u32 %v1207, 2147483648
    %v1220 = vor.u32 1.1754944e-38, %v1219
    %v1221 = vsel %vm1218, %v1220, %v1216
    %v1222 = vmul.f32 1.0, %v1221
    %v1223 = vmul.f32 %v1222, 2.0
    %v1224 = vsub.f32 %v1223, 1.0
    %v1225 = vmul.f32 %v1222, %v1061
    %1227 = vrot.lane.b32.xlu0 %v1224, 116
    %v1228 = vpop.permute.xlu0 %1227
    %v1230 = vmul.f32 %v1222, %v1228
    %1232 = vrot.lane.b32.xlu0 %v1230, 6
    %v1233 = vpop.permute.xlu0 %1232
    %v1235 = vadd.f32 %v1225, %v1233
    %v1236 = vtanh.pop %v1235
    %1238 = vrot.lane.b32.xlu0 %v1236, 12
    %v1239 = vpop.permute.xlu0 %1238
    %v1241 = vmul.f32 %v1222, %v1239
    %v1242 = vld [vmem:[#allocation3 + $0x48] sm:$0x3f]
    %1244 = vrot.lane.b32.xlu0 %v1241, 110
    %v1245 = vpop.permute.xlu0 %1244
    %v1246 = vsel %vm217, %v1245, 0
    %v1249 = vsel %vm221, %v1242, 0
    %1251 = vmatpush.msra.mxu0 0.0
    %1252 = vmatpush.msra.mxu0 0.0
    %1253 = vmatpush.msra.mxu0 0.0
    %1254 = vmatpush.msra.mxu0 0.0
    %1255 = vmatpush.msra.mxu0 0.0
    %1256 = vmatpush.msra.mxu0 0.0
    %1257 = vmatpush.msra.mxu0 0.0
    %1258 = vmatpush.msra.mxu0 0.0
    %1259 = vmatpush.msra.mxu0 0.0
    %1260 = vmatpush.msra.mxu0 0.0
    %1261 = vmatpush.msra.mxu0 0.0
    %1262 = vmatpush.msra.mxu0 0.0
    %1263 = vmatpush.msra.mxu0 0.0
    %1264 = vmatpush.msra.mxu0 0.0
    %1265 = vmatpush.msra.mxu0 0.0
    %1266 = vmatpush.msra.mxu0 %v1249
    %1267 = vmatmul.f32.gmra.mxu0 %v1246
    %v1268 = vpop.f32.mrf.mxu0
    %v1269 = vadd.f32 0.0, %v1268
    %1270 = vdwg.mxu0
    %v1271 = vadd.f32 %v1097, %v1269
    %1272 = vmatpush.msra.mxu0 0.0
    %1273 = vmatpush.msra.mxu0 0.0
    %1274 = vmatpush.msra.mxu0 0.0
    %1275 = vmatpush.msra.mxu0 0.0
    %1276 = vmatpush.msra.mxu0 0.0
    %1277 = vmatpush.msra.mxu0 0.0
    %1278 = vmatpush.msra.mxu0 0.0
    %1279 = vmatpush.msra.mxu0 0.0
    %1280 = vmatpush.msra.mxu0 0.0
    %1281 = vmatpush.msra.mxu0 0.0
    %1282 = vmatpush.msra.mxu0 0.0
    %1283 = vmatpush.msra.mxu0 0.0
    %1284 = vmatpush.msra.mxu0 0.0
    %1285 = vmatpush.msra.mxu0 0.0
    %1286 = vmatpush.msra.mxu0 0.0
    %1287 = vmatpush.msra.mxu0 %v223
    %1288 = vmatmul.f32.gmra.mxu0 %v1246
    %v1289 = vpop.f32.mrf.mxu0
    %v1290 = vadd.f32 %v216, %v1289
    %1291 = vdwg.mxu0
    %s1292 = scalar_lea.vmem [#allocation2], 48
    %v1293 = vld [vmem:[%s1292] sm:$0xff]
    %1294 = vmatpush.msra.mxu0 0.0
    %1295 = vmatpush.msra.mxu0 0.0
    %1296 = vmatpush.msra.mxu0 0.0
    %1297 = vmatpush.msra.mxu0 0.0
    %1298 = vmatpush.msra.mxu0 0.0
    %1299 = vmatpush.msra.mxu0 0.0
    %1300 = vmatpush.msra.mxu0 0.0
    %1301 = vmatpush.msra.mxu0 0.0
    %1302 = vmatpush.msra.mxu0 0.0
    %1303 = vmatpush.msra.mxu0 0.0
    %1304 = vmatpush.msra.mxu0 0.0
    %1305 = vmatpush.msra.mxu0 0.0
    %1306 = vmatpush.msra.mxu0 0.0
    %1307 = vmatpush.msra.mxu0 0.0
    %1308 = vmatpush.msra.mxu0 0.0
    %1309 = vmatpush.msra.mxu0 %v247
    %1310 = vmatmul.f32.gmra.mxu0 %v1182
    %v1311 = vpop.f32.mrf.mxu0
    %v1312 = vadd.f32 0.0, %v1311
    %1313 = vdwg.mxu0
    %v1314 = vadd.f32 %v1293, %v1312
    %v1315 = vxor.u32 %v1314, 2147483648
    %v1316 = vmul.f32 %v1315, 1.442695
    %v1317 = vpow.pop %v1316
    %v1318 = vadd.f32 %v1317, 1.0
    %v1319 = vrcp.pop %v1318
    %v1320 = vmul.f32 %v1318, %v1319
    %v1321 = vsub.f32 1.0, %v1320
    %v1322 = vmul.f32 %v1319, %v1321
    %v1323 = vadd.f32 %v1319, %v1322
    %vm1324 = vweird.f32 %v1318
    %vm1325 = vweird.f32 %v1319
    %vm1326 = vmor %vm1324, %vm1325
    %v1327 = vsel %vm1326, %v1319, %v1323
    %v1328 = vand.u32 2147483647, %v1318
    %vm1329 = vcmp.eq.f32.partialorder %v1328, 8.507059e+37
    %v1330 = vand.u32 %v1318, 2147483648
    %v1331 = vor.u32 1.1754944e-38, %v1330
    %v1332 = vsel %vm1329, %v1331, %v1327
    %v1333 = vmul.f32 1.0, %v1332
    %v1334 = vmul.f32 %v1333, 2.0
    %v1335 = vsub.f32 %v1334, 1.0
    %v1336 = vmul.f32 %v1333, %v1172
    %1338 = vrot.lane.b32.xlu0 %v1335, 116
    %v1339 = vpop.permute.xlu0 %1338
    %v1341 = vmul.f32 %v1333, %v1339
    %1343 = vrot.lane.b32.xlu0 %v1341, 6
    %v1344 = vpop.permute.xlu0 %1343
    %v1346 = vadd.f32 %v1336, %v1344
    %v1347 = vtanh.pop %v1346
    %1349 = vrot.lane.b32.xlu0 %v1347, 12
    %v1350 = vpop.permute.xlu0 %1349
    %v1352 = vmul.f32 %v1333, %v1350
    %1354 = vrot.lane.b32.xlu0 %v1352, 110
    %v1355 = vpop.permute.xlu0 %1354
    %v1356 = vsel %vm217, %v1355, 0
    %1358 = vmatpush.msra.mxu0 0.0
    %1359 = vmatpush.msra.mxu0 0.0
    %1360 = vmatpush.msra.mxu0 0.0
    %1361 = vmatpush.msra.mxu0 0.0
    %1362 = vmatpush.msra.mxu0 0.0
    %1363 = vmatpush.msra.mxu0 0.0
    %1364 = vmatpush.msra.mxu0 0.0
    %1365 = vmatpush.msra.mxu0 0.0
    %1366 = vmatpush.msra.mxu0 0.0
    %1367 = vmatpush.msra.mxu0 0.0
    %1368 = vmatpush.msra.mxu0 0.0
    %1369 = vmatpush.msra.mxu0 0.0
    %1370 = vmatpush.msra.mxu0 0.0
    %1371 = vmatpush.msra.mxu0 0.0
    %1372 = vmatpush.msra.mxu0 0.0
    %1373 = vmatpush.msra.mxu0 %v314
    %1374 = vmatmul.f32.gmra.mxu0 %v1356
    %v1375 = vpop.f32.mrf.mxu0
    %v1376 = vadd.f32 %v1290, %v1375
    %1377 = vdwg.mxu0
    %v1378 = vxor.u32 %v1376, 2147483648
    %v1379 = vmul.f32 %v1378, 1.442695
    %v1380 = vpow.pop %v1379
    %v1381 = vadd.f32 %v1380, 1.0
    %v1382 = vrcp.pop %v1381
    %v1383 = vmul.f32 %v1381, %v1382
    %v1384 = vsub.f32 1.0, %v1383
    %v1385 = vmul.f32 %v1382, %v1384
    %v1386 = vadd.f32 %v1382, %v1385
    %vm1387 = vweird.f32 %v1381
    %vm1388 = vweird.f32 %v1382
    %vm1389 = vmor %vm1387, %vm1388
    %v1390 = vsel %vm1389, %v1382, %v1386
    %v1391 = vand.u32 2147483647, %v1381
    %vm1392 = vcmp.eq.f32.partialorder %v1391, 8.507059e+37
    %v1393 = vand.u32 %v1381, 2147483648
    %v1394 = vor.u32 1.1754944e-38, %v1393
    %v1395 = vsel %vm1392, %v1394, %v1390
    %v1396 = vmul.f32 1.0, %v1395
    %v1397 = vmul.f32 %v1396, 2.0
    %v1398 = vsub.f32 %v1397, 1.0
    %v1399 = vmul.f32 %v1396, %v1235
    %1401 = vrot.lane.b32.xlu0 %v1398, 116
    %v1402 = vpop.permute.xlu0 %1401
    %v1404 = vmul.f32 %v1396, %v1402
    %1406 = vrot.lane.b32.xlu0 %v1404, 6
    %v1407 = vpop.permute.xlu0 %1406
    %v1409 = vadd.f32 %v1399, %v1407
    %v1410 = vtanh.pop %v1409
    %1412 = vrot.lane.b32.xlu0 %v1410, 12
    %v1413 = vpop.permute.xlu0 %1412
    %v1415 = vmul.f32 %v1396, %v1413
    %v1416 = vld [vmem:[#allocation3 + $0x50] sm:$0x3f]
    %1418 = vrot.lane.b32.xlu0 %v1415, 110
    %v1419 = vpop.permute.xlu0 %1418
    %v1420 = vsel %vm217, %v1419, 0
    %v1423 = vsel %vm221, %v1416, 0
    %1425 = vmatpush.msra.mxu0 0.0
    %1426 = vmatpush.msra.mxu0 0.0
    %1427 = vmatpush.msra.mxu0 0.0
    %1428 = vmatpush.msra.mxu0 0.0
    %1429 = vmatpush.msra.mxu0 0.0
    %1430 = vmatpush.msra.mxu0 0.0
    %1431 = vmatpush.msra.mxu0 0.0
    %1432 = vmatpush.msra.mxu0 0.0
    %1433 = vmatpush.msra.mxu0 0.0
    %1434 = vmatpush.msra.mxu0 0.0
    %1435 = vmatpush.msra.mxu0 0.0
    %1436 = vmatpush.msra.mxu0 0.0
    %1437 = vmatpush.msra.mxu0 0.0
    %1438 = vmatpush.msra.mxu0 0.0
    %1439 = vmatpush.msra.mxu0 0.0
    %1440 = vmatpush.msra.mxu0 %v1423
    %1441 = vmatmul.f32.gmra.mxu0 %v1420
    %v1442 = vpop.f32.mrf.mxu0
    %v1443 = vadd.f32 0.0, %v1442
    %1444 = vdwg.mxu0
    %v1445 = vadd.f32 %v1271, %v1443
    %1446 = vmatpush.msra.mxu0 0.0
    %1447 = vmatpush.msra.mxu0 0.0
    %1448 = vmatpush.msra.mxu0 0.0
    %1449 = vmatpush.msra.mxu0 0.0
    %1450 = vmatpush.msra.mxu0 0.0
    %1451 = vmatpush.msra.mxu0 0.0
    %1452 = vmatpush.msra.mxu0 0.0
    %1453 = vmatpush.msra.mxu0 0.0
    %1454 = vmatpush.msra.mxu0 0.0
    %1455 = vmatpush.msra.mxu0 0.0
    %1456 = vmatpush.msra.mxu0 0.0
    %1457 = vmatpush.msra.mxu0 0.0
    %1458 = vmatpush.msra.mxu0 0.0
    %1459 = vmatpush.msra.mxu0 0.0
    %1460 = vmatpush.msra.mxu0 0.0
    %1461 = vmatpush.msra.mxu0 %v223
    %1462 = vmatmul.f32.gmra.mxu0 %v1420
    %v1463 = vpop.f32.mrf.mxu0
    %v1464 = vadd.f32 %v216, %v1463
    %1465 = vdwg.mxu0
    %s1466 = scalar_lea.vmem [#allocation2], 56
    %v1467 = vld [vmem:[%s1466] sm:$0xff]
    %1468 = vmatpush.msra.mxu0 0.0
    %1469 = vmatpush.msra.mxu0 0.0
    %1470 = vmatpush.msra.mxu0 0.0
    %1471 = vmatpush.msra.mxu0 0.0
    %1472 = vmatpush.msra.mxu0 0.0
    %1473 = vmatpush.msra.mxu0 0.0
    %1474 = vmatpush.msra.mxu0 0.0
    %1475 = vmatpush.msra.mxu0 0.0
    %1476 = vmatpush.msra.mxu0 0.0
    %1477 = vmatpush.msra.mxu0 0.0
    %1478 = vmatpush.msra.mxu0 0.0
    %1479 = vmatpush.msra.mxu0 0.0
    %1480 = vmatpush.msra.mxu0 0.0
    %1481 = vmatpush.msra.mxu0 0.0
    %1482 = vmatpush.msra.mxu0 0.0
    %1483 = vmatpush.msra.mxu0 %v247
    %1484 = vmatmul.f32.gmra.mxu0 %v1356
    %v1485 = vpop.f32.mrf.mxu0
    %v1486 = vadd.f32 0.0, %v1485
    %1487 = vdwg.mxu0
    %v1488 = vadd.f32 %v1467, %v1486
    %v1489 = vxor.u32 %v1488, 2147483648
    %v1490 = vmul.f32 %v1489, 1.442695
    %v1491 = vpow.pop %v1490
    %v1492 = vadd.f32 %v1491, 1.0
    %v1493 = vrcp.pop %v1492
    %v1494 = vmul.f32 %v1492, %v1493
    %v1495 = vsub.f32 1.0, %v1494
    %v1496 = vmul.f32 %v1493, %v1495
    %v1497 = vadd.f32 %v1493, %v1496
    %vm1498 = vweird.f32 %v1492
    %vm1499 = vweird.f32 %v1493
    %vm1500 = vmor %vm1498, %vm1499
    %v1501 = vsel %vm1500, %v1493, %v1497
    %v1502 = vand.u32 2147483647, %v1492
    %vm1503 = vcmp.eq.f32.partialorder %v1502, 8.507059e+37
    %v1504 = vand.u32 %v1492, 2147483648
    %v1505 = vor.u32 1.1754944e-38, %v1504
    %v1506 = vsel %vm1503, %v1505, %v1501
    %v1507 = vmul.f32 1.0, %v1506
    %v1508 = vmul.f32 %v1507, 2.0
    %v1509 = vsub.f32 %v1508, 1.0
    %v1510 = vmul.f32 %v1507, %v1346
    %1512 = vrot.lane.b32.xlu0 %v1509, 116
    %v1513 = vpop.permute.xlu0 %1512
    %v1515 = vmul.f32 %v1507, %v1513
    %1517 = vrot.lane.b32.xlu0 %v1515, 6
    %v1518 = vpop.permute.xlu0 %1517
    %v1520 = vadd.f32 %v1510, %v1518
    %v1521 = vtanh.pop %v1520
    %1523 = vrot.lane.b32.xlu0 %v1521, 12
    %v1524 = vpop.permute.xlu0 %1523
    %v1526 = vmul.f32 %v1507, %v1524
    %1528 = vrot.lane.b32.xlu0 %v1526, 110
    %v1529 = vpop.permute.xlu0 %1528
    %v1530 = vsel %vm217, %v1529, 0
    %1532 = vmatpush.msra.mxu0 0.0
    %1533 = vmatpush.msra.mxu0 0.0
    %1534 = vmatpush.msra.mxu0 0.0
    %1535 = vmatpush.msra.mxu0 0.0
    %1536 = vmatpush.msra.mxu0 0.0
    %1537 = vmatpush.msra.mxu0 0.0
    %1538 = vmatpush.msra.mxu0 0.0
    %1539 = vmatpush.msra.mxu0 0.0
    %1540 = vmatpush.msra.mxu0 0.0
    %1541 = vmatpush.msra.mxu0 0.0
    %1542 = vmatpush.msra.mxu0 0.0
    %1543 = vmatpush.msra.mxu0 0.0
    %1544 = vmatpush.msra.mxu0 0.0
    %1545 = vmatpush.msra.mxu0 0.0
    %1546 = vmatpush.msra.mxu0 0.0
    %1547 = vmatpush.msra.mxu0 %v314
    %1548 = vmatmul.f32.gmra.mxu0 %v1530
    %v1549 = vpop.f32.mrf.mxu0
    %v1550 = vadd.f32 %v1464, %v1549
    %1551 = vdwg.mxu0
    %v1552 = vxor.u32 %v1550, 2147483648
    %v1553 = vmul.f32 %v1552, 1.442695
    %v1554 = vpow.pop %v1553
    %v1555 = vadd.f32 %v1554, 1.0
    %v1556 = vrcp.pop %v1555
    %v1557 = vmul.f32 %v1555, %v1556
    %v1558 = vsub.f32 1.0, %v1557
    %v1559 = vmul.f32 %v1556, %v1558
    %v1560 = vadd.f32 %v1556, %v1559
    %vm1561 = vweird.f32 %v1555
    %vm1562 = vweird.f32 %v1556
    %vm1563 = vmor %vm1561, %vm1562
    %v1564 = vsel %vm1563, %v1556, %v1560
    %v1565 = vand.u32 2147483647, %v1555
    %vm1566 = vcmp.eq.f32.partialorder %v1565, 8.507059e+37
    %v1567 = vand.u32 %v1555, 2147483648
    %v1568 = vor.u32 1.1754944e-38, %v1567
    %v1569 = vsel %vm1566, %v1568, %v1564
    %v1570 = vmul.f32 1.0, %v1569
    %v1571 = vmul.f32 %v1570, 2.0
    %v1572 = vsub.f32 %v1571, 1.0
    %v1573 = vmul.f32 %v1570, %v1409
    %1575 = vrot.lane.b32.xlu0 %v1572, 116
    %v1576 = vpop.permute.xlu0 %1575
    %v1578 = vmul.f32 %v1570, %v1576
    %1580 = vrot.lane.b32.xlu0 %v1578, 6
    %v1581 = vpop.permute.xlu0 %1580
    %v1583 = vadd.f32 %v1573, %v1581
    %v1584 = vtanh.pop %v1583
    %1586 = vrot.lane.b32.xlu0 %v1584, 12
    %v1587 = vpop.permute.xlu0 %1586
    %v1589 = vmul.f32 %v1570, %v1587
    %v1590 = vld [vmem:[#allocation3 + $0x58] sm:$0x3f]
    %1592 = vrot.lane.b32.xlu0 %v1589, 110
    %v1593 = vpop.permute.xlu0 %1592
    %v1594 = vsel %vm217, %v1593, 0
    %v1597 = vsel %vm221, %v1590, 0
    %1599 = vmatpush.msra.mxu0 0.0
    %1600 = vmatpush.msra.mxu0 0.0
    %1601 = vmatpush.msra.mxu0 0.0
    %1602 = vmatpush.msra.mxu0 0.0
    %1603 = vmatpush.msra.mxu0 0.0
    %1604 = vmatpush.msra.mxu0 0.0
    %1605 = vmatpush.msra.mxu0 0.0
    %1606 = vmatpush.msra.mxu0 0.0
    %1607 = vmatpush.msra.mxu0 0.0
    %1608 = vmatpush.msra.mxu0 0.0
    %1609 = vmatpush.msra.mxu0 0.0
    %1610 = vmatpush.msra.mxu0 0.0
    %1611 = vmatpush.msra.mxu0 0.0
    %1612 = vmatpush.msra.mxu0 0.0
    %1613 = vmatpush.msra.mxu0 0.0
    %1614 = vmatpush.msra.mxu0 %v1597
    %1615 = vmatmul.f32.gmra.mxu0 %v1594
    %v1616 = vpop.f32.mrf.mxu0
    %v1617 = vadd.f32 0.0, %v1616
    %1618 = vdwg.mxu0
    %v1619 = vadd.f32 %v1445, %v1617
    %1620 = vmatpush.msra.mxu0 0.0
    %1621 = vmatpush.msra.mxu0 0.0
    %1622 = vmatpush.msra.mxu0 0.0
    %1623 = vmatpush.msra.mxu0 0.0
    %1624 = vmatpush.msra.mxu0 0.0
    %1625 = vmatpush.msra.mxu0 0.0
    %1626 = vmatpush.msra.mxu0 0.0
    %1627 = vmatpush.msra.mxu0 0.0
    %1628 = vmatpush.msra.mxu0 0.0
    %1629 = vmatpush.msra.mxu0 0.0
    %1630 = vmatpush.msra.mxu0 0.0
    %1631 = vmatpush.msra.mxu0 0.0
    %1632 = vmatpush.msra.mxu0 0.0
    %1633 = vmatpush.msra.mxu0 0.0
    %1634 = vmatpush.msra.mxu0 0.0
    %1635 = vmatpush.msra.mxu0 %v223
    %1636 = vmatmul.f32.gmra.mxu0 %v1594
    %v1637 = vpop.f32.mrf.mxu0
    %v1638 = vadd.f32 %v216, %v1637
    %1639 = vdwg.mxu0
    %s1640 = scalar_lea.vmem [#allocation2], 64
    %v1641 = vld [vmem:[%s1640] sm:$0xff]
    %1642 = vmatpush.msra.mxu0 0.0
    %1643 = vmatpush.msra.mxu0 0.0
    %1644 = vmatpush.msra.mxu0 0.0
    %1645 = vmatpush.msra.mxu0 0.0
    %1646 = vmatpush.msra.mxu0 0.0
    %1647 = vmatpush.msra.mxu0 0.0
    %1648 = vmatpush.msra.mxu0 0.0
    %1649 = vmatpush.msra.mxu0 0.0
    %1650 = vmatpush.msra.mxu0 0.0
    %1651 = vmatpush.msra.mxu0 0.0
    %1652 = vmatpush.msra.mxu0 0.0
    %1653 = vmatpush.msra.mxu0 0.0
    %1654 = vmatpush.msra.mxu0 0.0
    %1655 = vmatpush.msra.mxu0 0.0
    %1656 = vmatpush.msra.mxu0 0.0
    %1657 = vmatpush.msra.mxu0 %v247
    %1658 = vmatmul.f32.gmra.mxu0 %v1530
    %v1659 = vpop.f32.mrf.mxu0
    %v1660 = vadd.f32 0.0, %v1659
    %1661 = vdwg.mxu0
    %v1662 = vadd.f32 %v1641, %v1660
    %v1663 = vxor.u32 %v1662, 2147483648
    %v1664 = vmul.f32 %v1663, 1.442695
    %v1665 = vpow.pop %v1664
    %v1666 = vadd.f32 %v1665, 1.0
    %v1667 = vrcp.pop %v1666
    %v1668 = vmul.f32 %v1666, %v1667
    %v1669 = vsub.f32 1.0, %v1668
    %v1670 = vmul.f32 %v1667, %v1669
    %v1671 = vadd.f32 %v1667, %v1670
    %vm1672 = vweird.f32 %v1666
    %vm1673 = vweird.f32 %v1667
    %vm1674 = vmor %vm1672, %vm1673
    %v1675 = vsel %vm1674, %v1667, %v1671
    %v1676 = vand.u32 2147483647, %v1666
    %vm1677 = vcmp.eq.f32.partialorder %v1676, 8.507059e+37
    %v1678 = vand.u32 %v1666, 2147483648
    %v1679 = vor.u32 1.1754944e-38, %v1678
    %v1680 = vsel %vm1677, %v1679, %v1675
    %v1681 = vmul.f32 1.0, %v1680
    %v1682 = vmul.f32 %v1681, 2.0
    %v1683 = vsub.f32 %v1682, 1.0
    %v1684 = vmul.f32 %v1681, %v1520
    %1686 = vrot.lane.b32.xlu0 %v1683, 116
    %v1687 = vpop.permute.xlu0 %1686
    %v1689 = vmul.f32 %v1681, %v1687
    %1691 = vrot.lane.b32.xlu0 %v1689, 6
    %v1692 = vpop.permute.xlu0 %1691
    %v1694 = vadd.f32 %v1684, %v1692
    %v1695 = vtanh.pop %v1694
    %1697 = vrot.lane.b32.xlu0 %v1695, 12
    %v1698 = vpop.permute.xlu0 %1697
    %v1700 = vmul.f32 %v1681, %v1698
    %1702 = vrot.lane.b32.xlu0 %v1700, 110
    %v1703 = vpop.permute.xlu0 %1702
    %v1704 = vsel %vm217, %v1703, 0
    %1706 = vmatpush.msra.mxu0 0.0
    %1707 = vmatpush.msra.mxu0 0.0
    %1708 = vmatpush.msra.mxu0 0.0
    %1709 = vmatpush.msra.mxu0 0.0
    %1710 = vmatpush.msra.mxu0 0.0
    %1711 = vmatpush.msra.mxu0 0.0
    %1712 = vmatpush.msra.mxu0 0.0
    %1713 = vmatpush.msra.mxu0 0.0
    %1714 = vmatpush.msra.mxu0 0.0
    %1715 = vmatpush.msra.mxu0 0.0
    %1716 = vmatpush.msra.mxu0 0.0
    %1717 = vmatpush.msra.mxu0 0.0
    %1718 = vmatpush.msra.mxu0 0.0
    %1719 = vmatpush.msra.mxu0 0.0
    %1720 = vmatpush.msra.mxu0 0.0
    %1721 = vmatpush.msra.mxu0 %v314
    %1722 = vmatmul.f32.gmra.mxu0 %v1704
    %v1723 = vpop.f32.mrf.mxu0
    %v1724 = vadd.f32 %v1638, %v1723
    %1725 = vdwg.mxu0
    %v1726 = vxor.u32 %v1724, 2147483648
    %v1727 = vmul.f32 %v1726, 1.442695
    %v1728 = vpow.pop %v1727
    %v1729 = vadd.f32 %v1728, 1.0
    %v1730 = vrcp.pop %v1729
    %v1731 = vmul.f32 %v1729, %v1730
    %v1732 = vsub.f32 1.0, %v1731
    %v1733 = vmul.f32 %v1730, %v1732
    %v1734 = vadd.f32 %v1730, %v1733
    %vm1735 = vweird.f32 %v1729
    %vm1736 = vweird.f32 %v1730
    %vm1737 = vmor %vm1735, %vm1736
    %v1738 = vsel %vm1737, %v1730, %v1734
    %v1739 = vand.u32 2147483647, %v1729
    %vm1740 = vcmp.eq.f32.partialorder %v1739, 8.507059e+37
    %v1741 = vand.u32 %v1729, 2147483648
    %v1742 = vor.u32 1.1754944e-38, %v1741
    %v1743 = vsel %vm1740, %v1742, %v1738
    %v1744 = vmul.f32 1.0, %v1743
    %v1745 = vmul.f32 %v1744, 2.0
    %v1746 = vsub.f32 %v1745, 1.0
    %v1747 = vmul.f32 %v1744, %v1583
    %1749 = vrot.lane.b32.xlu0 %v1746, 116
    %v1750 = vpop.permute.xlu0 %1749
    %v1752 = vmul.f32 %v1744, %v1750
    %1754 = vrot.lane.b32.xlu0 %v1752, 6
    %v1755 = vpop.permute.xlu0 %1754
    %v1757 = vadd.f32 %v1747, %v1755
    %v1758 = vtanh.pop %v1757
    %1760 = vrot.lane.b32.xlu0 %v1758, 12
    %v1761 = vpop.permute.xlu0 %1760
    %v1763 = vmul.f32 %v1744, %v1761
    %v1764 = vld [vmem:[#allocation3 + $0x60] sm:$0x3f]
    %1766 = vrot.lane.b32.xlu0 %v1763, 110
    %v1767 = vpop.permute.xlu0 %1766
    %v1768 = vsel %vm217, %v1767, 0
    %v1771 = vsel %vm221, %v1764, 0
    %1773 = vmatpush.msra.mxu0 0.0
    %1774 = vmatpush.msra.mxu0 0.0
    %1775 = vmatpush.msra.mxu0 0.0
    %1776 = vmatpush.msra.mxu0 0.0
    %1777 = vmatpush.msra.mxu0 0.0
    %1778 = vmatpush.msra.mxu0 0.0
    %1779 = vmatpush.msra.mxu0 0.0
    %1780 = vmatpush.msra.mxu0 0.0
    %1781 = vmatpush.msra.mxu0 0.0
    %1782 = vmatpush.msra.mxu0 0.0
    %1783 = vmatpush.msra.mxu0 0.0
    %1784 = vmatpush.msra.mxu0 0.0
    %1785 = vmatpush.msra.mxu0 0.0
    %1786 = vmatpush.msra.mxu0 0.0
    %1787 = vmatpush.msra.mxu0 0.0
    %1788 = vmatpush.msra.mxu0 %v1771
    %1789 = vmatmul.f32.gmra.mxu0 %v1768
    %v1790 = vpop.f32.mrf.mxu0
    %v1791 = vadd.f32 0.0, %v1790
    %1792 = vdwg.mxu0
    %v1793 = vadd.f32 %v1619, %v1791
    %1794 = vmatpush.msra.mxu0 0.0
    %1795 = vmatpush.msra.mxu0 0.0
    %1796 = vmatpush.msra.mxu0 0.0
    %1797 = vmatpush.msra.mxu0 0.0
    %1798 = vmatpush.msra.mxu0 0.0
    %1799 = vmatpush.msra.mxu0 0.0
    %1800 = vmatpush.msra.mxu0 0.0
    %1801 = vmatpush.msra.mxu0 0.0
    %1802 = vmatpush.msra.mxu0 0.0
    %1803 = vmatpush.msra.mxu0 0.0
    %1804 = vmatpush.msra.mxu0 0.0
    %1805 = vmatpush.msra.mxu0 0.0
    %1806 = vmatpush.msra.mxu0 0.0
    %1807 = vmatpush.msra.mxu0 0.0
    %1808 = vmatpush.msra.mxu0 0.0
    %1809 = vmatpush.msra.mxu0 %v223
    %1810 = vmatmul.f32.gmra.mxu0 %v1768
    %v1811 = vpop.f32.mrf.mxu0
    %v1812 = vadd.f32 %v216, %v1811
    %1813 = vdwg.mxu0
    %s1814 = scalar_lea.vmem [#allocation2], 72
    %v1815 = vld [vmem:[%s1814] sm:$0xff]
    %1816 = vmatpush.msra.mxu0 0.0
    %1817 = vmatpush.msra.mxu0 0.0
    %1818 = vmatpush.msra.mxu0 0.0
    %1819 = vmatpush.msra.mxu0 0.0
    %1820 = vmatpush.msra.mxu0 0.0
    %1821 = vmatpush.msra.mxu0 0.0
    %1822 = vmatpush.msra.mxu0 0.0
    %1823 = vmatpush.msra.mxu0 0.0
    %1824 = vmatpush.msra.mxu0 0.0
    %1825 = vmatpush.msra.mxu0 0.0
    %1826 = vmatpush.msra.mxu0 0.0
    %1827 = vmatpush.msra.mxu0 0.0
    %1828 = vmatpush.msra.mxu0 0.0
    %1829 = vmatpush.msra.mxu0 0.0
    %1830 = vmatpush.msra.mxu0 0.0
    %1831 = vmatpush.msra.mxu0 %v247
    %1832 = vmatmul.f32.gmra.mxu0 %v1704
    %v1833 = vpop.f32.mrf.mxu0
    %v1834 = vadd.f32 0.0, %v1833
    %1835 = vdwg.mxu0
    %v1836 = vadd.f32 %v1815, %v1834
    %v1837 = vxor.u32 %v1836, 2147483648
    %v1838 = vmul.f32 %v1837, 1.442695
    %v1839 = vpow.pop %v1838
    %v1840 = vadd.f32 %v1839, 1.0
    %v1841 = vrcp.pop %v1840
    %v1842 = vmul.f32 %v1840, %v1841
    %v1843 = vsub.f32 1.0, %v1842
    %v1844 = vmul.f32 %v1841, %v1843
    %v1845 = vadd.f32 %v1841, %v1844
    %vm1846 = vweird.f32 %v1840
    %vm1847 = vweird.f32 %v1841
    %vm1848 = vmor %vm1846, %vm1847
    %v1849 = vsel %vm1848, %v1841, %v1845
    %v1850 = vand.u32 2147483647, %v1840
    %vm1851 = vcmp.eq.f32.partialorder %v1850, 8.507059e+37
    %v1852 = vand.u32 %v1840, 2147483648
    %v1853 = vor.u32 1.1754944e-38, %v1852
    %v1854 = vsel %vm1851, %v1853, %v1849
    %v1855 = vmul.f32 1.0, %v1854
    %v1856 = vmul.f32 %v1855, 2.0
    %v1857 = vsub.f32 %v1856, 1.0
    %v1858 = vmul.f32 %v1855, %v1694
    %1860 = vrot.lane.b32.xlu0 %v1857, 116
    %v1861 = vpop.permute.xlu0 %1860
    %v1863 = vmul.f32 %v1855, %v1861
    %1865 = vrot.lane.b32.xlu0 %v1863, 6
    %v1866 = vpop.permute.xlu0 %1865
    %v1868 = vadd.f32 %v1858, %v1866
    %v1869 = vtanh.pop %v1868
    %1871 = vrot.lane.b32.xlu0 %v1869, 12
    %v1872 = vpop.permute.xlu0 %1871
    %v1874 = vmul.f32 %v1855, %v1872
    %1876 = vrot.lane.b32.xlu0 %v1874, 110
    %v1877 = vpop.permute.xlu0 %1876
    %v1878 = vsel %vm217, %v1877, 0
    %1880 = vmatpush.msra.mxu0 0.0
    %1881 = vmatpush.msra.mxu0 0.0
    %1882 = vmatpush.msra.mxu0 0.0
    %1883 = vmatpush.msra.mxu0 0.0
    %1884 = vmatpush.msra.mxu0 0.0
    %1885 = vmatpush.msra.mxu0 0.0
    %1886 = vmatpush.msra.mxu0 0.0
    %1887 = vmatpush.msra.mxu0 0.0
    %1888 = vmatpush.msra.mxu0 0.0
    %1889 = vmatpush.msra.mxu0 0.0
    %1890 = vmatpush.msra.mxu0 0.0
    %1891 = vmatpush.msra.mxu0 0.0
    %1892 = vmatpush.msra.mxu0 0.0
    %1893 = vmatpush.msra.mxu0 0.0
    %1894 = vmatpush.msra.mxu0 0.0
    %1895 = vmatpush.msra.mxu0 %v314
    %1896 = vmatmul.f32.gmra.mxu0 %v1878
    %v1897 = vpop.f32.mrf.mxu0
    %v1898 = vadd.f32 %v1812, %v1897
    %1899 = vdwg.mxu0
    %v1900 = vxor.u32 %v1898, 2147483648
    %v1901 = vmul.f32 %v1900, 1.442695
    %v1902 = vpow.pop %v1901
    %v1903 = vadd.f32 %v1902, 1.0
    %v1904 = vrcp.pop %v1903
    %v1905 = vmul.f32 %v1903, %v1904
    %v1906 = vsub.f32 1.0, %v1905
    %v1907 = vmul.f32 %v1904, %v1906
    %v1908 = vadd.f32 %v1904, %v1907
    %vm1909 = vweird.f32 %v1903
    %vm1910 = vweird.f32 %v1904
    %vm1911 = vmor %vm1909, %vm1910
    %v1912 = vsel %vm1911, %v1904, %v1908
    %v1913 = vand.u32 2147483647, %v1903
    %vm1914 = vcmp.eq.f32.partialorder %v1913, 8.507059e+37
    %v1915 = vand.u32 %v1903, 2147483648
    %v1916 = vor.u32 1.1754944e-38, %v1915
    %v1917 = vsel %vm1914, %v1916, %v1912
    %v1918 = vmul.f32 1.0, %v1917
    %v1919 = vmul.f32 %v1918, 2.0
    %v1920 = vsub.f32 %v1919, 1.0
    %v1921 = vmul.f32 %v1918, %v1757
    %1923 = vrot.lane.b32.xlu0 %v1920, 116
    %v1924 = vpop.permute.xlu0 %1923
    %v1926 = vmul.f32 %v1918, %v1924
    %1928 = vrot.lane.b32.xlu0 %v1926, 6
    %v1929 = vpop.permute.xlu0 %1928
    %v1931 = vadd.f32 %v1921, %v1929
    %v1932 = vtanh.pop %v1931
    %1934 = vrot.lane.b32.xlu0 %v1932, 12
    %v1935 = vpop.permute.xlu0 %1934
    %v1937 = vmul.f32 %v1918, %v1935
    %v1938 = vld [vmem:[#allocation3 + $0x68] sm:$0x3f]
    %1940 = vrot.lane.b32.xlu0 %v1937, 110
    %v1941 = vpop.permute.xlu0 %1940
    %v1942 = vsel %vm217, %v1941, 0
    %v1945 = vsel %vm221, %v1938, 0
    %1947 = vmatpush.msra.mxu0 0.0
    %1948 = vmatpush.msra.mxu0 0.0
    %1949 = vmatpush.msra.mxu0 0.0
    %1950 = vmatpush.msra.mxu0 0.0
    %1951 = vmatpush.msra.mxu0 0.0
    %1952 = vmatpush.msra.mxu0 0.0
    %1953 = vmatpush.msra.mxu0 0.0
    %1954 = vmatpush.msra.mxu0 0.0
    %1955 = vmatpush.msra.mxu0 0.0
    %1956 = vmatpush.msra.mxu0 0.0
    %1957 = vmatpush.msra.mxu0 0.0
    %1958 = vmatpush.msra.mxu0 0.0
    %1959 = vmatpush.msra.mxu0 0.0
    %1960 = vmatpush.msra.mxu0 0.0
    %1961 = vmatpush.msra.mxu0 0.0
    %1962 = vmatpush.msra.mxu0 %v1945
    %1963 = vmatmul.f32.gmra.mxu0 %v1942
    %v1964 = vpop.f32.mrf.mxu0
    %v1965 = vadd.f32 0.0, %v1964
    %1966 = vdwg.mxu0
    %v1967 = vadd.f32 %v1793, %v1965
    %1968 = vmatpush.msra.mxu0 0.0
    %1969 = vmatpush.msra.mxu0 0.0
    %1970 = vmatpush.msra.mxu0 0.0
    %1971 = vmatpush.msra.mxu0 0.0
    %1972 = vmatpush.msra.mxu0 0.0
    %1973 = vmatpush.msra.mxu0 0.0
    %1974 = vmatpush.msra.mxu0 0.0
    %1975 = vmatpush.msra.mxu0 0.0
    %1976 = vmatpush.msra.mxu0 0.0
    %1977 = vmatpush.msra.mxu0 0.0
    %1978 = vmatpush.msra.mxu0 0.0
    %1979 = vmatpush.msra.mxu0 0.0
    %1980 = vmatpush.msra.mxu0 0.0
    %1981 = vmatpush.msra.mxu0 0.0
    %1982 = vmatpush.msra.mxu0 0.0
    %1983 = vmatpush.msra.mxu0 %v223
    %1984 = vmatmul.f32.gmra.mxu0 %v1942
    %v1985 = vpop.f32.mrf.mxu0
    %v1986 = vadd.f32 %v216, %v1985
    %1987 = vdwg.mxu0
    %s1988 = scalar_lea.vmem [#allocation2], 80
    %v1989 = vld [vmem:[%s1988] sm:$0xff]
    %1990 = vmatpush.msra.mxu0 0.0
    %1991 = vmatpush.msra.mxu0 0.0
    %1992 = vmatpush.msra.mxu0 0.0
    %1993 = vmatpush.msra.mxu0 0.0
    %1994 = vmatpush.msra.mxu0 0.0
    %1995 = vmatpush.msra.mxu0 0.0
    %1996 = vmatpush.msra.mxu0 0.0
    %1997 = vmatpush.msra.mxu0 0.0
    %1998 = vmatpush.msra.mxu0 0.0
    %1999 = vmatpush.msra.mxu0 0.0
    %2000 = vmatpush.msra.mxu0 0.0
    %2001 = vmatpush.msra.mxu0 0.0
    %2002 = vmatpush.msra.mxu0 0.0
    %2003 = vmatpush.msra.mxu0 0.0
    %2004 = vmatpush.msra.mxu0 0.0
    %2005 = vmatpush.msra.mxu0 %v247
    %2006 = vmatmul.f32.gmra.mxu0 %v1878
    %v2007 = vpop.f32.mrf.mxu0
    %v2008 = vadd.f32 0.0, %v2007
    %2009 = vdwg.mxu0
    %v2010 = vadd.f32 %v1989, %v2008
    %v2011 = vxor.u32 %v2010, 2147483648
    %v2012 = vmul.f32 %v2011, 1.442695
    %v2013 = vpow.pop %v2012
    %v2014 = vadd.f32 %v2013, 1.0
    %v2015 = vrcp.pop %v2014
    %v2016 = vmul.f32 %v2014, %v2015
    %v2017 = vsub.f32 1.0, %v2016
    %v2018 = vmul.f32 %v2015, %v2017
    %v2019 = vadd.f32 %v2015, %v2018
    %vm2020 = vweird.f32 %v2014
    %vm2021 = vweird.f32 %v2015
    %vm2022 = vmor %vm2020, %vm2021
    %v2023 = vsel %vm2022, %v2015, %v2019
    %v2024 = vand.u32 2147483647, %v2014
    %vm2025 = vcmp.eq.f32.partialorder %v2024, 8.507059e+37
    %v2026 = vand.u32 %v2014, 2147483648
    %v2027 = vor.u32 1.1754944e-38, %v2026
    %v2028 = vsel %vm2025, %v2027, %v2023
    %v2029 = vmul.f32 1.0, %v2028
    %v2030 = vmul.f32 %v2029, 2.0
    %v2031 = vsub.f32 %v2030, 1.0
    %v2032 = vmul.f32 %v2029, %v1868
    %2034 = vrot.lane.b32.xlu0 %v2031, 116
    %v2035 = vpop.permute.xlu0 %2034
    %v2037 = vmul.f32 %v2029, %v2035
    %2039 = vrot.lane.b32.xlu0 %v2037, 6
    %v2040 = vpop.permute.xlu0 %2039
    %v2042 = vadd.f32 %v2032, %v2040
    %v2043 = vtanh.pop %v2042
    %2045 = vrot.lane.b32.xlu0 %v2043, 12
    %v2046 = vpop.permute.xlu0 %2045
    %v2048 = vmul.f32 %v2029, %v2046
    %2050 = vrot.lane.b32.xlu0 %v2048, 110
    %v2051 = vpop.permute.xlu0 %2050
    %v2052 = vsel %vm217, %v2051, 0
    %2054 = vmatpush.msra.mxu0 0.0
    %2055 = vmatpush.msra.mxu0 0.0
    %2056 = vmatpush.msra.mxu0 0.0
    %2057 = vmatpush.msra.mxu0 0.0
    %2058 = vmatpush.msra.mxu0 0.0
    %2059 = vmatpush.msra.mxu0 0.0
    %2060 = vmatpush.msra.mxu0 0.0
    %2061 = vmatpush.msra.mxu0 0.0
    %2062 = vmatpush.msra.mxu0 0.0
    %2063 = vmatpush.msra.mxu0 0.0
    %2064 = vmatpush.msra.mxu0 0.0
    %2065 = vmatpush.msra.mxu0 0.0
    %2066 = vmatpush.msra.mxu0 0.0
    %2067 = vmatpush.msra.mxu0 0.0
    %2068 = vmatpush.msra.mxu0 0.0
    %2069 = vmatpush.msra.mxu0 %v314
    %2070 = vmatmul.f32.gmra.mxu0 %v2052
    %v2071 = vpop.f32.mrf.mxu0
    %v2072 = vadd.f32 %v1986, %v2071
    %2073 = vdwg.mxu0
    %v2074 = vxor.u32 %v2072, 2147483648
    %v2075 = vmul.f32 %v2074, 1.442695
    %v2076 = vpow.pop %v2075
    %v2077 = vadd.f32 %v2076, 1.0
    %v2078 = vrcp.pop %v2077
    %v2079 = vmul.f32 %v2077, %v2078
    %v2080 = vsub.f32 1.0, %v2079
    %v2081 = vmul.f32 %v2078, %v2080
    %v2082 = vadd.f32 %v2078, %v2081
    %vm2083 = vweird.f32 %v2077
    %vm2084 = vweird.f32 %v2078
    %vm2085 = vmor %vm2083, %vm2084
    %v2086 = vsel %vm2085, %v2078, %v2082
    %v2087 = vand.u32 2147483647, %v2077
    %vm2088 = vcmp.eq.f32.partialorder %v2087, 8.507059e+37
    %v2089 = vand.u32 %v2077, 2147483648
    %v2090 = vor.u32 1.1754944e-38, %v2089
    %v2091 = vsel %vm2088, %v2090, %v2086
    %v2092 = vmul.f32 1.0, %v2091
    %v2093 = vmul.f32 %v2092, 2.0
    %v2094 = vsub.f32 %v2093, 1.0
    %v2095 = vmul.f32 %v2092, %v1931
    %2097 = vrot.lane.b32.xlu0 %v2094, 116
    %v2098 = vpop.permute.xlu0 %2097
    %v2100 = vmul.f32 %v2092, %v2098
    %2102 = vrot.lane.b32.xlu0 %v2100, 6
    %v2103 = vpop.permute.xlu0 %2102
    %v2105 = vadd.f32 %v2095, %v2103
    %v2106 = vtanh.pop %v2105
    %2108 = vrot.lane.b32.xlu0 %v2106, 12
    %v2109 = vpop.permute.xlu0 %2108
    %v2111 = vmul.f32 %v2092, %v2109
    %v2112 = vld [vmem:[#allocation3 + $0x70] sm:$0x3f]
    %2114 = vrot.lane.b32.xlu0 %v2111, 110
    %v2115 = vpop.permute.xlu0 %2114
    %v2116 = vsel %vm217, %v2115, 0
    %v2119 = vsel %vm221, %v2112, 0
    %2121 = vmatpush.msra.mxu0 0.0
    %2122 = vmatpush.msra.mxu0 0.0
    %2123 = vmatpush.msra.mxu0 0.0
    %2124 = vmatpush.msra.mxu0 0.0
    %2125 = vmatpush.msra.mxu0 0.0
    %2126 = vmatpush.msra.mxu0 0.0
    %2127 = vmatpush.msra.mxu0 0.0
    %2128 = vmatpush.msra.mxu0 0.0
    %2129 = vmatpush.msra.mxu0 0.0
    %2130 = vmatpush.msra.mxu0 0.0
    %2131 = vmatpush.msra.mxu0 0.0
    %2132 = vmatpush.msra.mxu0 0.0
    %2133 = vmatpush.msra.mxu0 0.0
    %2134 = vmatpush.msra.mxu0 0.0
    %2135 = vmatpush.msra.mxu0 0.0
    %2136 = vmatpush.msra.mxu0 %v2119
    %2137 = vmatmul.f32.gmra.mxu0 %v2116
    %v2138 = vpop.f32.mrf.mxu0
    %v2139 = vadd.f32 0.0, %v2138
    %2140 = vdwg.mxu0
    %v2141 = vadd.f32 %v1967, %v2139
    %2142 = vmatpush.msra.mxu0 0.0
    %2143 = vmatpush.msra.mxu0 0.0
    %2144 = vmatpush.msra.mxu0 0.0
    %2145 = vmatpush.msra.mxu0 0.0
    %2146 = vmatpush.msra.mxu0 0.0
    %2147 = vmatpush.msra.mxu0 0.0
    %2148 = vmatpush.msra.mxu0 0.0
    %2149 = vmatpush.msra.mxu0 0.0
    %2150 = vmatpush.msra.mxu0 0.0
    %2151 = vmatpush.msra.mxu0 0.0
    %2152 = vmatpush.msra.mxu0 0.0
    %2153 = vmatpush.msra.mxu0 0.0
    %2154 = vmatpush.msra.mxu0 0.0
    %2155 = vmatpush.msra.mxu0 0.0
    %2156 = vmatpush.msra.mxu0 0.0
    %2157 = vmatpush.msra.mxu0 %v223
    %2158 = vmatmul.f32.gmra.mxu0 %v2116
    %v2159 = vpop.f32.mrf.mxu0
    %v2160 = vadd.f32 %v216, %v2159
    %2161 = vdwg.mxu0
    %s2162 = scalar_lea.vmem [#allocation2], 88
    %v2163 = vld [vmem:[%s2162] sm:$0xff]
    %2164 = vmatpush.msra.mxu0 0.0
    %2165 = vmatpush.msra.mxu0 0.0
    %2166 = vmatpush.msra.mxu0 0.0
    %2167 = vmatpush.msra.mxu0 0.0
    %2168 = vmatpush.msra.mxu0 0.0
    %2169 = vmatpush.msra.mxu0 0.0
    %2170 = vmatpush.msra.mxu0 0.0
    %2171 = vmatpush.msra.mxu0 0.0
    %2172 = vmatpush.msra.mxu0 0.0
    %2173 = vmatpush.msra.mxu0 0.0
    %2174 = vmatpush.msra.mxu0 0.0
    %2175 = vmatpush.msra.mxu0 0.0
    %2176 = vmatpush.msra.mxu0 0.0
    %2177 = vmatpush.msra.mxu0 0.0
    %2178 = vmatpush.msra.mxu0 0.0
    %2179 = vmatpush.msra.mxu0 %v247
    %2180 = vmatmul.f32.gmra.mxu0 %v2052
    %v2181 = vpop.f32.mrf.mxu0
    %v2182 = vadd.f32 0.0, %v2181
    %2183 = vdwg.mxu0
    %v2184 = vadd.f32 %v2163, %v2182
    %v2185 = vxor.u32 %v2184, 2147483648
    %v2186 = vmul.f32 %v2185, 1.442695
    %v2187 = vpow.pop %v2186
    %v2188 = vadd.f32 %v2187, 1.0
    %v2189 = vrcp.pop %v2188
    %v2190 = vmul.f32 %v2188, %v2189
    %v2191 = vsub.f32 1.0, %v2190
    %v2192 = vmul.f32 %v2189, %v2191
    %v2193 = vadd.f32 %v2189, %v2192
    %vm2194 = vweird.f32 %v2188
    %vm2195 = vweird.f32 %v2189
    %vm2196 = vmor %vm2194, %vm2195
    %v2197 = vsel %vm2196, %v2189, %v2193
    %v2198 = vand.u32 2147483647, %v2188
    %vm2199 = vcmp.eq.f32.partialorder %v2198, 8.507059e+37
    %v2200 = vand.u32 %v2188, 2147483648
    %v2201 = vor.u32 1.1754944e-38, %v2200
    %v2202 = vsel %vm2199, %v2201, %v2197
    %v2203 = vmul.f32 1.0, %v2202
    %v2204 = vmul.f32 %v2203, 2.0
    %v2205 = vsub.f32 %v2204, 1.0
    %v2206 = vmul.f32 %v2203, %v2042
    %2208 = vrot.lane.b32.xlu0 %v2205, 116
    %v2209 = vpop.permute.xlu0 %2208
    %v2211 = vmul.f32 %v2203, %v2209
    %2213 = vrot.lane.b32.xlu0 %v2211, 6
    %v2214 = vpop.permute.xlu0 %2213
    %v2216 = vadd.f32 %v2206, %v2214
    %v2217 = vtanh.pop %v2216
    %2219 = vrot.lane.b32.xlu0 %v2217, 12
    %v2220 = vpop.permute.xlu0 %2219
    %v2222 = vmul.f32 %v2203, %v2220
    %2224 = vrot.lane.b32.xlu0 %v2222, 110
    %v2225 = vpop.permute.xlu0 %2224
    %v2226 = vsel %vm217, %v2225, 0
    %2228 = vmatpush.msra.mxu0 0.0
    %2229 = vmatpush.msra.mxu0 0.0
    %2230 = vmatpush.msra.mxu0 0.0
    %2231 = vmatpush.msra.mxu0 0.0
    %2232 = vmatpush.msra.mxu0 0.0
    %2233 = vmatpush.msra.mxu0 0.0
    %2234 = vmatpush.msra.mxu0 0.0
    %2235 = vmatpush.msra.mxu0 0.0
    %2236 = vmatpush.msra.mxu0 0.0
    %2237 = vmatpush.msra.mxu0 0.0
    %2238 = vmatpush.msra.mxu0 0.0
    %2239 = vmatpush.msra.mxu0 0.0
    %2240 = vmatpush.msra.mxu0 0.0
    %2241 = vmatpush.msra.mxu0 0.0
    %2242 = vmatpush.msra.mxu0 0.0
    %2243 = vmatpush.msra.mxu0 %v314
    %2244 = vmatmul.f32.gmra.mxu0 %v2226
    %v2245 = vpop.f32.mrf.mxu0
    %v2246 = vadd.f32 %v2160, %v2245
    %2247 = vdwg.mxu0
    %v2248 = vxor.u32 %v2246, 2147483648
    %v2249 = vmul.f32 %v2248, 1.442695
    %v2250 = vpow.pop %v2249
    %v2251 = vadd.f32 %v2250, 1.0
    %v2252 = vrcp.pop %v2251
    %v2253 = vmul.f32 %v2251, %v2252
    %v2254 = vsub.f32 1.0, %v2253
    %v2255 = vmul.f32 %v2252, %v2254
    %v2256 = vadd.f32 %v2252, %v2255
    %vm2257 = vweird.f32 %v2251
    %vm2258 = vweird.f32 %v2252
    %vm2259 = vmor %vm2257, %vm2258
    %v2260 = vsel %vm2259, %v2252, %v2256
    %v2261 = vand.u32 2147483647, %v2251
    %vm2262 = vcmp.eq.f32.partialorder %v2261, 8.507059e+37
    %v2263 = vand.u32 %v2251, 2147483648
    %v2264 = vor.u32 1.1754944e-38, %v2263
    %v2265 = vsel %vm2262, %v2264, %v2260
    %v2266 = vmul.f32 1.0, %v2265
    %v2267 = vmul.f32 %v2266, 2.0
    %v2268 = vsub.f32 %v2267, 1.0
    %v2269 = vmul.f32 %v2266, %v2105
    %2271 = vrot.lane.b32.xlu0 %v2268, 116
    %v2272 = vpop.permute.xlu0 %2271
    %v2274 = vmul.f32 %v2266, %v2272
    %2276 = vrot.lane.b32.xlu0 %v2274, 6
    %v2277 = vpop.permute.xlu0 %2276
    %v2279 = vadd.f32 %v2269, %v2277
    %v2280 = vtanh.pop %v2279
    %2282 = vrot.lane.b32.xlu0 %v2280, 12
    %v2283 = vpop.permute.xlu0 %2282
    %v2285 = vmul.f32 %v2266, %v2283
    %v2286 = vld [vmem:[#allocation3 + $0x78] sm:$0x3f]
    %2288 = vrot.lane.b32.xlu0 %v2285, 110
    %v2289 = vpop.permute.xlu0 %2288
    %v2290 = vsel %vm217, %v2289, 0
    %v2293 = vsel %vm221, %v2286, 0
    %2295 = vmatpush.msra.mxu0 0.0
    %2296 = vmatpush.msra.mxu0 0.0
    %2297 = vmatpush.msra.mxu0 0.0
    %2298 = vmatpush.msra.mxu0 0.0
    %2299 = vmatpush.msra.mxu0 0.0
    %2300 = vmatpush.msra.mxu0 0.0
    %2301 = vmatpush.msra.mxu0 0.0
    %2302 = vmatpush.msra.mxu0 0.0
    %2303 = vmatpush.msra.mxu0 0.0
    %2304 = vmatpush.msra.mxu0 0.0
    %2305 = vmatpush.msra.mxu0 0.0
    %2306 = vmatpush.msra.mxu0 0.0
    %2307 = vmatpush.msra.mxu0 0.0
    %2308 = vmatpush.msra.mxu0 0.0
    %2309 = vmatpush.msra.mxu0 0.0
    %2310 = vmatpush.msra.mxu0 %v2293
    %2311 = vmatmul.f32.gmra.mxu0 %v2290
    %v2312 = vpop.f32.mrf.mxu0
    %v2313 = vadd.f32 0.0, %v2312
    %2314 = vdwg.mxu0
    %v2315 = vadd.f32 %v2141, %v2313
    %2316 = vmatpush.msra.mxu0 0.0
    %2317 = vmatpush.msra.mxu0 0.0
    %2318 = vmatpush.msra.mxu0 0.0
    %2319 = vmatpush.msra.mxu0 0.0
    %2320 = vmatpush.msra.mxu0 0.0
    %2321 = vmatpush.msra.mxu0 0.0
    %2322 = vmatpush.msra.mxu0 0.0
    %2323 = vmatpush.msra.mxu0 0.0
    %2324 = vmatpush.msra.mxu0 0.0
    %2325 = vmatpush.msra.mxu0 0.0
    %2326 = vmatpush.msra.mxu0 0.0
    %2327 = vmatpush.msra.mxu0 0.0
    %2328 = vmatpush.msra.mxu0 0.0
    %2329 = vmatpush.msra.mxu0 0.0
    %2330 = vmatpush.msra.mxu0 0.0
    %2331 = vmatpush.msra.mxu0 %v223
    %2332 = vmatmul.f32.gmra.mxu0 %v2290
    %v2333 = vpop.f32.mrf.mxu0
    %v2334 = vadd.f32 %v216, %v2333
    %2335 = vdwg.mxu0
    %s2336 = scalar_lea.vmem [#allocation2], 96
    %v2337 = vld [vmem:[%s2336] sm:$0xff]
    %2338 = vmatpush.msra.mxu0 0.0
    %2339 = vmatpush.msra.mxu0 0.0
    %2340 = vmatpush.msra.mxu0 0.0
    %2341 = vmatpush.msra.mxu0 0.0
    %2342 = vmatpush.msra.mxu0 0.0
    %2343 = vmatpush.msra.mxu0 0.0
    %2344 = vmatpush.msra.mxu0 0.0
    %2345 = vmatpush.msra.mxu0 0.0
    %2346 = vmatpush.msra.mxu0 0.0
    %2347 = vmatpush.msra.mxu0 0.0
    %2348 = vmatpush.msra.mxu0 0.0
    %2349 = vmatpush.msra.mxu0 0.0
    %2350 = vmatpush.msra.mxu0 0.0
    %2351 = vmatpush.msra.mxu0 0.0
    %2352 = vmatpush.msra.mxu0 0.0
    %2353 = vmatpush.msra.mxu0 %v247
    %2354 = vmatmul.f32.gmra.mxu0 %v2226
    %v2355 = vpop.f32.mrf.mxu0
    %v2356 = vadd.f32 0.0, %v2355
    %2357 = vdwg.mxu0
    %v2358 = vadd.f32 %v2337, %v2356
    %v2359 = vxor.u32 %v2358, 2147483648
    %v2360 = vmul.f32 %v2359, 1.442695
    %v2361 = vpow.pop %v2360
    %v2362 = vadd.f32 %v2361, 1.0
    %v2363 = vrcp.pop %v2362
    %v2364 = vmul.f32 %v2362, %v2363
    %v2365 = vsub.f32 1.0, %v2364
    %v2366 = vmul.f32 %v2363, %v2365
    %v2367 = vadd.f32 %v2363, %v2366
    %vm2368 = vweird.f32 %v2362
    %vm2369 = vweird.f32 %v2363
    %vm2370 = vmor %vm2368, %vm2369
    %v2371 = vsel %vm2370, %v2363, %v2367
    %v2372 = vand.u32 2147483647, %v2362
    %vm2373 = vcmp.eq.f32.partialorder %v2372, 8.507059e+37
    %v2374 = vand.u32 %v2362, 2147483648
    %v2375 = vor.u32 1.1754944e-38, %v2374
    %v2376 = vsel %vm2373, %v2375, %v2371
    %v2377 = vmul.f32 1.0, %v2376
    %v2378 = vmul.f32 %v2377, 2.0
    %v2379 = vsub.f32 %v2378, 1.0
    %v2380 = vmul.f32 %v2377, %v2216
    %2382 = vrot.lane.b32.xlu0 %v2379, 116
    %v2383 = vpop.permute.xlu0 %2382
    %v2385 = vmul.f32 %v2377, %v2383
    %2387 = vrot.lane.b32.xlu0 %v2385, 6
    %v2388 = vpop.permute.xlu0 %2387
    %v2390 = vadd.f32 %v2380, %v2388
    %v2391 = vtanh.pop %v2390
    %2393 = vrot.lane.b32.xlu0 %v2391, 12
    %v2394 = vpop.permute.xlu0 %2393
    %v2396 = vmul.f32 %v2377, %v2394
    %2398 = vrot.lane.b32.xlu0 %v2396, 110
    %v2399 = vpop.permute.xlu0 %2398
    %v2400 = vsel %vm217, %v2399, 0
    %2402 = vmatpush.msra.mxu0 0.0
    %2403 = vmatpush.msra.mxu0 0.0
    %2404 = vmatpush.msra.mxu0 0.0
    %2405 = vmatpush.msra.mxu0 0.0
    %2406 = vmatpush.msra.mxu0 0.0
    %2407 = vmatpush.msra.mxu0 0.0
    %2408 = vmatpush.msra.mxu0 0.0
    %2409 = vmatpush.msra.mxu0 0.0
    %2410 = vmatpush.msra.mxu0 0.0
    %2411 = vmatpush.msra.mxu0 0.0
    %2412 = vmatpush.msra.mxu0 0.0
    %2413 = vmatpush.msra.mxu0 0.0
    %2414 = vmatpush.msra.mxu0 0.0
    %2415 = vmatpush.msra.mxu0 0.0
    %2416 = vmatpush.msra.mxu0 0.0
    %2417 = vmatpush.msra.mxu0 %v314
    %2418 = vmatmul.f32.gmra.mxu0 %v2400
    %v2419 = vpop.f32.mrf.mxu0
    %v2420 = vadd.f32 %v2334, %v2419
    %2421 = vdwg.mxu0
    %v2422 = vxor.u32 %v2420, 2147483648
    %v2423 = vmul.f32 %v2422, 1.442695
    %v2424 = vpow.pop %v2423
    %v2425 = vadd.f32 %v2424, 1.0
    %v2426 = vrcp.pop %v2425
    %v2427 = vmul.f32 %v2425, %v2426
    %v2428 = vsub.f32 1.0, %v2427
    %v2429 = vmul.f32 %v2426, %v2428
    %v2430 = vadd.f32 %v2426, %v2429
    %vm2431 = vweird.f32 %v2425
    %vm2432 = vweird.f32 %v2426
    %vm2433 = vmor %vm2431, %vm2432
    %v2434 = vsel %vm2433, %v2426, %v2430
    %v2435 = vand.u32 2147483647, %v2425
    %vm2436 = vcmp.eq.f32.partialorder %v2435, 8.507059e+37
    %v2437 = vand.u32 %v2425, 2147483648
    %v2438 = vor.u32 1.1754944e-38, %v2437
    %v2439 = vsel %vm2436, %v2438, %v2434
    %v2440 = vmul.f32 1.0, %v2439
    %v2441 = vmul.f32 %v2440, 2.0
    %v2442 = vsub.f32 %v2441, 1.0
    %v2443 = vmul.f32 %v2440, %v2279
    %2445 = vrot.lane.b32.xlu0 %v2442, 116
    %v2446 = vpop.permute.xlu0 %2445
    %v2448 = vmul.f32 %v2440, %v2446
    %2450 = vrot.lane.b32.xlu0 %v2448, 6
    %v2451 = vpop.permute.xlu0 %2450
    %v2453 = vadd.f32 %v2443, %v2451
    %v2454 = vtanh.pop %v2453
    %2456 = vrot.lane.b32.xlu0 %v2454, 12
    %v2457 = vpop.permute.xlu0 %2456
    %v2459 = vmul.f32 %v2440, %v2457
    %v2460 = vld [vmem:[#allocation3 + $0x80] sm:$0x3f]
    %2462 = vrot.lane.b32.xlu0 %v2459, 110
    %v2463 = vpop.permute.xlu0 %2462
    %v2464 = vsel %vm217, %v2463, 0
    %v2467 = vsel %vm221, %v2460, 0
    %2469 = vmatpush.msra.mxu0 0.0
    %2470 = vmatpush.msra.mxu0 0.0
    %2471 = vmatpush.msra.mxu0 0.0
    %2472 = vmatpush.msra.mxu0 0.0
    %2473 = vmatpush.msra.mxu0 0.0
    %2474 = vmatpush.msra.mxu0 0.0
    %2475 = vmatpush.msra.mxu0 0.0
    %2476 = vmatpush.msra.mxu0 0.0
    %2477 = vmatpush.msra.mxu0 0.0
    %2478 = vmatpush.msra.mxu0 0.0
    %2479 = vmatpush.msra.mxu0 0.0
    %2480 = vmatpush.msra.mxu0 0.0
    %2481 = vmatpush.msra.mxu0 0.0
    %2482 = vmatpush.msra.mxu0 0.0
    %2483 = vmatpush.msra.mxu0 0.0
    %2484 = vmatpush.msra.mxu0 %v2467
    %2485 = vmatmul.f32.gmra.mxu0 %v2464
    %v2486 = vpop.f32.mrf.mxu0
    %v2487 = vadd.f32 0.0, %v2486
    %2488 = vdwg.mxu0
    %v2489 = vadd.f32 %v2315, %v2487
    %2490 = vmatpush.msra.mxu0 0.0
    %2491 = vmatpush.msra.mxu0 0.0
    %2492 = vmatpush.msra.mxu0 0.0
    %2493 = vmatpush.msra.mxu0 0.0
    %2494 = vmatpush.msra.mxu0 0.0
    %2495 = vmatpush.msra.mxu0 0.0
    %2496 = vmatpush.msra.mxu0 0.0
    %2497 = vmatpush.msra.mxu0 0.0
    %2498 = vmatpush.msra.mxu0 0.0
    %2499 = vmatpush.msra.mxu0 0.0
    %2500 = vmatpush.msra.mxu0 0.0
    %2501 = vmatpush.msra.mxu0 0.0
    %2502 = vmatpush.msra.mxu0 0.0
    %2503 = vmatpush.msra.mxu0 0.0
    %2504 = vmatpush.msra.mxu0 0.0
    %2505 = vmatpush.msra.mxu0 %v223
    %2506 = vmatmul.f32.gmra.mxu0 %v2464
    %v2507 = vpop.f32.mrf.mxu0
    %v2508 = vadd.f32 %v216, %v2507
    %2509 = vdwg.mxu0
    %s2510 = scalar_lea.vmem [#allocation2], 104
    %v2511 = vld [vmem:[%s2510] sm:$0xff]
    %2512 = vmatpush.msra.mxu0 0.0
    %2513 = vmatpush.msra.mxu0 0.0
    %2514 = vmatpush.msra.mxu0 0.0
    %2515 = vmatpush.msra.mxu0 0.0
    %2516 = vmatpush.msra.mxu0 0.0
    %2517 = vmatpush.msra.mxu0 0.0
    %2518 = vmatpush.msra.mxu0 0.0
    %2519 = vmatpush.msra.mxu0 0.0
    %2520 = vmatpush.msra.mxu0 0.0
    %2521 = vmatpush.msra.mxu0 0.0
    %2522 = vmatpush.msra.mxu0 0.0
    %2523 = vmatpush.msra.mxu0 0.0
    %2524 = vmatpush.msra.mxu0 0.0
    %2525 = vmatpush.msra.mxu0 0.0
    %2526 = vmatpush.msra.mxu0 0.0
    %2527 = vmatpush.msra.mxu0 %v247
    %2528 = vmatmul.f32.gmra.mxu0 %v2400
    %v2529 = vpop.f32.mrf.mxu0
    %v2530 = vadd.f32 0.0, %v2529
    %2531 = vdwg.mxu0
    %v2532 = vadd.f32 %v2511, %v2530
    %v2533 = vxor.u32 %v2532, 2147483648
    %v2534 = vmul.f32 %v2533, 1.442695
    %v2535 = vpow.pop %v2534
    %v2536 = vadd.f32 %v2535, 1.0
    %v2537 = vrcp.pop %v2536
    %v2538 = vmul.f32 %v2536, %v2537
    %v2539 = vsub.f32 1.0, %v2538
    %v2540 = vmul.f32 %v2537, %v2539
    %v2541 = vadd.f32 %v2537, %v2540
    %vm2542 = vweird.f32 %v2536
    %vm2543 = vweird.f32 %v2537
    %vm2544 = vmor %vm2542, %vm2543
    %v2545 = vsel %vm2544, %v2537, %v2541
    %v2546 = vand.u32 2147483647, %v2536
    %vm2547 = vcmp.eq.f32.partialorder %v2546, 8.507059e+37
    %v2548 = vand.u32 %v2536, 2147483648
    %v2549 = vor.u32 1.1754944e-38, %v2548
    %v2550 = vsel %vm2547, %v2549, %v2545
    %v2551 = vmul.f32 1.0, %v2550
    %v2552 = vmul.f32 %v2551, 2.0
    %v2553 = vsub.f32 %v2552, 1.0
    %v2554 = vmul.f32 %v2551, %v2390
    %2556 = vrot.lane.b32.xlu0 %v2553, 116
    %v2557 = vpop.permute.xlu0 %2556
    %v2559 = vmul.f32 %v2551, %v2557
    %2561 = vrot.lane.b32.xlu0 %v2559, 6
    %v2562 = vpop.permute.xlu0 %2561
    %v2564 = vadd.f32 %v2554, %v2562
    %v2565 = vtanh.pop %v2564
    %2567 = vrot.lane.b32.xlu0 %v2565, 12
    %v2568 = vpop.permute.xlu0 %2567
    %v2570 = vmul.f32 %v2551, %v2568
    %2572 = vrot.lane.b32.xlu0 %v2570, 110
    %v2573 = vpop.permute.xlu0 %2572
    %v2574 = vsel %vm217, %v2573, 0
    %2576 = vmatpush.msra.mxu0 0.0
    %2577 = vmatpush.msra.mxu0 0.0
    %2578 = vmatpush.msra.mxu0 0.0
    %2579 = vmatpush.msra.mxu0 0.0
    %2580 = vmatpush.msra.mxu0 0.0
    %2581 = vmatpush.msra.mxu0 0.0
    %2582 = vmatpush.msra.mxu0 0.0
    %2583 = vmatpush.msra.mxu0 0.0
    %2584 = vmatpush.msra.mxu0 0.0
    %2585 = vmatpush.msra.mxu0 0.0
    %2586 = vmatpush.msra.mxu0 0.0
    %2587 = vmatpush.msra.mxu0 0.0
    %2588 = vmatpush.msra.mxu0 0.0
    %2589 = vmatpush.msra.mxu0 0.0
    %2590 = vmatpush.msra.mxu0 0.0
    %2591 = vmatpush.msra.mxu0 %v314
    %2592 = vmatmul.f32.gmra.mxu0 %v2574
    %v2593 = vpop.f32.mrf.mxu0
    %v2594 = vadd.f32 %v2508, %v2593
    %2595 = vdwg.mxu0
    %v2596 = vxor.u32 %v2594, 2147483648
    %v2597 = vmul.f32 %v2596, 1.442695
    %v2598 = vpow.pop %v2597
    %v2599 = vadd.f32 %v2598, 1.0
    %v2600 = vrcp.pop %v2599
    %v2601 = vmul.f32 %v2599, %v2600
    %v2602 = vsub.f32 1.0, %v2601
    %v2603 = vmul.f32 %v2600, %v2602
    %v2604 = vadd.f32 %v2600, %v2603
    %vm2605 = vweird.f32 %v2599
    %vm2606 = vweird.f32 %v2600
    %vm2607 = vmor %vm2605, %vm2606
    %v2608 = vsel %vm2607, %v2600, %v2604
    %v2609 = vand.u32 2147483647, %v2599
    %vm2610 = vcmp.eq.f32.partialorder %v2609, 8.507059e+37
    %v2611 = vand.u32 %v2599, 2147483648
    %v2612 = vor.u32 1.1754944e-38, %v2611
    %v2613 = vsel %vm2610, %v2612, %v2608
    %v2614 = vmul.f32 1.0, %v2613
    %v2615 = vmul.f32 %v2614, 2.0
    %v2616 = vsub.f32 %v2615, 1.0
    %v2617 = vmul.f32 %v2614, %v2453
    %2619 = vrot.lane.b32.xlu0 %v2616, 116
    %v2620 = vpop.permute.xlu0 %2619
    %v2622 = vmul.f32 %v2614, %v2620
    %2624 = vrot.lane.b32.xlu0 %v2622, 6
    %v2625 = vpop.permute.xlu0 %2624
    %v2627 = vadd.f32 %v2617, %v2625
    %v2628 = vtanh.pop %v2627
    %2630 = vrot.lane.b32.xlu0 %v2628, 12
    %v2631 = vpop.permute.xlu0 %2630
    %v2633 = vmul.f32 %v2614, %v2631
    %v2634 = vld [vmem:[#allocation3 + $0x88] sm:$0x3f]
    %2636 = vrot.lane.b32.xlu0 %v2633, 110
    %v2637 = vpop.permute.xlu0 %2636
    %v2638 = vsel %vm217, %v2637, 0
    %v2641 = vsel %vm221, %v2634, 0
    %2643 = vmatpush.msra.mxu0 0.0
    %2644 = vmatpush.msra.mxu0 0.0
    %2645 = vmatpush.msra.mxu0 0.0
    %2646 = vmatpush.msra.mxu0 0.0
    %2647 = vmatpush.msra.mxu0 0.0
    %2648 = vmatpush.msra.mxu0 0.0
    %2649 = vmatpush.msra.mxu0 0.0
    %2650 = vmatpush.msra.mxu0 0.0
    %2651 = vmatpush.msra.mxu0 0.0
    %2652 = vmatpush.msra.mxu0 0.0
    %2653 = vmatpush.msra.mxu0 0.0
    %2654 = vmatpush.msra.mxu0 0.0
    %2655 = vmatpush.msra.mxu0 0.0
    %2656 = vmatpush.msra.mxu0 0.0
    %2657 = vmatpush.msra.mxu0 0.0
    %2658 = vmatpush.msra.mxu0 %v2641
    %2659 = vmatmul.f32.gmra.mxu0 %v2638
    %v2660 = vpop.f32.mrf.mxu0
    %v2661 = vadd.f32 0.0, %v2660
    %2662 = vdwg.mxu0
    %v2663 = vadd.f32 %v2489, %v2661
    %2664 = vmatpush.msra.mxu0 0.0
    %2665 = vmatpush.msra.mxu0 0.0
    %2666 = vmatpush.msra.mxu0 0.0
    %2667 = vmatpush.msra.mxu0 0.0
    %2668 = vmatpush.msra.mxu0 0.0
    %2669 = vmatpush.msra.mxu0 0.0
    %2670 = vmatpush.msra.mxu0 0.0
    %2671 = vmatpush.msra.mxu0 0.0
    %2672 = vmatpush.msra.mxu0 0.0
    %2673 = vmatpush.msra.mxu0 0.0
    %2674 = vmatpush.msra.mxu0 0.0
    %2675 = vmatpush.msra.mxu0 0.0
    %2676 = vmatpush.msra.mxu0 0.0
    %2677 = vmatpush.msra.mxu0 0.0
    %2678 = vmatpush.msra.mxu0 0.0
    %2679 = vmatpush.msra.mxu0 %v223
    %2680 = vmatmul.f32.gmra.mxu0 %v2638
    %v2681 = vpop.f32.mrf.mxu0
    %v2682 = vadd.f32 %v216, %v2681
    %2683 = vdwg.mxu0
    %s2684 = scalar_lea.vmem [#allocation2], 112
    %v2685 = vld [vmem:[%s2684] sm:$0xff]
    %2686 = vmatpush.msra.mxu0 0.0
    %2687 = vmatpush.msra.mxu0 0.0
    %2688 = vmatpush.msra.mxu0 0.0
    %2689 = vmatpush.msra.mxu0 0.0
    %2690 = vmatpush.msra.mxu0 0.0
    %2691 = vmatpush.msra.mxu0 0.0
    %2692 = vmatpush.msra.mxu0 0.0
    %2693 = vmatpush.msra.mxu0 0.0
    %2694 = vmatpush.msra.mxu0 0.0
    %2695 = vmatpush.msra.mxu0 0.0
    %2696 = vmatpush.msra.mxu0 0.0
    %2697 = vmatpush.msra.mxu0 0.0
    %2698 = vmatpush.msra.mxu0 0.0
    %2699 = vmatpush.msra.mxu0 0.0
    %2700 = vmatpush.msra.mxu0 0.0
    %2701 = vmatpush.msra.mxu0 %v247
    %2702 = vmatmul.f32.gmra.mxu0 %v2574
    %v2703 = vpop.f32.mrf.mxu0
    %v2704 = vadd.f32 0.0, %v2703
    %2705 = vdwg.mxu0
    %v2706 = vadd.f32 %v2685, %v2704
    %v2707 = vxor.u32 %v2706, 2147483648
    %v2708 = vmul.f32 %v2707, 1.442695
    %v2709 = vpow.pop %v2708
    %v2710 = vadd.f32 %v2709, 1.0
    %v2711 = vrcp.pop %v2710
    %v2712 = vmul.f32 %v2710, %v2711
    %v2713 = vsub.f32 1.0, %v2712
    %v2714 = vmul.f32 %v2711, %v2713
    %v2715 = vadd.f32 %v2711, %v2714
    %vm2716 = vweird.f32 %v2710
    %vm2717 = vweird.f32 %v2711
    %vm2718 = vmor %vm2716, %vm2717
    %v2719 = vsel %vm2718, %v2711, %v2715
    %v2720 = vand.u32 2147483647, %v2710
    %vm2721 = vcmp.eq.f32.partialorder %v2720, 8.507059e+37
    %v2722 = vand.u32 %v2710, 2147483648
    %v2723 = vor.u32 1.1754944e-38, %v2722
    %v2724 = vsel %vm2721, %v2723, %v2719
    %v2725 = vmul.f32 1.0, %v2724
    %v2726 = vmul.f32 %v2725, 2.0
    %v2727 = vsub.f32 %v2726, 1.0
    %v2728 = vmul.f32 %v2725, %v2564
    %2730 = vrot.lane.b32.xlu0 %v2727, 116
    %v2731 = vpop.permute.xlu0 %2730
    %v2733 = vmul.f32 %v2725, %v2731
    %2735 = vrot.lane.b32.xlu0 %v2733, 6
    %v2736 = vpop.permute.xlu0 %2735
    %v2738 = vadd.f32 %v2728, %v2736
    %v2739 = vtanh.pop %v2738
    %2741 = vrot.lane.b32.xlu0 %v2739, 12
    %v2742 = vpop.permute.xlu0 %2741
    %v2744 = vmul.f32 %v2725, %v2742
    %2746 = vrot.lane.b32.xlu0 %v2744, 110
    %v2747 = vpop.permute.xlu0 %2746
    %v2748 = vsel %vm217, %v2747, 0
    %2750 = vmatpush.msra.mxu0 0.0
    %2751 = vmatpush.msra.mxu0 0.0
    %2752 = vmatpush.msra.mxu0 0.0
    %2753 = vmatpush.msra.mxu0 0.0
    %2754 = vmatpush.msra.mxu0 0.0
    %2755 = vmatpush.msra.mxu0 0.0
    %2756 = vmatpush.msra.mxu0 0.0
    %2757 = vmatpush.msra.mxu0 0.0
    %2758 = vmatpush.msra.mxu0 0.0
    %2759 = vmatpush.msra.mxu0 0.0
    %2760 = vmatpush.msra.mxu0 0.0
    %2761 = vmatpush.msra.mxu0 0.0
    %2762 = vmatpush.msra.mxu0 0.0
    %2763 = vmatpush.msra.mxu0 0.0
    %2764 = vmatpush.msra.mxu0 0.0
    %2765 = vmatpush.msra.mxu0 %v314
    %2766 = vmatmul.f32.gmra.mxu0 %v2748
    %v2767 = vpop.f32.mrf.mxu0
    %v2768 = vadd.f32 %v2682, %v2767
    %2769 = vdwg.mxu0
    %v2770 = vxor.u32 %v2768, 2147483648
    %v2771 = vmul.f32 %v2770, 1.442695
    %v2772 = vpow.pop %v2771
    %v2773 = vadd.f32 %v2772, 1.0
    %v2774 = vrcp.pop %v2773
    %v2775 = vmul.f32 %v2773, %v2774
    %v2776 = vsub.f32 1.0, %v2775
    %v2777 = vmul.f32 %v2774, %v2776
    %v2778 = vadd.f32 %v2774, %v2777
    %vm2779 = vweird.f32 %v2773
    %vm2780 = vweird.f32 %v2774
    %vm2781 = vmor %vm2779, %vm2780
    %v2782 = vsel %vm2781, %v2774, %v2778
    %v2783 = vand.u32 2147483647, %v2773
    %vm2784 = vcmp.eq.f32.partialorder %v2783, 8.507059e+37
    %v2785 = vand.u32 %v2773, 2147483648
    %v2786 = vor.u32 1.1754944e-38, %v2785
    %v2787 = vsel %vm2784, %v2786, %v2782
    %v2788 = vmul.f32 1.0, %v2787
    %v2789 = vmul.f32 %v2788, 2.0
    %v2790 = vsub.f32 %v2789, 1.0
    %v2791 = vmul.f32 %v2788, %v2627
    %2793 = vrot.lane.b32.xlu0 %v2790, 116
    %v2794 = vpop.permute.xlu0 %2793
    %v2796 = vmul.f32 %v2788, %v2794
    %2798 = vrot.lane.b32.xlu0 %v2796, 6
    %v2799 = vpop.permute.xlu0 %2798
    %v2801 = vadd.f32 %v2791, %v2799
    %v2802 = vtanh.pop %v2801
    %2804 = vrot.lane.b32.xlu0 %v2802, 12
    %v2805 = vpop.permute.xlu0 %2804
    %v2807 = vmul.f32 %v2788, %v2805
    %v2808 = vld [vmem:[#allocation3 + $0x90] sm:$0x3f]
    %2810 = vrot.lane.b32.xlu0 %v2807, 110
    %v2811 = vpop.permute.xlu0 %2810
    %v2812 = vsel %vm217, %v2811, 0
    %v2815 = vsel %vm221, %v2808, 0
    %2817 = vmatpush.msra.mxu0 0.0
    %2818 = vmatpush.msra.mxu0 0.0
    %2819 = vmatpush.msra.mxu0 0.0
    %2820 = vmatpush.msra.mxu0 0.0
    %2821 = vmatpush.msra.mxu0 0.0
    %2822 = vmatpush.msra.mxu0 0.0
    %2823 = vmatpush.msra.mxu0 0.0
    %2824 = vmatpush.msra.mxu0 0.0
    %2825 = vmatpush.msra.mxu0 0.0
    %2826 = vmatpush.msra.mxu0 0.0
    %2827 = vmatpush.msra.mxu0 0.0
    %2828 = vmatpush.msra.mxu0 0.0
    %2829 = vmatpush.msra.mxu0 0.0
    %2830 = vmatpush.msra.mxu0 0.0
    %2831 = vmatpush.msra.mxu0 0.0
    %2832 = vmatpush.msra.mxu0 %v2815
    %2833 = vmatmul.f32.gmra.mxu0 %v2812
    %v2834 = vpop.f32.mrf.mxu0
    %v2835 = vadd.f32 0.0, %v2834
    %2836 = vdwg.mxu0
    %v2837 = vadd.f32 %v2663, %v2835
    %2838 = vmatpush.msra.mxu0 0.0
    %2839 = vmatpush.msra.mxu0 0.0
    %2840 = vmatpush.msra.mxu0 0.0
    %2841 = vmatpush.msra.mxu0 0.0
    %2842 = vmatpush.msra.mxu0 0.0
    %2843 = vmatpush.msra.mxu0 0.0
    %2844 = vmatpush.msra.mxu0 0.0
    %2845 = vmatpush.msra.mxu0 0.0
    %2846 = vmatpush.msra.mxu0 0.0
    %2847 = vmatpush.msra.mxu0 0.0
    %2848 = vmatpush.msra.mxu0 0.0
    %2849 = vmatpush.msra.mxu0 0.0
    %2850 = vmatpush.msra.mxu0 0.0
    %2851 = vmatpush.msra.mxu0 0.0
    %2852 = vmatpush.msra.mxu0 0.0
    %2853 = vmatpush.msra.mxu0 %v223
    %2854 = vmatmul.f32.gmra.mxu0 %v2812
    %v2855 = vpop.f32.mrf.mxu0
    %v2856 = vadd.f32 %v216, %v2855
    %2857 = vdwg.mxu0
    %s2858 = scalar_lea.vmem [#allocation2], 120
    %v2859 = vld [vmem:[%s2858] sm:$0xff]
    %2860 = vmatpush.msra.mxu0 0.0
    %2861 = vmatpush.msra.mxu0 0.0
    %2862 = vmatpush.msra.mxu0 0.0
    %2863 = vmatpush.msra.mxu0 0.0
    %2864 = vmatpush.msra.mxu0 0.0
    %2865 = vmatpush.msra.mxu0 0.0
    %2866 = vmatpush.msra.mxu0 0.0
    %2867 = vmatpush.msra.mxu0 0.0
    %2868 = vmatpush.msra.mxu0 0.0
    %2869 = vmatpush.msra.mxu0 0.0
    %2870 = vmatpush.msra.mxu0 0.0
    %2871 = vmatpush.msra.mxu0 0.0
    %2872 = vmatpush.msra.mxu0 0.0
    %2873 = vmatpush.msra.mxu0 0.0
    %2874 = vmatpush.msra.mxu0 0.0
    %2875 = vmatpush.msra.mxu0 %v247
    %2876 = vmatmul.f32.gmra.mxu0 %v2748
    %v2877 = vpop.f32.mrf.mxu0
    %v2878 = vadd.f32 0.0, %v2877
    %2879 = vdwg.mxu0
    %v2880 = vadd.f32 %v2859, %v2878
    %v2881 = vxor.u32 %v2880, 2147483648
    %v2882 = vmul.f32 %v2881, 1.442695
    %v2883 = vpow.pop %v2882
    %v2884 = vadd.f32 %v2883, 1.0
    %v2885 = vrcp.pop %v2884
    %v2886 = vmul.f32 %v2884, %v2885
    %v2887 = vsub.f32 1.0, %v2886
    %v2888 = vmul.f32 %v2885, %v2887
    %v2889 = vadd.f32 %v2885, %v2888
    %vm2890 = vweird.f32 %v2884
    %vm2891 = vweird.f32 %v2885
    %vm2892 = vmor %vm2890, %vm2891
    %v2893 = vsel %vm2892, %v2885, %v2889
    %v2894 = vand.u32 2147483647, %v2884
    %vm2895 = vcmp.eq.f32.partialorder %v2894, 8.507059e+37
    %v2896 = vand.u32 %v2884, 2147483648
    %v2897 = vor.u32 1.1754944e-38, %v2896
    %v2898 = vsel %vm2895, %v2897, %v2893
    %v2899 = vmul.f32 1.0, %v2898
    %v2900 = vmul.f32 %v2899, 2.0
    %v2901 = vsub.f32 %v2900, 1.0
    %v2902 = vmul.f32 %v2899, %v2738
    %2904 = vrot.lane.b32.xlu0 %v2901, 116
    %v2905 = vpop.permute.xlu0 %2904
    %v2907 = vmul.f32 %v2899, %v2905
    %2909 = vrot.lane.b32.xlu0 %v2907, 6
    %v2910 = vpop.permute.xlu0 %2909
    %v2912 = vadd.f32 %v2902, %v2910
    %v2913 = vtanh.pop %v2912
    %2915 = vrot.lane.b32.xlu0 %v2913, 12
    %v2916 = vpop.permute.xlu0 %2915
    %v2918 = vmul.f32 %v2899, %v2916
    %2920 = vrot.lane.b32.xlu0 %v2918, 110
    %v2921 = vpop.permute.xlu0 %2920
    %v2922 = vsel %vm217, %v2921, 0
    %2924 = vmatpush.msra.mxu0 0.0
    %2925 = vmatpush.msra.mxu0 0.0
    %2926 = vmatpush.msra.mxu0 0.0
    %2927 = vmatpush.msra.mxu0 0.0
    %2928 = vmatpush.msra.mxu0 0.0
    %2929 = vmatpush.msra.mxu0 0.0
    %2930 = vmatpush.msra.mxu0 0.0
    %2931 = vmatpush.msra.mxu0 0.0
    %2932 = vmatpush.msra.mxu0 0.0
    %2933 = vmatpush.msra.mxu0 0.0
    %2934 = vmatpush.msra.mxu0 0.0
    %2935 = vmatpush.msra.mxu0 0.0
    %2936 = vmatpush.msra.mxu0 0.0
    %2937 = vmatpush.msra.mxu0 0.0
    %2938 = vmatpush.msra.mxu0 0.0
    %2939 = vmatpush.msra.mxu0 %v314
    %2940 = vmatmul.f32.gmra.mxu0 %v2922
    %v2941 = vpop.f32.mrf.mxu0
    %v2942 = vadd.f32 %v2856, %v2941
    %2943 = vdwg.mxu0
    %v2944 = vxor.u32 %v2942, 2147483648
    %v2945 = vmul.f32 %v2944, 1.442695
    %v2946 = vpow.pop %v2945
    %v2947 = vadd.f32 %v2946, 1.0
    %v2948 = vrcp.pop %v2947
    %v2949 = vmul.f32 %v2947, %v2948
    %v2950 = vsub.f32 1.0, %v2949
    %v2951 = vmul.f32 %v2948, %v2950
    %v2952 = vadd.f32 %v2948, %v2951
    %vm2953 = vweird.f32 %v2947
    %vm2954 = vweird.f32 %v2948
    %vm2955 = vmor %vm2953, %vm2954
    %v2956 = vsel %vm2955, %v2948, %v2952
    %v2957 = vand.u32 2147483647, %v2947
    %vm2958 = vcmp.eq.f32.partialorder %v2957, 8.507059e+37
    %v2959 = vand.u32 %v2947, 2147483648
    %v2960 = vor.u32 1.1754944e-38, %v2959
    %v2961 = vsel %vm2958, %v2960, %v2956
    %v2962 = vmul.f32 1.0, %v2961
    %v2963 = vmul.f32 %v2962, 2.0
    %v2964 = vsub.f32 %v2963, 1.0
    %v2965 = vmul.f32 %v2962, %v2801
    %2967 = vrot.lane.b32.xlu0 %v2964, 116
    %v2968 = vpop.permute.xlu0 %2967
    %v2970 = vmul.f32 %v2962, %v2968
    %2972 = vrot.lane.b32.xlu0 %v2970, 6
    %v2973 = vpop.permute.xlu0 %2972
    %v2975 = vadd.f32 %v2965, %v2973
    %v2976 = vtanh.pop %v2975
    %2978 = vrot.lane.b32.xlu0 %v2976, 12
    %v2979 = vpop.permute.xlu0 %2978
    %v2981 = vmul.f32 %v2962, %v2979
    %v2982 = vld [vmem:[#allocation3 + $0x98] sm:$0x3f]
    %2984 = vrot.lane.b32.xlu0 %v2981, 110
    %v2985 = vpop.permute.xlu0 %2984
    %v2986 = vsel %vm217, %v2985, 0
    %v2989 = vsel %vm221, %v2982, 0
    %2991 = vmatpush.msra.mxu0 0.0
    %2992 = vmatpush.msra.mxu0 0.0
    %2993 = vmatpush.msra.mxu0 0.0
    %2994 = vmatpush.msra.mxu0 0.0
    %2995 = vmatpush.msra.mxu0 0.0
    %2996 = vmatpush.msra.mxu0 0.0
    %2997 = vmatpush.msra.mxu0 0.0
    %2998 = vmatpush.msra.mxu0 0.0
    %2999 = vmatpush.msra.mxu0 0.0
    %3000 = vmatpush.msra.mxu0 0.0
    %3001 = vmatpush.msra.mxu0 0.0
    %3002 = vmatpush.msra.mxu0 0.0
    %3003 = vmatpush.msra.mxu0 0.0
    %3004 = vmatpush.msra.mxu0 0.0
    %3005 = vmatpush.msra.mxu0 0.0
    %3006 = vmatpush.msra.mxu0 %v2989
    %3007 = vmatmul.f32.gmra.mxu0 %v2986
    %v3008 = vpop.f32.mrf.mxu0
    %v3009 = vadd.f32 0.0, %v3008
    %3010 = vdwg.mxu0
    %v3011 = vadd.f32 %v2837, %v3009
    %3012 = vmatpush.msra.mxu0 0.0
    %3013 = vmatpush.msra.mxu0 0.0
    %3014 = vmatpush.msra.mxu0 0.0
    %3015 = vmatpush.msra.mxu0 0.0
    %3016 = vmatpush.msra.mxu0 0.0
    %3017 = vmatpush.msra.mxu0 0.0
    %3018 = vmatpush.msra.mxu0 0.0
    %3019 = vmatpush.msra.mxu0 0.0
    %3020 = vmatpush.msra.mxu0 0.0
    %3021 = vmatpush.msra.mxu0 0.0
    %3022 = vmatpush.msra.mxu0 0.0
    %3023 = vmatpush.msra.mxu0 0.0
    %3024 = vmatpush.msra.mxu0 0.0
    %3025 = vmatpush.msra.mxu0 0.0
    %3026 = vmatpush.msra.mxu0 0.0
    %3027 = vmatpush.msra.mxu0 %v223
    %3028 = vmatmul.f32.gmra.mxu0 %v2986
    %v3029 = vpop.f32.mrf.mxu0
    %v3030 = vadd.f32 %v216, %v3029
    %3031 = vdwg.mxu0
    %s3032 = scalar_lea.vmem [#allocation2], 128
    %v3033 = vld [vmem:[%s3032] sm:$0xff]
    %3034 = vmatpush.msra.mxu0 0.0
    %3035 = vmatpush.msra.mxu0 0.0
    %3036 = vmatpush.msra.mxu0 0.0
    %3037 = vmatpush.msra.mxu0 0.0
    %3038 = vmatpush.msra.mxu0 0.0
    %3039 = vmatpush.msra.mxu0 0.0
    %3040 = vmatpush.msra.mxu0 0.0
    %3041 = vmatpush.msra.mxu0 0.0
    %3042 = vmatpush.msra.mxu0 0.0
    %3043 = vmatpush.msra.mxu0 0.0
    %3044 = vmatpush.msra.mxu0 0.0
    %3045 = vmatpush.msra.mxu0 0.0
    %3046 = vmatpush.msra.mxu0 0.0
    %3047 = vmatpush.msra.mxu0 0.0
    %3048 = vmatpush.msra.mxu0 0.0
    %3049 = vmatpush.msra.mxu0 %v247
    %3050 = vmatmul.f32.gmra.mxu0 %v2922
    %v3051 = vpop.f32.mrf.mxu0
    %v3052 = vadd.f32 0.0, %v3051
    %3053 = vdwg.mxu0
    %v3054 = vadd.f32 %v3033, %v3052
    %v3055 = vxor.u32 %v3054, 2147483648
    %v3056 = vmul.f32 %v3055, 1.442695
    %v3057 = vpow.pop %v3056
    %v3058 = vadd.f32 %v3057, 1.0
    %v3059 = vrcp.pop %v3058
    %v3060 = vmul.f32 %v3058, %v3059
    %v3061 = vsub.f32 1.0, %v3060
    %v3062 = vmul.f32 %v3059, %v3061
    %v3063 = vadd.f32 %v3059, %v3062
    %vm3064 = vweird.f32 %v3058
    %vm3065 = vweird.f32 %v3059
    %vm3066 = vmor %vm3064, %vm3065
    %v3067 = vsel %vm3066, %v3059, %v3063
    %v3068 = vand.u32 2147483647, %v3058
    %vm3069 = vcmp.eq.f32.partialorder %v3068, 8.507059e+37
    %v3070 = vand.u32 %v3058, 2147483648
    %v3071 = vor.u32 1.1754944e-38, %v3070
    %v3072 = vsel %vm3069, %v3071, %v3067
    %v3073 = vmul.f32 1.0, %v3072
    %v3074 = vmul.f32 %v3073, 2.0
    %v3075 = vsub.f32 %v3074, 1.0
    %v3076 = vmul.f32 %v3073, %v2912
    %3078 = vrot.lane.b32.xlu0 %v3075, 116
    %v3079 = vpop.permute.xlu0 %3078
    %v3081 = vmul.f32 %v3073, %v3079
    %3083 = vrot.lane.b32.xlu0 %v3081, 6
    %v3084 = vpop.permute.xlu0 %3083
    %v3086 = vadd.f32 %v3076, %v3084
    %v3087 = vtanh.pop %v3086
    %3089 = vrot.lane.b32.xlu0 %v3087, 12
    %v3090 = vpop.permute.xlu0 %3089
    %v3092 = vmul.f32 %v3073, %v3090
    %3094 = vrot.lane.b32.xlu0 %v3092, 110
    %v3095 = vpop.permute.xlu0 %3094
    %v3096 = vsel %vm217, %v3095, 0
    %3098 = vmatpush.msra.mxu0 0.0
    %3099 = vmatpush.msra.mxu0 0.0
    %3100 = vmatpush.msra.mxu0 0.0
    %3101 = vmatpush.msra.mxu0 0.0
    %3102 = vmatpush.msra.mxu0 0.0
    %3103 = vmatpush.msra.mxu0 0.0
    %3104 = vmatpush.msra.mxu0 0.0
    %3105 = vmatpush.msra.mxu0 0.0
    %3106 = vmatpush.msra.mxu0 0.0
    %3107 = vmatpush.msra.mxu0 0.0
    %3108 = vmatpush.msra.mxu0 0.0
    %3109 = vmatpush.msra.mxu0 0.0
    %3110 = vmatpush.msra.mxu0 0.0
    %3111 = vmatpush.msra.mxu0 0.0
    %3112 = vmatpush.msra.mxu0 0.0
    %3113 = vmatpush.msra.mxu0 %v314
    %3114 = vmatmul.f32.gmra.mxu0 %v3096
    %v3115 = vpop.f32.mrf.mxu0
    %v3116 = vadd.f32 %v3030, %v3115
    %3117 = vdwg.mxu0
    %v3118 = vxor.u32 %v3116, 2147483648
    %v3119 = vmul.f32 %v3118, 1.442695
    %v3120 = vpow.pop %v3119
    %v3121 = vadd.f32 %v3120, 1.0
    %v3122 = vrcp.pop %v3121
    %v3123 = vmul.f32 %v3121, %v3122
    %v3124 = vsub.f32 1.0, %v3123
    %v3125 = vmul.f32 %v3122, %v3124
    %v3126 = vadd.f32 %v3122, %v3125
    %vm3127 = vweird.f32 %v3121
    %vm3128 = vweird.f32 %v3122
    %vm3129 = vmor %vm3127, %vm3128
    %v3130 = vsel %vm3129, %v3122, %v3126
    %v3131 = vand.u32 2147483647, %v3121
    %vm3132 = vcmp.eq.f32.partialorder %v3131, 8.507059e+37
    %v3133 = vand.u32 %v3121, 2147483648
    %v3134 = vor.u32 1.1754944e-38, %v3133
    %v3135 = vsel %vm3132, %v3134, %v3130
    %v3136 = vmul.f32 1.0, %v3135
    %v3137 = vmul.f32 %v3136, 2.0
    %v3138 = vsub.f32 %v3137, 1.0
    %v3139 = vmul.f32 %v3136, %v2975
    %3141 = vrot.lane.b32.xlu0 %v3138, 116
    %v3142 = vpop.permute.xlu0 %3141
    %v3144 = vmul.f32 %v3136, %v3142
    %3146 = vrot.lane.b32.xlu0 %v3144, 6
    %v3147 = vpop.permute.xlu0 %3146
    %v3149 = vadd.f32 %v3139, %v3147
    %v3150 = vtanh.pop %v3149
    %3152 = vrot.lane.b32.xlu0 %v3150, 12
    %v3153 = vpop.permute.xlu0 %3152
    %v3155 = vmul.f32 %v3136, %v3153
    %v3156 = vld [vmem:[#allocation3 + $0xa0] sm:$0x3f]
    %3158 = vrot.lane.b32.xlu0 %v3155, 110
    %v3159 = vpop.permute.xlu0 %3158
    %v3160 = vsel %vm217, %v3159, 0
    %v3163 = vsel %vm221, %v3156, 0
    %3165 = vmatpush.msra.mxu0 0.0
    %3166 = vmatpush.msra.mxu0 0.0
    %3167 = vmatpush.msra.mxu0 0.0
    %3168 = vmatpush.msra.mxu0 0.0
    %3169 = vmatpush.msra.mxu0 0.0
    %3170 = vmatpush.msra.mxu0 0.0
    %3171 = vmatpush.msra.mxu0 0.0
    %3172 = vmatpush.msra.mxu0 0.0
    %3173 = vmatpush.msra.mxu0 0.0
    %3174 = vmatpush.msra.mxu0 0.0
    %3175 = vmatpush.msra.mxu0 0.0
    %3176 = vmatpush.msra.mxu0 0.0
    %3177 = vmatpush.msra.mxu0 0.0
    %3178 = vmatpush.msra.mxu0 0.0
    %3179 = vmatpush.msra.mxu0 0.0
    %3180 = vmatpush.msra.mxu0 %v3163
    %3181 = vmatmul.f32.gmra.mxu0 %v3160
    %v3182 = vpop.f32.mrf.mxu0
    %v3183 = vadd.f32 0.0, %v3182
    %3184 = vdwg.mxu0
    %v3185 = vadd.f32 %v3011, %v3183
    %3186 = vmatpush.msra.mxu0 0.0
    %3187 = vmatpush.msra.mxu0 0.0
    %3188 = vmatpush.msra.mxu0 0.0
    %3189 = vmatpush.msra.mxu0 0.0
    %3190 = vmatpush.msra.mxu0 0.0
    %3191 = vmatpush.msra.mxu0 0.0
    %3192 = vmatpush.msra.mxu0 0.0
    %3193 = vmatpush.msra.mxu0 0.0
    %3194 = vmatpush.msra.mxu0 0.0
    %3195 = vmatpush.msra.mxu0 0.0
    %3196 = vmatpush.msra.mxu0 0.0
    %3197 = vmatpush.msra.mxu0 0.0
    %3198 = vmatpush.msra.mxu0 0.0
    %3199 = vmatpush.msra.mxu0 0.0
    %3200 = vmatpush.msra.mxu0 0.0
    %3201 = vmatpush.msra.mxu0 %v223
    %3202 = vmatmul.f32.gmra.mxu0 %v3160
    %v3203 = vpop.f32.mrf.mxu0
    %v3204 = vadd.f32 %v216, %v3203
    %3205 = vdwg.mxu0
    %s3206 = scalar_lea.vmem [#allocation2], 136
    %v3207 = vld [vmem:[%s3206] sm:$0xff]
    %3208 = vmatpush.msra.mxu0 0.0
    %3209 = vmatpush.msra.mxu0 0.0
    %3210 = vmatpush.msra.mxu0 0.0
    %3211 = vmatpush.msra.mxu0 0.0
    %3212 = vmatpush.msra.mxu0 0.0
    %3213 = vmatpush.msra.mxu0 0.0
    %3214 = vmatpush.msra.mxu0 0.0
    %3215 = vmatpush.msra.mxu0 0.0
    %3216 = vmatpush.msra.mxu0 0.0
    %3217 = vmatpush.msra.mxu0 0.0
    %3218 = vmatpush.msra.mxu0 0.0
    %3219 = vmatpush.msra.mxu0 0.0
    %3220 = vmatpush.msra.mxu0 0.0
    %3221 = vmatpush.msra.mxu0 0.0
    %3222 = vmatpush.msra.mxu0 0.0
    %3223 = vmatpush.msra.mxu0 %v247
    %3224 = vmatmul.f32.gmra.mxu0 %v3096
    %v3225 = vpop.f32.mrf.mxu0
    %v3226 = vadd.f32 0.0, %v3225
    %3227 = vdwg.mxu0
    %v3228 = vadd.f32 %v3207, %v3226
    %v3229 = vxor.u32 %v3228, 2147483648
    %v3230 = vmul.f32 %v3229, 1.442695
    %v3231 = vpow.pop %v3230
    %v3232 = vadd.f32 %v3231, 1.0
    %v3233 = vrcp.pop %v3232
    %v3234 = vmul.f32 %v3232, %v3233
    %v3235 = vsub.f32 1.0, %v3234
    %v3236 = vmul.f32 %v3233, %v3235
    %v3237 = vadd.f32 %v3233, %v3236
    %vm3238 = vweird.f32 %v3232
    %vm3239 = vweird.f32 %v3233
    %vm3240 = vmor %vm3238, %vm3239
    %v3241 = vsel %vm3240, %v3233, %v3237
    %v3242 = vand.u32 2147483647, %v3232
    %vm3243 = vcmp.eq.f32.partialorder %v3242, 8.507059e+37
    %v3244 = vand.u32 %v3232, 2147483648
    %v3245 = vor.u32 1.1754944e-38, %v3244
    %v3246 = vsel %vm3243, %v3245, %v3241
    %v3247 = vmul.f32 1.0, %v3246
    %v3248 = vmul.f32 %v3247, 2.0
    %v3249 = vsub.f32 %v3248, 1.0
    %v3250 = vmul.f32 %v3247, %v3086
    %3252 = vrot.lane.b32.xlu0 %v3249, 116
    %v3253 = vpop.permute.xlu0 %3252
    %v3255 = vmul.f32 %v3247, %v3253
    %3257 = vrot.lane.b32.xlu0 %v3255, 6
    %v3258 = vpop.permute.xlu0 %3257
    %v3260 = vadd.f32 %v3250, %v3258
    %v3261 = vtanh.pop %v3260
    %3263 = vrot.lane.b32.xlu0 %v3261, 12
    %v3264 = vpop.permute.xlu0 %3263
    %v3266 = vmul.f32 %v3247, %v3264
    %3268 = vrot.lane.b32.xlu0 %v3266, 110
    %v3269 = vpop.permute.xlu0 %3268
    %v3270 = vsel %vm217, %v3269, 0
    %3272 = vmatpush.msra.mxu0 0.0
    %3273 = vmatpush.msra.mxu0 0.0
    %3274 = vmatpush.msra.mxu0 0.0
    %3275 = vmatpush.msra.mxu0 0.0
    %3276 = vmatpush.msra.mxu0 0.0
    %3277 = vmatpush.msra.mxu0 0.0
    %3278 = vmatpush.msra.mxu0 0.0
    %3279 = vmatpush.msra.mxu0 0.0
    %3280 = vmatpush.msra.mxu0 0.0
    %3281 = vmatpush.msra.mxu0 0.0
    %3282 = vmatpush.msra.mxu0 0.0
    %3283 = vmatpush.msra.mxu0 0.0
    %3284 = vmatpush.msra.mxu0 0.0
    %3285 = vmatpush.msra.mxu0 0.0
    %3286 = vmatpush.msra.mxu0 0.0
    %3287 = vmatpush.msra.mxu0 %v314
    %3288 = vmatmul.f32.gmra.mxu0 %v3270
    %v3289 = vpop.f32.mrf.mxu0
    %v3290 = vadd.f32 %v3204, %v3289
    %3291 = vdwg.mxu0
    %v3292 = vxor.u32 %v3290, 2147483648
    %v3293 = vmul.f32 %v3292, 1.442695
    %v3294 = vpow.pop %v3293
    %v3295 = vadd.f32 %v3294, 1.0
    %v3296 = vrcp.pop %v3295
    %v3297 = vmul.f32 %v3295, %v3296
    %v3298 = vsub.f32 1.0, %v3297
    %v3299 = vmul.f32 %v3296, %v3298
    %v3300 = vadd.f32 %v3296, %v3299
    %vm3301 = vweird.f32 %v3295
    %vm3302 = vweird.f32 %v3296
    %vm3303 = vmor %vm3301, %vm3302
    %v3304 = vsel %vm3303, %v3296, %v3300
    %v3305 = vand.u32 2147483647, %v3295
    %vm3306 = vcmp.eq.f32.partialorder %v3305, 8.507059e+37
    %v3307 = vand.u32 %v3295, 2147483648
    %v3308 = vor.u32 1.1754944e-38, %v3307
    %v3309 = vsel %vm3306, %v3308, %v3304
    %v3310 = vmul.f32 1.0, %v3309
    %v3311 = vmul.f32 %v3310, 2.0
    %v3312 = vsub.f32 %v3311, 1.0
    %v3313 = vmul.f32 %v3310, %v3149
    %3315 = vrot.lane.b32.xlu0 %v3312, 116
    %v3316 = vpop.permute.xlu0 %3315
    %v3318 = vmul.f32 %v3310, %v3316
    %3320 = vrot.lane.b32.xlu0 %v3318, 6
    %v3321 = vpop.permute.xlu0 %3320
    %v3323 = vadd.f32 %v3313, %v3321
    %v3324 = vtanh.pop %v3323
    %3326 = vrot.lane.b32.xlu0 %v3324, 12
    %v3327 = vpop.permute.xlu0 %3326
    %v3329 = vmul.f32 %v3310, %v3327
    %v3330 = vld [vmem:[#allocation3 + $0xa8] sm:$0x3f]
    %3332 = vrot.lane.b32.xlu0 %v3329, 110
    %v3333 = vpop.permute.xlu0 %3332
    %v3334 = vsel %vm217, %v3333, 0
    %v3337 = vsel %vm221, %v3330, 0
    %3339 = vmatpush.msra.mxu0 0.0
    %3340 = vmatpush.msra.mxu0 0.0
    %3341 = vmatpush.msra.mxu0 0.0
    %3342 = vmatpush.msra.mxu0 0.0
    %3343 = vmatpush.msra.mxu0 0.0
    %3344 = vmatpush.msra.mxu0 0.0
    %3345 = vmatpush.msra.mxu0 0.0
    %3346 = vmatpush.msra.mxu0 0.0
    %3347 = vmatpush.msra.mxu0 0.0
    %3348 = vmatpush.msra.mxu0 0.0
    %3349 = vmatpush.msra.mxu0 0.0
    %3350 = vmatpush.msra.mxu0 0.0
    %3351 = vmatpush.msra.mxu0 0.0
    %3352 = vmatpush.msra.mxu0 0.0
    %3353 = vmatpush.msra.mxu0 0.0
    %3354 = vmatpush.msra.mxu0 %v3337
    %3355 = vmatmul.f32.gmra.mxu0 %v3334
    %v3356 = vpop.f32.mrf.mxu0
    %v3357 = vadd.f32 0.0, %v3356
    %3358 = vdwg.mxu0
    %v3359 = vadd.f32 %v3185, %v3357
    %3360 = vmatpush.msra.mxu0 0.0
    %3361 = vmatpush.msra.mxu0 0.0
    %3362 = vmatpush.msra.mxu0 0.0
    %3363 = vmatpush.msra.mxu0 0.0
    %3364 = vmatpush.msra.mxu0 0.0
    %3365 = vmatpush.msra.mxu0 0.0
    %3366 = vmatpush.msra.mxu0 0.0
    %3367 = vmatpush.msra.mxu0 0.0
    %3368 = vmatpush.msra.mxu0 0.0
    %3369 = vmatpush.msra.mxu0 0.0
    %3370 = vmatpush.msra.mxu0 0.0
    %3371 = vmatpush.msra.mxu0 0.0
    %3372 = vmatpush.msra.mxu0 0.0
    %3373 = vmatpush.msra.mxu0 0.0
    %3374 = vmatpush.msra.mxu0 0.0
    %3375 = vmatpush.msra.mxu0 %v223
    %3376 = vmatmul.f32.gmra.mxu0 %v3334
    %v3377 = vpop.f32.mrf.mxu0
    %v3378 = vadd.f32 %v216, %v3377
    %3379 = vdwg.mxu0
    %s3380 = scalar_lea.vmem [#allocation2], 144
    %v3381 = vld [vmem:[%s3380] sm:$0xff]
    %3382 = vmatpush.msra.mxu0 0.0
    %3383 = vmatpush.msra.mxu0 0.0
    %3384 = vmatpush.msra.mxu0 0.0
    %3385 = vmatpush.msra.mxu0 0.0
    %3386 = vmatpush.msra.mxu0 0.0
    %3387 = vmatpush.msra.mxu0 0.0
    %3388 = vmatpush.msra.mxu0 0.0
    %3389 = vmatpush.msra.mxu0 0.0
    %3390 = vmatpush.msra.mxu0 0.0
    %3391 = vmatpush.msra.mxu0 0.0
    %3392 = vmatpush.msra.mxu0 0.0
    %3393 = vmatpush.msra.mxu0 0.0
    %3394 = vmatpush.msra.mxu0 0.0
    %3395 = vmatpush.msra.mxu0 0.0
    %3396 = vmatpush.msra.mxu0 0.0
    %3397 = vmatpush.msra.mxu0 %v247
    %3398 = vmatmul.f32.gmra.mxu0 %v3270
    %v3399 = vpop.f32.mrf.mxu0
    %v3400 = vadd.f32 0.0, %v3399
    %3401 = vdwg.mxu0
    %v3402 = vadd.f32 %v3381, %v3400
    %v3403 = vxor.u32 %v3402, 2147483648
    %v3404 = vmul.f32 %v3403, 1.442695
    %v3405 = vpow.pop %v3404
    %v3406 = vadd.f32 %v3405, 1.0
    %v3407 = vrcp.pop %v3406
    %v3408 = vmul.f32 %v3406, %v3407
    %v3409 = vsub.f32 1.0, %v3408
    %v3410 = vmul.f32 %v3407, %v3409
    %v3411 = vadd.f32 %v3407, %v3410
    %vm3412 = vweird.f32 %v3406
    %vm3413 = vweird.f32 %v3407
    %vm3414 = vmor %vm3412, %vm3413
    %v3415 = vsel %vm3414, %v3407, %v3411
    %v3416 = vand.u32 2147483647, %v3406
    %vm3417 = vcmp.eq.f32.partialorder %v3416, 8.507059e+37
    %v3418 = vand.u32 %v3406, 2147483648
    %v3419 = vor.u32 1.1754944e-38, %v3418
    %v3420 = vsel %vm3417, %v3419, %v3415
    %v3421 = vmul.f32 1.0, %v3420
    %v3422 = vmul.f32 %v3421, 2.0
    %v3423 = vsub.f32 %v3422, 1.0
    %v3424 = vmul.f32 %v3421, %v3260
    %3426 = vrot.lane.b32.xlu0 %v3423, 116
    %v3427 = vpop.permute.xlu0 %3426
    %v3429 = vmul.f32 %v3421, %v3427
    %3431 = vrot.lane.b32.xlu0 %v3429, 6
    %v3432 = vpop.permute.xlu0 %3431
    %v3434 = vadd.f32 %v3424, %v3432
    %v3435 = vtanh.pop %v3434
    %3437 = vrot.lane.b32.xlu0 %v3435, 12
    %v3438 = vpop.permute.xlu0 %3437
    %v3440 = vmul.f32 %v3421, %v3438
    %3442 = vrot.lane.b32.xlu0 %v3440, 110
    %v3443 = vpop.permute.xlu0 %3442
    %v3444 = vsel %vm217, %v3443, 0
    %3446 = vmatpush.msra.mxu0 0.0
    %3447 = vmatpush.msra.mxu0 0.0
    %3448 = vmatpush.msra.mxu0 0.0
    %3449 = vmatpush.msra.mxu0 0.0
    %3450 = vmatpush.msra.mxu0 0.0
    %3451 = vmatpush.msra.mxu0 0.0
    %3452 = vmatpush.msra.mxu0 0.0
    %3453 = vmatpush.msra.mxu0 0.0
    %3454 = vmatpush.msra.mxu0 0.0
    %3455 = vmatpush.msra.mxu0 0.0
    %3456 = vmatpush.msra.mxu0 0.0
    %3457 = vmatpush.msra.mxu0 0.0
    %3458 = vmatpush.msra.mxu0 0.0
    %3459 = vmatpush.msra.mxu0 0.0
    %3460 = vmatpush.msra.mxu0 0.0
    %3461 = vmatpush.msra.mxu0 %v314
    %3462 = vmatmul.f32.gmra.mxu0 %v3444
    %v3463 = vpop.f32.mrf.mxu0
    %v3464 = vadd.f32 %v3378, %v3463
    %3465 = vdwg.mxu0
    %v3466 = vxor.u32 %v3464, 2147483648
    %v3467 = vmul.f32 %v3466, 1.442695
    %v3468 = vpow.pop %v3467
    %v3469 = vadd.f32 %v3468, 1.0
    %v3470 = vrcp.pop %v3469
    %v3471 = vmul.f32 %v3469, %v3470
    %v3472 = vsub.f32 1.0, %v3471
    %v3473 = vmul.f32 %v3470, %v3472
    %v3474 = vadd.f32 %v3470, %v3473
    %vm3475 = vweird.f32 %v3469
    %vm3476 = vweird.f32 %v3470
    %vm3477 = vmor %vm3475, %vm3476
    %v3478 = vsel %vm3477, %v3470, %v3474
    %v3479 = vand.u32 2147483647, %v3469
    %vm3480 = vcmp.eq.f32.partialorder %v3479, 8.507059e+37
    %v3481 = vand.u32 %v3469, 2147483648
    %v3482 = vor.u32 1.1754944e-38, %v3481
    %v3483 = vsel %vm3480, %v3482, %v3478
    %v3484 = vmul.f32 1.0, %v3483
    %v3485 = vmul.f32 %v3484, 2.0
    %v3486 = vsub.f32 %v3485, 1.0
    %v3487 = vmul.f32 %v3484, %v3323
    %3489 = vrot.lane.b32.xlu0 %v3486, 116
    %v3490 = vpop.permute.xlu0 %3489
    %v3492 = vmul.f32 %v3484, %v3490
    %3494 = vrot.lane.b32.xlu0 %v3492, 6
    %v3495 = vpop.permute.xlu0 %3494
    %v3497 = vadd.f32 %v3487, %v3495
    %v3498 = vtanh.pop %v3497
    %3500 = vrot.lane.b32.xlu0 %v3498, 12
    %v3501 = vpop.permute.xlu0 %3500
    %v3503 = vmul.f32 %v3484, %v3501
    %v3504 = vld [vmem:[#allocation3 + $0xb0] sm:$0x3f]
    %3506 = vrot.lane.b32.xlu0 %v3503, 110
    %v3507 = vpop.permute.xlu0 %3506
    %v3508 = vsel %vm217, %v3507, 0
    %v3511 = vsel %vm221, %v3504, 0
    %3513 = vmatpush.msra.mxu0 0.0
    %3514 = vmatpush.msra.mxu0 0.0
    %3515 = vmatpush.msra.mxu0 0.0
    %3516 = vmatpush.msra.mxu0 0.0
    %3517 = vmatpush.msra.mxu0 0.0
    %3518 = vmatpush.msra.mxu0 0.0
    %3519 = vmatpush.msra.mxu0 0.0
    %3520 = vmatpush.msra.mxu0 0.0
    %3521 = vmatpush.msra.mxu0 0.0
    %3522 = vmatpush.msra.mxu0 0.0
    %3523 = vmatpush.msra.mxu0 0.0
    %3524 = vmatpush.msra.mxu0 0.0
    %3525 = vmatpush.msra.mxu0 0.0
    %3526 = vmatpush.msra.mxu0 0.0
    %3527 = vmatpush.msra.mxu0 0.0
    %3528 = vmatpush.msra.mxu0 %v3511
    %3529 = vmatmul.f32.gmra.mxu0 %v3508
    %v3530 = vpop.f32.mrf.mxu0
    %v3531 = vadd.f32 0.0, %v3530
    %3532 = vdwg.mxu0
    %v3533 = vadd.f32 %v3359, %v3531
    %3534 = vmatpush.msra.mxu0 0.0
    %3535 = vmatpush.msra.mxu0 0.0
    %3536 = vmatpush.msra.mxu0 0.0
    %3537 = vmatpush.msra.mxu0 0.0
    %3538 = vmatpush.msra.mxu0 0.0
    %3539 = vmatpush.msra.mxu0 0.0
    %3540 = vmatpush.msra.mxu0 0.0
    %3541 = vmatpush.msra.mxu0 0.0
    %3542 = vmatpush.msra.mxu0 0.0
    %3543 = vmatpush.msra.mxu0 0.0
    %3544 = vmatpush.msra.mxu0 0.0
    %3545 = vmatpush.msra.mxu0 0.0
    %3546 = vmatpush.msra.mxu0 0.0
    %3547 = vmatpush.msra.mxu0 0.0
    %3548 = vmatpush.msra.mxu0 0.0
    %3549 = vmatpush.msra.mxu0 %v223
    %3550 = vmatmul.f32.gmra.mxu0 %v3508
    %v3551 = vpop.f32.mrf.mxu0
    %v3552 = vadd.f32 %v216, %v3551
    %3553 = vdwg.mxu0
    %s3554 = scalar_lea.vmem [#allocation2], 152
    %v3555 = vld [vmem:[%s3554] sm:$0xff]
    %3556 = vmatpush.msra.mxu0 0.0
    %3557 = vmatpush.msra.mxu0 0.0
    %3558 = vmatpush.msra.mxu0 0.0
    %3559 = vmatpush.msra.mxu0 0.0
    %3560 = vmatpush.msra.mxu0 0.0
    %3561 = vmatpush.msra.mxu0 0.0
    %3562 = vmatpush.msra.mxu0 0.0
    %3563 = vmatpush.msra.mxu0 0.0
    %3564 = vmatpush.msra.mxu0 0.0
    %3565 = vmatpush.msra.mxu0 0.0
    %3566 = vmatpush.msra.mxu0 0.0
    %3567 = vmatpush.msra.mxu0 0.0
    %3568 = vmatpush.msra.mxu0 0.0
    %3569 = vmatpush.msra.mxu0 0.0
    %3570 = vmatpush.msra.mxu0 0.0
    %3571 = vmatpush.msra.mxu0 %v247
    %3572 = vmatmul.f32.gmra.mxu0 %v3444
    %v3573 = vpop.f32.mrf.mxu0
    %v3574 = vadd.f32 0.0, %v3573
    %3575 = vdwg.mxu0
    %v3576 = vadd.f32 %v3555, %v3574
    %v3577 = vxor.u32 %v3576, 2147483648
    %v3578 = vmul.f32 %v3577, 1.442695
    %v3579 = vpow.pop %v3578
    %v3580 = vadd.f32 %v3579, 1.0
    %v3581 = vrcp.pop %v3580
    %v3582 = vmul.f32 %v3580, %v3581
    %v3583 = vsub.f32 1.0, %v3582
    %v3584 = vmul.f32 %v3581, %v3583
    %v3585 = vadd.f32 %v3581, %v3584
    %vm3586 = vweird.f32 %v3580
    %vm3587 = vweird.f32 %v3581
    %vm3588 = vmor %vm3586, %vm3587
    %v3589 = vsel %vm3588, %v3581, %v3585
    %v3590 = vand.u32 2147483647, %v3580
    %vm3591 = vcmp.eq.f32.partialorder %v3590, 8.507059e+37
    %v3592 = vand.u32 %v3580, 2147483648
    %v3593 = vor.u32 1.1754944e-38, %v3592
    %v3594 = vsel %vm3591, %v3593, %v3589
    %v3595 = vmul.f32 1.0, %v3594
    %v3596 = vmul.f32 %v3595, 2.0
    %v3597 = vsub.f32 %v3596, 1.0
    %v3598 = vmul.f32 %v3595, %v3434
    %3600 = vrot.lane.b32.xlu0 %v3597, 116
    %v3601 = vpop.permute.xlu0 %3600
    %v3603 = vmul.f32 %v3595, %v3601
    %3605 = vrot.lane.b32.xlu0 %v3603, 6
    %v3606 = vpop.permute.xlu0 %3605
    %v3608 = vadd.f32 %v3598, %v3606
    %v3609 = vtanh.pop %v3608
    %3611 = vrot.lane.b32.xlu0 %v3609, 12
    %v3612 = vpop.permute.xlu0 %3611
    %v3614 = vmul.f32 %v3595, %v3612
    %3616 = vrot.lane.b32.xlu0 %v3614, 110
    %v3617 = vpop.permute.xlu0 %3616
    %v3618 = vsel %vm217, %v3617, 0
    %3620 = vmatpush.msra.mxu0 0.0
    %3621 = vmatpush.msra.mxu0 0.0
    %3622 = vmatpush.msra.mxu0 0.0
    %3623 = vmatpush.msra.mxu0 0.0
    %3624 = vmatpush.msra.mxu0 0.0
    %3625 = vmatpush.msra.mxu0 0.0
    %3626 = vmatpush.msra.mxu0 0.0
    %3627 = vmatpush.msra.mxu0 0.0
    %3628 = vmatpush.msra.mxu0 0.0
    %3629 = vmatpush.msra.mxu0 0.0
    %3630 = vmatpush.msra.mxu0 0.0
    %3631 = vmatpush.msra.mxu0 0.0
    %3632 = vmatpush.msra.mxu0 0.0
    %3633 = vmatpush.msra.mxu0 0.0
    %3634 = vmatpush.msra.mxu0 0.0
    %3635 = vmatpush.msra.mxu0 %v314
    %3636 = vmatmul.f32.gmra.mxu0 %v3618
    %v3637 = vpop.f32.mrf.mxu0
    %v3638 = vadd.f32 %v3552, %v3637
    %3639 = vdwg.mxu0
    %v3640 = vxor.u32 %v3638, 2147483648
    %v3641 = vmul.f32 %v3640, 1.442695
    %v3642 = vpow.pop %v3641
    %v3643 = vadd.f32 %v3642, 1.0
    %v3644 = vrcp.pop %v3643
    %v3645 = vmul.f32 %v3643, %v3644
    %v3646 = vsub.f32 1.0, %v3645
    %v3647 = vmul.f32 %v3644, %v3646
    %v3648 = vadd.f32 %v3644, %v3647
    %vm3649 = vweird.f32 %v3643
    %vm3650 = vweird.f32 %v3644
    %vm3651 = vmor %vm3649, %vm3650
    %v3652 = vsel %vm3651, %v3644, %v3648
    %v3653 = vand.u32 2147483647, %v3643
    %vm3654 = vcmp.eq.f32.partialorder %v3653, 8.507059e+37
    %v3655 = vand.u32 %v3643, 2147483648
    %v3656 = vor.u32 1.1754944e-38, %v3655
    %v3657 = vsel %vm3654, %v3656, %v3652
    %v3658 = vmul.f32 1.0, %v3657
    %v3659 = vmul.f32 %v3658, 2.0
    %v3660 = vsub.f32 %v3659, 1.0
    %v3661 = vmul.f32 %v3658, %v3497
    %3663 = vrot.lane.b32.xlu0 %v3660, 116
    %v3664 = vpop.permute.xlu0 %3663
    %v3666 = vmul.f32 %v3658, %v3664
    %3668 = vrot.lane.b32.xlu0 %v3666, 6
    %v3669 = vpop.permute.xlu0 %3668
    %v3671 = vadd.f32 %v3661, %v3669
    %v3672 = vtanh.pop %v3671
    %3674 = vrot.lane.b32.xlu0 %v3672, 12
    %v3675 = vpop.permute.xlu0 %3674
    %v3677 = vmul.f32 %v3658, %v3675
    %v3678 = vld [vmem:[#allocation3 + $0xb8] sm:$0x3f]
    %3680 = vrot.lane.b32.xlu0 %v3677, 110
    %v3681 = vpop.permute.xlu0 %3680
    %v3682 = vsel %vm217, %v3681, 0
    %v3685 = vsel %vm221, %v3678, 0
    %3687 = vmatpush.msra.mxu0 0.0
    %3688 = vmatpush.msra.mxu0 0.0
    %3689 = vmatpush.msra.mxu0 0.0
    %3690 = vmatpush.msra.mxu0 0.0
    %3691 = vmatpush.msra.mxu0 0.0
    %3692 = vmatpush.msra.mxu0 0.0
    %3693 = vmatpush.msra.mxu0 0.0
    %3694 = vmatpush.msra.mxu0 0.0
    %3695 = vmatpush.msra.mxu0 0.0
    %3696 = vmatpush.msra.mxu0 0.0
    %3697 = vmatpush.msra.mxu0 0.0
    %3698 = vmatpush.msra.mxu0 0.0
    %3699 = vmatpush.msra.mxu0 0.0
    %3700 = vmatpush.msra.mxu0 0.0
    %3701 = vmatpush.msra.mxu0 0.0
    %3702 = vmatpush.msra.mxu0 %v3685
    %3703 = vmatmul.f32.gmra.mxu0 %v3682
    %v3704 = vpop.f32.mrf.mxu0
    %v3705 = vadd.f32 0.0, %v3704
    %3706 = vdwg.mxu0
    %v3707 = vadd.f32 %v3533, %v3705
    %v3708 = vld [vmem:[#allocation3 + $0x3] sm:$0x1]
    %v3709 = vld [vmem:[#allocation3 + $0x4] sm:$0x1]
    %v3710 = vld [vmem:[#allocation3 + $0x5] sm:$0x1]
    %v3711 = vld [vmem:[#allocation3 + $0x7] sm:$0x1]
    %v3712 = vld [vmem:[#allocation3 + $0x6] sm:$0x1]
    %v3713 = vperm.slane %v3708, 0
    %v3714 = vadd.f32 %v3707, %v3713
    %v3715 = vsel %vm217, %v3714, 0.0
    %v3716 = vrot.slane %v3715, 4
    %v3717 = vadd.f32 %v3715, %v3716
    %v3718 = vrot.slane %v3717, 2
    %v3719 = vadd.f32 %v3717, %v3718
    %v3720 = vrot.slane %v3719, 1
    %v3721 = vadd.f32 %v3719, %v3720
    %v3722 = vrcp.pop 8.0
    %v3723 = vmul.f32 8.0, %v3722
    %v3724 = vsub.f32 1.0, %v3723
    %v3725 = vmul.f32 %v3722, %v3724
    %v3726 = vadd.f32 %v3722, %v3725
    %vm3727 = vweird.f32 %v3722
    %v3728 = vsel %vm3727, %v3722, %v3726
    %v3729 = vmul.f32 %v3721, %v3728
    %v3730 = vsub.f32 %v3714, %v3729
    %v3731 = vmul.f32 %v3730, %v3730
    %v3732 = vsel %vm217, %v3731, 0.0
    %v3733 = vrot.slane %v3732, 4
    %v3734 = vadd.f32 %v3732, %v3733
    %v3735 = vrot.slane %v3734, 2
    %v3736 = vadd.f32 %v3734, %v3735
    %v3737 = vrot.slane %v3736, 1
    %v3738 = vadd.f32 %v3736, %v3737
    %v3739 = vmul.f32 %v3738, %v3728
    %v3740 = vadd.f32 %v3739, 1e-05
    %v3741 = vrsqrt.pop %v3740
    %v3742 = vmul.f32 %v3741, %v3740
    %v3743 = vmul.f32 %v3742, %v3741
    %v3744 = vmul.f32 0.5, %v3743
    %v3745 = vsub.f32 1.5, %v3744
    %v3746 = vmul.f32 %v3741, %v3745
    %vm3747 = vweird.f32 %v3740
    %vm3748 = vweird.f32 %v3741
    %vm3749 = vmor %vm3747, %vm3748
    %v3750 = vsel %vm3749, %v3741, %v3746
    %v3751 = vmul.f32 %v3730, %v3750
    %v3752 = vperm.slane %v3709, 0
    %v3753 = vmul.f32 %v3751, %v3752
    %v3754 = vperm.slane %v3710, 0
    %v3755 = vadd.f32 %v3753, %v3754
    %v3756 = vmax.f32 %v3755, 0.0
    %v3757 = vperm.slane %v3711, 0
    %v3758 = vmul.f32 %v3756, %v3757
    %v3759 = vsel %vm217, %v3758, 0.0
    %3760 = vadd.xlane.f32.xlu0 %v3759
    %v3761 = vpop.xlane.xlu0 %3760
    %v3762 = vperm.slane %v3712, 0
    %v3763 = vadd.f32 %v3761, %v3762
    %vm3764 = vcmask 7168
    %3765 = vst.msk [vmem:[%s2] sm:$0xff] %vm3764, %v3763
    // Predicated region
    $region14: #{tpu_custom_call.1} parent=1 // pred_check
      _
    $region15: #{tpu_custom_call.1} parent=1 // pred_check_branch
      %3767 = sbr.rel (0) target = $region17
    $region16: #{tpu_custom_call.1} parent=1 // pred_region
      _
    $region17: #{tpu_custom_call.1} parent=1 // pred_fallthru
      _
    // Predicated region
    $region18: #{tpu_custom_call.1} parent=1 // pred_check
      _
    $region19: #{tpu_custom_call.1} parent=1 // pred_check_branch
      %3769 = sbr.rel (0) target = $region21
    $region20: #{tpu_custom_call.1} parent=1 // pred_region
      _
    $region21: #{tpu_custom_call.1} parent=1 // pred_fallthru
      _
    %3770 = vsyncpa [#allocation4], 1

</llo_original>
